<compile_context>
chip_gen: v7x
topology: tpu7x:2x2x1
jax: 0.10.0
libtpu: 0.0.40
codegen_flags: <defaults>
</compile_context>

<pallas_src>
import functools

import numpy as np
import jax
import jax.numpy as jnp
from jax.experimental import pallas as pl
from jax.experimental.pallas import tpu as pltpu


# ------------------------------------------------------------------
# In-kernel helpers
# ------------------------------------------------------------------
def _layernorm(y, gamma, beta, eps=1e-5):
    """LayerNorm over the whole per-batch slab (all non-batch dims), single pass."""
    n = y.size
    s = jnp.sum(y)
    ss = jnp.sum(y * y)
    mean = s / n
    var = ss / n - mean * mean
    return (y - mean) * jax.lax.rsqrt(var + eps) * gamma + beta


# ------------------------------------------------------------------
# Fused Belt_Block kernel: one grid step == one batch element.
#
# Working layouts (per batch element):
#   spatial (GAT) stage : rows r = (t, n)   -> 2D slab (T*N, feat)
#   temporal / FF stages: rows r = (n, t)   -> 2D slab (N*T, feat)
# Head-vectorized attention uses packed lane layouts:
#   GAT scores   : columns p = h*N + j   (width H*N)
#   MHSA scores  : columns p = h*T + t'  (width H*T)
# Constant 0/1 matrices (built in NumPy) implement the per-head broadcast / gather /
# block-diagonal expansion / per-head softmax sums as matmuls on the MXU.
# ------------------------------------------------------------------
def _belt_kernel(x_ref,                     # (1, T*N, Fin)  rows (t, n)
                 wt_ref, bw_ref,            # (Fin, HC), (1, HC)
                 a12_ref,                   # (HC, 2H)   [A1 | A2] block-diag head proj
                 repa_ref,                  # (H, H*N)   delta(h,h')  (head -> packed cols)
                 hsumg_ref,                 # (H*N, H)   per-head column sums (= repa.T)
                 tsel_ref,                  # (T*N, T*N) delta(t,t') block matrix
                 mjp_ref,                   # (T*N, H*N) delta(j',j) selector
                 maskp_ref, iwp_ref,        # (T*N, H*N) tiled adj mask / initial weights
                 bmg_ref,                   # (1, H, N, HC) delta(h,h') block mask (GAT agg)
                 pnt_ref,                   # (N*T, T*N) (t,n) -> (n,t) permutation
                 ln1_ref,                   # (2, T*N, HC) gamma/beta in (t,n) row layout
                 wq_ref, bq_ref,            # (HC, HC), (1, HC)  1/sqrt(dk) already folded
                 wk_ref, bk_ref, wv_ref, bv_ref, wo_ref, bo_ref,
                 bmt_ref,                   # (1, H, T, HC) delta(h,h') block mask (K/V exp)
                 hsumt_ref,                 # (H*T, H)
                 hsumtT_ref,                # (H, H*T)
                 ln2_ref,                   # (2, N*T, HC) gamma/beta in (n,t) row layout
                 w1_ref, b1_ref,            # (HC, FFH), (1, FFH)
                 w2_ref, b2_ref,            # (FFH, HC), (1, HC)
                 ln3_ref,                   # (2, N*T, HC)
                 o_ref,                     # (1, N*T, HC)  rows (n, t)
                 *, T, N, H, add_residual):
    f32 = jnp.float32
    HC = wt_ref.shape[1]          # feature width F = H_spatial * C
    HN = repa_ref.shape[1]        # packed spatial score width  H_spatial * N
    HT = hsumt_ref.shape[0]       # packed temporal score width H_temporal * T

    def dot(a, b):
        return jnp.dot(a, b, preferred_element_type=f32)

    x2d = x_ref[0]                                          # (T*N, Fin), rows (t, n)

    # ---------------- Stage 1: DynamicGAT (all heads at once) ----------------
    wh = dot(x2d, wt_ref[...]) + bw_ref[...]                # (T*N, HC)
    s12 = dot(wh, a12_ref[...])                             # (T*N, 2H) per-head src/dst scores
    s1, s2 = s12[:, :H], s12[:, H:]
    # packed scores e[(t,i), (h,j)] = s1[(t,i),h] + s2[(t,j),h]
    e = dot(s1, repa_ref[...])                                             # broadcast s1 over j
    e = e + dot(tsel_ref[...], dot(s2, repa_ref[...]) * mjp_ref[...])      # gather s2[(t,j),h]
    e = jnp.where(e > 0, e, 0.2 * e)                        # LeakyReLU(0.2)
    e = e * maskp_ref[...] + iwp_ref[...]                   # multiplicative mask + learned prior
    # per-head softmax over j (a shared row-max is valid for every head)
    p = jnp.exp(e - jnp.max(e, axis=-1, keepdims=True))
    den = dot(dot(p, hsumg_ref[...]), repa_ref[...])        # per-head sums broadcast back
    attn = p * pl.reciprocal(den, approx=True)              # (T*N, H*N)
    # aggregation: O[(t,i),(h,c)] = sum_j attn[(t,i),(h,j)] * Wh[(t,j),(h,c)]
    wh3 = wh.reshape(T, N, HC)
    whe = (wh3[:, None, :, :] * bmg_ref[...]).reshape(T, HN, HC)   # block-diag expanded Wh
    gat = jnp.einsum('tip,tpc->tic', attn.reshape(T, N, HN), whe,
                     preferred_element_type=f32).reshape(T * N, HC)

    # ---------------- residual + LayerNorm 1 ----------------
    y1 = gat + x2d if add_residual else gat
    y1 = _layernorm(y1, ln1_ref[0], ln1_ref[1])

    # (t, n) -> (n, t) row order via a permutation matmul (MXU, no relayout transpose)
    y1 = dot(pnt_ref[...], y1)                              # (N*T, HC), rows (n, t)

    # ---------------- Stage 2: temporal MHSA (all heads at once) ----------------
    q = dot(y1, wq_ref[...]) + bq_ref[...]                  # 1/sqrt(dk) folded into wq/bq
    k = dot(y1, wk_ref[...]) + bk_ref[...]
    v = dot(y1, wv_ref[...]) + bv_ref[...]
    q3 = q.reshape(N, T, HC)
    k3 = k.reshape(N, T, HC)
    v3 = v.reshape(N, T, HC)
    ke = (k3[:, None, :, :] * bmt_ref[...]).reshape(N, HT, HC)     # head-expanded K
    sc = jnp.einsum('ntf,npf->ntp', q3, ke,
                    preferred_element_type=f32).reshape(N * T, HT)  # packed (h, t') scores
    p2 = jnp.exp(sc - jnp.max(sc, axis=-1, keepdims=True))
    den2 = dot(dot(p2, hsumt_ref[...]), hsumtT_ref[...])
    attn2 = p2 * pl.reciprocal(den2, approx=True)
    ve = (v3[:, None, :, :] * bmt_ref[...]).reshape(N, HT, HC)     # head-expanded V
    ctx = jnp.einsum('ntp,npf->ntf', attn2.reshape(N, T, HT), ve,
                     preferred_element_type=f32).reshape(N * T, HC)
    mh = dot(ctx, wo_ref[...]) + bo_ref[...]

    # ---------------- residual + LayerNorm 2 ----------------
    y2 = _layernorm(mh + y1, ln2_ref[0], ln2_ref[1])

    # ---------------- Stage 3: position-wise feed-forward ----------------
    h1 = jnp.maximum(dot(y2, w1_ref[...]) + b1_ref[...], 0.0)
    ff = dot(h1, w2_ref[...]) + b2_ref[...]

    # ---------------- residual + LayerNorm 3 ----------------
    o_ref[0] = _layernorm(ff + y2, ln3_ref[0], ln3_ref[1])


# ------------------------------------------------------------------
# Setup glue (replicates DynamicGAT.__init__ precompute + constrain_weights)
# ------------------------------------------------------------------
def compute_adj_mask_and_weights(adj, k_neighbors):
    N = adj.shape[0]
    mask = np.zeros((N, N), np.float32)
    iw = np.zeros((N, N), np.float32)
    for i in range(N):
        d = adj[i]
        valid = np.where(d > 0)[0]
        if valid.size == 0:
            continue
        vd = d[valid]
        order = np.argsort(vd, kind="stable")[:min(k_neighbors, valid.size)]
        nbr = valid[order]
        mask[i, nbr] = 1.0
        nd = vd[order]
        w = 1.0 / (nd + 1e-6)
        w = w / (w.sum() + 1e-6)
        iw[i, nbr] = w
    return mask, iw


def constrain_weights(iw, iw_base, mask, factor=0.5):
    w = np.clip(iw, iw_base * (1 - factor), iw_base * (1 + factor))
    w = np.maximum(w, 0.0)
    s = np.sum(w * mask, axis=1, keepdims=True)
    s = s + (s == 0).astype(np.float32) * 1e-6
    return (w * mask / s).astype(np.float32)


def init_params(key, Fin, C, N, T, H_sp, H_tmp, ffh, adj):
    HC = C * H_sp
    F = HC
    dk = F // H_tmp
    TN = T * N
    ks = jax.random.split(key, 16)
    rnd = lambda k, shp: np.asarray(0.1 * jax.random.normal(k, shp, jnp.float32))

    # ---- raw (PyTorch-layout) parameters ----
    W, bW = rnd(ks[0], (HC, Fin)), rnd(ks[1], (HC,))
    attn_w = rnd(ks[2], (H_sp, 2 * C))                  # per-head attention vectors (no bias)
    wq, bq = rnd(ks[3], (F, F)), rnd(ks[4], (F,))
    wk, bk = rnd(ks[5], (F, F)), rnd(ks[6], (F,))
    wv, bv = rnd(ks[7], (F, F)), rnd(ks[8], (F,))
    wo, bo = rnd(ks[9], (F, F)), rnd(ks[10], (F,))
    w1, b1 = rnd(ks[11], (ffh, F)), rnd(ks[12], (ffh,))
    w2, b2 = rnd(ks[13], (F, ffh)), rnd(ks[14], (F,))

    mask, iw_base = compute_adj_mask_and_weights(adj, k_neighbors=3)
    iw = constrain_weights(iw_base.copy(), iw_base, mask)   # faithful one-time application

    raw = dict(W=W, bW=bW, attn_w=attn_w, mask=mask, iw=iw,
               wq=wq, bq=bq, wk=wk, bk=bk, wv=wv, bv=bv, wo=wo, bo=bo,
               w1=w1, b1=b1, w2=w2, b2=b2, H_sp=H_sp, C=C, H_tmp=H_tmp)

    # ---- constants for the fused kernel (packed layouts) ----
    A12 = np.zeros((HC, 2 * H_sp), np.float32)
    for h in range(H_sp):
        A12[h * C:(h + 1) * C, h] = attn_w[h, :C]            # a1 part
        A12[h * C:(h + 1) * C, H_sp + h] = attn_w[h, C:]     # a2 part

    eyeH = np.eye(H_sp, dtype=np.float32)
    repa = np.kron(eyeH, np.ones((1, N), np.float32))                      # (H, H*N)
    hsumg = np.ascontiguousarray(repa.T)                                   # (H*N, H)
    tsel = np.kron(np.eye(T, dtype=np.float32), np.ones((N, N), np.float32))
    mjp = np.tile(np.tile(np.eye(N, dtype=np.float32), (1, H_sp)), (T, 1))
    maskp = np.tile(mask, (T, H_sp)).astype(np.float32)
    iwp = np.tile(iw, (T, H_sp)).astype(np.float32)
    bmg = np.broadcast_to(np.kron(eyeH, np.ones((1, C), np.float32))[:, None, :],
                          (H_sp, N, HC)).reshape(1, H_sp, N, HC).copy()

    pnt = np.zeros((N * T, T * N), np.float32)
    r = np.arange(N * T)
    pnt[r, (r % T) * N + r // T] = 1.0                       # row (n*T+t) <- col (t*N+n)

    eyeHt = np.eye(H_tmp, dtype=np.float32)
    bmt = np.broadcast_to(np.kron(eyeHt, np.ones((1, dk), np.float32))[:, None, :],
                          (H_tmp, T, F)).reshape(1, H_tmp, T, F).copy()
    hsumt = np.kron(eyeHt, np.ones((T, 1), np.float32))      # (H*T, H)
    hsumtT = np.ascontiguousarray(hsumt.T)

    ones_nct = np.ones((N, HC, T), np.float32)                # torch LayerNorm defaults
    zeros_nct = np.zeros((N, HC, T), np.float32)
    ln1 = np.stack([np.transpose(ones_nct, (2, 0, 1)).reshape(TN, HC),
                    np.transpose(zeros_nct, (2, 0, 1)).reshape(TN, HC)])
    ln_nt = np.stack([np.transpose(ones_nct, (0, 2, 1)).reshape(N * T, HC),
                      np.transpose(zeros_nct, (0, 2, 1)).reshape(N * T, HC)])

    scale = np.float32(1.0 / np.sqrt(dk))
    consts = [
        np.ascontiguousarray(W.T), bW[None, :],                   # wt, bw
        A12, repa, hsumg, tsel, mjp, maskp, iwp, bmg, pnt, ln1,
        np.ascontiguousarray(wq.T) * scale, bq[None, :] * scale,  # 1/sqrt(dk) folded
        np.ascontiguousarray(wk.T), bk[None, :],
        np.ascontiguousarray(wv.T), bv[None, :],
        np.ascontiguousarray(wo.T), bo[None, :],
        bmt, hsumt, hsumtT, ln_nt,
        np.ascontiguousarray(w1.T), b1[None, :],
        np.ascontiguousarray(w2.T), b2[None, :],
        ln_nt.copy(),
    ]
    consts = [jnp.asarray(c, jnp.float32) for c in consts]
    dims = dict(N=N, T=T, H=H_sp, C=C, HC=HC, Fin=Fin)
    return dict(consts=consts, raw=raw, dims=dims)


# ------------------------------------------------------------------
# Wrapper: single fused pallas_call, grid over batch only
# ------------------------------------------------------------------
def make_belt_forward(p):
    d = p["dims"]
    N, T, H, HC, Fin = d["N"], d["T"], d["H"], d["HC"], d["Fin"]
    consts = p["consts"]
    add_residual = (Fin == HC)
    kernel = functools.partial(_belt_kernel, T=T, N=N, H=H, add_residual=add_residual)

    def const_spec(a):
        nd = a.ndim
        return pl.BlockSpec(a.shape, lambda b, _n=nd: (0,) * _n)

    @jax.jit
    def forward(x):                                   # x: (B, N, Fin, T)  PyTorch layout
        B = x.shape[0]
        xp = jnp.transpose(x, (0, 3, 1, 2)).reshape(B, T * N, Fin)   # rows (t, n)
        in_specs = [pl.BlockSpec((1, T * N, Fin), lambda b: (b, 0, 0))]
        in_specs += [const_spec(c) for c in consts]
        out2 = pl.pallas_call(
            kernel,
            out_shape=jax.ShapeDtypeStruct((B, N * T, HC), jnp.float32),
            grid=(B,),
            in_specs=in_specs,
            out_specs=pl.BlockSpec((1, N * T, HC), lambda b: (b, 0, 0)),
            compiler_params=pltpu.CompilerParams(dimension_semantics=("parallel",)),
        )(xp, *consts)
        # rows (n, t) back to the PyTorch layout (B, N, HC, T); reshape is free, transpose tiny
        return jnp.transpose(out2.reshape(B, N, T, HC), (0, 1, 3, 2))

    return forward


# ------------------------------------------------------------------
# Pure-JAX (XLA) reference mirroring the PyTorch module, for validation only
# ------------------------------------------------------------------
def reference_forward(x, raw):
    B, N, Fin, T = x.shape
    H, C, Ht = raw["H_sp"], raw["C"], raw["H_tmp"]
    HC = H * C
    dk = HC // Ht

    def ln(y, eps=1e-5):
        m = jnp.mean(y, axis=(1, 2, 3), keepdims=True)
        v = jnp.mean((y - m) ** 2, axis=(1, 2, 3), keepdims=True)
        return (y - m) * jax.lax.rsqrt(v + eps)

    xb = jnp.transpose(x, (0, 3, 1, 2))                          # (B,T,N,Fin)
    Wh = xb @ raw["W"].T + raw["bW"]
    Wh5 = Wh.reshape(B, T, N, H, C)
    scores = []
    for h in range(H):
        a = raw["attn_w"][h]
        s1 = Wh5[..., h, :] @ a[:C]
        s2 = Wh5[..., h, :] @ a[C:]
        e = s1[..., :, None] + s2[..., None, :]
        e = jnp.where(e > 0, e, 0.2 * e)
        e = e * raw["mask"] + raw["iw"]
        scores.append(e)
    att = jax.nn.softmax(jnp.stack(scores, axis=-1), axis=3)
    gat = jnp.einsum('btijh,btjhc->btihc', att, Wh5).reshape(B, T, N, HC)
    gat = jnp.transpose(gat, (0, 2, 3, 1))                       # (B,N,HC,T)

    y1 = ln(gat + x) if Fin == HC else ln(gat)

    xr = jnp.transpose(y1, (0, 3, 1, 2))                         # (B,T,N,F)

    def heads(w, b):
        return (xr @ w.T + b).reshape(B, T, N, Ht, dk).transpose(0, 2, 3, 1, 4)

    Q, K, V = heads(raw["wq"], raw["bq"]), heads(raw["wk"], raw["bk"]), heads(raw["wv"], raw["bv"])
    sc = (Q @ jnp.swapaxes(K, -1, -2)) / np.sqrt(dk)
    at = jax.nn.softmax(sc, axis=-1)
    ctx = (at @ V).transpose(0, 3, 1, 2, 4).reshape(B, T, N, HC)
    mh = jnp.transpose(ctx @ raw["wo"].T + raw["bo"], (0, 2, 3, 1))
    y2 = ln(mh + y1)

    z = jnp.transpose(y2, (0, 1, 3, 2))
    z = jnp.maximum(z @ raw["w1"].T + raw["b1"], 0.0)
    z = z @ raw["w2"].T + raw["b2"]
    ff = jnp.transpose(z, (0, 1, 3, 2))
    return ln(ff + y2)


if __name__ == "__main__":
    B, N, T = 2, 8, 8
    C, H_sp = 4, 4            # gat_out_channels = C * H_sp = 16
    Fin = C * H_sp            # == 16 -> residual branch active (matches torch path)
    H_tmp = 4
    ffh = 32

    key = jax.random.PRNGKey(0)
    kx, kadj, kp = jax.random.split(key, 3)

    # deterministic symmetric distance-style adjacency (zero diagonal)
    coords = np.asarray(jax.random.normal(kadj, (N, 2), jnp.float32))
    diff = coords[:, None, :] - coords[None, :, :]
    adj = np.sqrt((diff ** 2).sum(-1)).astype(np.float32)
    np.fill_diagonal(adj, 0.0)

    params = init_params(kp, Fin, C, N, T, H_sp, H_tmp, ffh, adj)
    fwd = make_belt_forward(params)

    x = jax.random.normal(kx, (B, N, Fin, T), jnp.float32)
    y = jax.block_until_ready(fwd(x))

    assert y.shape == (B, N, C * H_sp, T), y.shape
    assert bool(jnp.all(jnp.isfinite(y)))

    # loose numerical check against a pure-JAX mirror of the PyTorch module
    y_ref = reference_forward(x, params["raw"])
    np.testing.assert_allclose(np.asarray(y), np.asarray(y_ref), rtol=5e-2, atol=5e-2)

    print("KERNEL_OK")
</pallas_src>

<mosaic_0001>
module attributes {stable_mosaic.version = 11 : i64} {
  func.func @_belt_kernel(%arg0: i32, %arg1: memref<1x64x16xf32, #tpu.memory_space<vmem>>, %arg2: memref<16x16xf32, #tpu.memory_space<vmem>>, %arg3: memref<1x16xf32, #tpu.memory_space<vmem>>, %arg4: memref<16x8xf32, #tpu.memory_space<vmem>>, %arg5: memref<4x32xf32, #tpu.memory_space<vmem>>, %arg6: memref<32x4xf32, #tpu.memory_space<vmem>>, %arg7: memref<64x64xf32, #tpu.memory_space<vmem>>, %arg8: memref<64x32xf32, #tpu.memory_space<vmem>>, %arg9: memref<64x32xf32, #tpu.memory_space<vmem>>, %arg10: memref<64x32xf32, #tpu.memory_space<vmem>>, %arg11: memref<1x4x8x16xf32, #tpu.memory_space<vmem>>, %arg12: memref<64x64xf32, #tpu.memory_space<vmem>>, %arg13: memref<2x64x16xf32, #tpu.memory_space<vmem>>, %arg14: memref<16x16xf32, #tpu.memory_space<vmem>>, %arg15: memref<1x16xf32, #tpu.memory_space<vmem>>, %arg16: memref<16x16xf32, #tpu.memory_space<vmem>>, %arg17: memref<1x16xf32, #tpu.memory_space<vmem>>, %arg18: memref<16x16xf32, #tpu.memory_space<vmem>>, %arg19: memref<1x16xf32, #tpu.memory_space<vmem>>, %arg20: memref<16x16xf32, #tpu.memory_space<vmem>>, %arg21: memref<1x16xf32, #tpu.memory_space<vmem>>, %arg22: memref<1x4x8x16xf32, #tpu.memory_space<vmem>>, %arg23: memref<32x4xf32, #tpu.memory_space<vmem>>, %arg24: memref<4x32xf32, #tpu.memory_space<vmem>>, %arg25: memref<2x64x16xf32, #tpu.memory_space<vmem>>, %arg26: memref<16x32xf32, #tpu.memory_space<vmem>>, %arg27: memref<1x32xf32, #tpu.memory_space<vmem>>, %arg28: memref<32x16xf32, #tpu.memory_space<vmem>>, %arg29: memref<1x16xf32, #tpu.memory_space<vmem>>, %arg30: memref<2x64x16xf32, #tpu.memory_space<vmem>>, %arg31: memref<1x64x16xf32, #tpu.memory_space<vmem>>) attributes {dimension_semantics = [#tpu.dimension_semantics<parallel>], iteration_bounds = array<i64: 2>, scalar_prefetch = 0 : i64, scratch_operands = 0 : i64, tpu.core_type = #tpu.core_type<tc>, window_params = [{transform_indices = @transform_0, window_bounds = array<i64: 1, 64, 16>}, {pipeline_mode = #tpu.pipeline_mode<synchronous>, transform_indices = @transform_1, window_bounds = array<i64: 16, 16>}, {pipeline_mode = #tpu.pipeline_mode<synchronous>, transform_indices = @transform_2, window_bounds = array<i64: 1, 16>}, {pipeline_mode = #tpu.pipeline_mode<synchronous>, transform_indices = @transform_3, window_bounds = array<i64: 16, 8>}, {pipeline_mode = #tpu.pipeline_mode<synchronous>, transform_indices = @transform_4, window_bounds = array<i64: 4, 32>}, {pipeline_mode = #tpu.pipeline_mode<synchronous>, transform_indices = @transform_5, window_bounds = array<i64: 32, 4>}, {pipeline_mode = #tpu.pipeline_mode<synchronous>, transform_indices = @transform_6, window_bounds = array<i64: 64, 64>}, {pipeline_mode = #tpu.pipeline_mode<synchronous>, transform_indices = @transform_7, window_bounds = array<i64: 64, 32>}, {pipeline_mode = #tpu.pipeline_mode<synchronous>, transform_indices = @transform_8, window_bounds = array<i64: 64, 32>}, {pipeline_mode = #tpu.pipeline_mode<synchronous>, transform_indices = @transform_9, window_bounds = array<i64: 64, 32>}, {pipeline_mode = #tpu.pipeline_mode<synchronous>, transform_indices = @transform_10, window_bounds = array<i64: 1, 4, 8, 16>}, {pipeline_mode = #tpu.pipeline_mode<synchronous>, transform_indices = @transform_11, window_bounds = array<i64: 64, 64>}, {pipeline_mode = #tpu.pipeline_mode<synchronous>, transform_indices = @transform_12, window_bounds = array<i64: 2, 64, 16>}, {pipeline_mode = #tpu.pipeline_mode<synchronous>, transform_indices = @transform_13, window_bounds = array<i64: 16, 16>}, {pipeline_mode = #tpu.pipeline_mode<synchronous>, transform_indices = @transform_14, window_bounds = array<i64: 1, 16>}, {pipeline_mode = #tpu.pipeline_mode<synchronous>, transform_indices = @transform_15, window_bounds = array<i64: 16, 16>}, {pipeline_mode = #tpu.pipeline_mode<synchronous>, transform_indices = @transform_16, window_bounds = array<i64: 1, 16>}, {pipeline_mode = #tpu.pipeline_mode<synchronous>, transform_indices = @transform_17, window_bounds = array<i64: 16, 16>}, {pipeline_mode = #tpu.pipeline_mode<synchronous>, transform_indices = @transform_18, window_bounds = array<i64: 1, 16>}, {pipeline_mode = #tpu.pipeline_mode<synchronous>, transform_indices = @transform_19, window_bounds = array<i64: 16, 16>}, {pipeline_mode = #tpu.pipeline_mode<synchronous>, transform_indices = @transform_20, window_bounds = array<i64: 1, 16>}, {pipeline_mode = #tpu.pipeline_mode<synchronous>, transform_indices = @transform_21, window_bounds = array<i64: 1, 4, 8, 16>}, {pipeline_mode = #tpu.pipeline_mode<synchronous>, transform_indices = @transform_22, window_bounds = array<i64: 32, 4>}, {pipeline_mode = #tpu.pipeline_mode<synchronous>, transform_indices = @transform_23, window_bounds = array<i64: 4, 32>}, {pipeline_mode = #tpu.pipeline_mode<synchronous>, transform_indices = @transform_24, window_bounds = array<i64: 2, 64, 16>}, {pipeline_mode = #tpu.pipeline_mode<synchronous>, transform_indices = @transform_25, window_bounds = array<i64: 16, 32>}, {pipeline_mode = #tpu.pipeline_mode<synchronous>, transform_indices = @transform_26, window_bounds = array<i64: 1, 32>}, {pipeline_mode = #tpu.pipeline_mode<synchronous>, transform_indices = @transform_27, window_bounds = array<i64: 32, 16>}, {pipeline_mode = #tpu.pipeline_mode<synchronous>, transform_indices = @transform_28, window_bounds = array<i64: 1, 16>}, {pipeline_mode = #tpu.pipeline_mode<synchronous>, transform_indices = @transform_29, window_bounds = array<i64: 2, 64, 16>}, {transform_indices = @transform_30, window_bounds = array<i64: 1, 64, 16>}]} {
    %c0 = arith.constant 0 : index
    %c0_0 = arith.constant 0 : index
    %c0_1 = arith.constant 0 : index
    %0 = vector.load %arg1[%c0, %c0_0, %c0_1] : memref<1x64x16xf32, #tpu.memory_space<vmem>>, vector<1x64x16xf32>
    %1 = vector.shape_cast %0 : vector<1x64x16xf32> to vector<64x16xf32>
    %c0_2 = arith.constant 0 : index
    %c0_3 = arith.constant 0 : index
    %2 = vector.load %arg2[%c0_2, %c0_3] : memref<16x16xf32, #tpu.memory_space<vmem>>, vector<16x16xf32>
    %cst = arith.constant dense<0.000000e+00> : vector<64x16xf32>
    %3 = tpu.matmul %1, %2, %cst {dimension_numbers = #tpu.dot_dimension_numbers<[1], [0], [0], [1], [0, 0, 1, 1], [], []>} : vector<64x16xf32>, vector<16x16xf32>, vector<64x16xf32> -> vector<64x16xf32>
    %c0_4 = arith.constant 0 : index
    %c0_5 = arith.constant 0 : index
    %4 = vector.load %arg3[%c0_4, %c0_5] : memref<1x16xf32, #tpu.memory_space<vmem>>, vector<1x16xf32>
    %5 = vector.broadcast %4 : vector<1x16xf32> to vector<64x16xf32>
    %6 = arith.addf %3, %5 : vector<64x16xf32>
    %c0_6 = arith.constant 0 : index
    %c0_7 = arith.constant 0 : index
    %7 = vector.load %arg4[%c0_6, %c0_7] : memref<16x8xf32, #tpu.memory_space<vmem>>, vector<16x8xf32>
    %cst_8 = arith.constant dense<0.000000e+00> : vector<64x8xf32>
    %8 = tpu.matmul %6, %7, %cst_8 {dimension_numbers = #tpu.dot_dimension_numbers<[1], [0], [0], [1], [0, 0, 1, 1], [], []>} : vector<64x16xf32>, vector<16x8xf32>, vector<64x8xf32> -> vector<64x8xf32>
    %9 = vector.extract_strided_slice %8 {offsets = [0, 0], sizes = [64, 4], strides = [1, 1]} : vector<64x8xf32> to vector<64x4xf32>
    %10 = vector.extract_strided_slice %8 {offsets = [0, 4], sizes = [64, 4], strides = [1, 1]} : vector<64x8xf32> to vector<64x4xf32>
    %c0_9 = arith.constant 0 : index
    %c0_10 = arith.constant 0 : index
    %11 = vector.load %arg5[%c0_9, %c0_10] : memref<4x32xf32, #tpu.memory_space<vmem>>, vector<4x32xf32>
    %cst_11 = arith.constant dense<0.000000e+00> : vector<64x32xf32>
    %12 = tpu.matmul %9, %11, %cst_11 {dimension_numbers = #tpu.dot_dimension_numbers<[1], [0], [0], [1], [0, 0, 1, 1], [], []>} : vector<64x4xf32>, vector<4x32xf32>, vector<64x32xf32> -> vector<64x32xf32>
    %c0_12 = arith.constant 0 : index
    %c0_13 = arith.constant 0 : index
    %13 = vector.load %arg7[%c0_12, %c0_13] : memref<64x64xf32, #tpu.memory_space<vmem>>, vector<64x64xf32>
    %c0_14 = arith.constant 0 : index
    %c0_15 = arith.constant 0 : index
    %14 = vector.load %arg5[%c0_14, %c0_15] : memref<4x32xf32, #tpu.memory_space<vmem>>, vector<4x32xf32>
    %cst_16 = arith.constant dense<0.000000e+00> : vector<64x32xf32>
    %15 = tpu.matmul %10, %14, %cst_16 {dimension_numbers = #tpu.dot_dimension_numbers<[1], [0], [0], [1], [0, 0, 1, 1], [], []>} : vector<64x4xf32>, vector<4x32xf32>, vector<64x32xf32> -> vector<64x32xf32>
    %c0_17 = arith.constant 0 : index
    %c0_18 = arith.constant 0 : index
    %16 = vector.load %arg8[%c0_17, %c0_18] : memref<64x32xf32, #tpu.memory_space<vmem>>, vector<64x32xf32>
    %17 = arith.mulf %15, %16 : vector<64x32xf32>
    %cst_19 = arith.constant dense<0.000000e+00> : vector<64x32xf32>
    %18 = tpu.matmul %13, %17, %cst_19 {dimension_numbers = #tpu.dot_dimension_numbers<[1], [0], [0], [1], [0, 0, 1, 1], [], []>} : vector<64x64xf32>, vector<64x32xf32>, vector<64x32xf32> -> vector<64x32xf32>
    %19 = arith.addf %12, %18 : vector<64x32xf32>
    %cst_20 = arith.constant 0.000000e+00 : f32
    %20 = vector.broadcast %cst_20 : f32 to vector<64x32xf32>
    %21 = arith.cmpf ogt, %19, %20 : vector<64x32xf32>
    %cst_21 = arith.constant 2.000000e-01 : f32
    %22 = vector.broadcast %cst_21 : f32 to vector<64x32xf32>
    %23 = arith.mulf %22, %19 : vector<64x32xf32>
    %24 = arith.select %21, %19, %23 : vector<64x32xi1>, vector<64x32xf32>
    %c0_22 = arith.constant 0 : index
    %c0_23 = arith.constant 0 : index
    %25 = vector.load %arg9[%c0_22, %c0_23] : memref<64x32xf32, #tpu.memory_space<vmem>>, vector<64x32xf32>
    %26 = arith.mulf %24, %25 : vector<64x32xf32>
    %c0_24 = arith.constant 0 : index
    %c0_25 = arith.constant 0 : index
    %27 = vector.load %arg10[%c0_24, %c0_25] : memref<64x32xf32, #tpu.memory_space<vmem>>, vector<64x32xf32>
    %28 = arith.addf %26, %27 : vector<64x32xf32>
    %cst_26 = arith.constant dense<0xFF800000> : vector<64xf32>
    %29 = vector.multi_reduction <maximumf>, %28, %cst_26 [1] : vector<64x32xf32> to vector<64xf32>
    %30 = vector.shape_cast %29 : vector<64xf32> to vector<64x1xf32>
    %31 = vector.broadcast %30 : vector<64x1xf32> to vector<64x32xf32>
    %32 = arith.subf %28, %31 : vector<64x32xf32>
    %33 = math.exp %32 : vector<64x32xf32>
    %c0_27 = arith.constant 0 : index
    %c0_28 = arith.constant 0 : index
    %34 = vector.load %arg6[%c0_27, %c0_28] : memref<32x4xf32, #tpu.memory_space<vmem>>, vector<32x4xf32>
    %cst_29 = arith.constant dense<0.000000e+00> : vector<64x4xf32>
    %35 = tpu.matmul %33, %34, %cst_29 {dimension_numbers = #tpu.dot_dimension_numbers<[1], [0], [0], [1], [0, 0, 1, 1], [], []>} : vector<64x32xf32>, vector<32x4xf32>, vector<64x4xf32> -> vector<64x4xf32>
    %c0_30 = arith.constant 0 : index
    %c0_31 = arith.constant 0 : index
    %36 = vector.load %arg5[%c0_30, %c0_31] : memref<4x32xf32, #tpu.memory_space<vmem>>, vector<4x32xf32>
    %cst_32 = arith.constant dense<0.000000e+00> : vector<64x32xf32>
    %37 = tpu.matmul %35, %36, %cst_32 {dimension_numbers = #tpu.dot_dimension_numbers<[1], [0], [0], [1], [0, 0, 1, 1], [], []>} : vector<64x4xf32>, vector<4x32xf32>, vector<64x32xf32> -> vector<64x32xf32>
    %38 = tpu.reciprocal %37 {approx = true} : vector<64x32xf32> -> vector<64x32xf32>
    %39 = arith.mulf %33, %38 : vector<64x32xf32>
    %40 = vector.shape_cast %6 : vector<64x16xf32> to vector<8x8x16xf32>
    %41 = vector.shape_cast %40 : vector<8x8x16xf32> to vector<8x1x8x16xf32>
    %c0_33 = arith.constant 0 : index
    %c0_34 = arith.constant 0 : index
    %c0_35 = arith.constant 0 : index
    %c0_36 = arith.constant 0 : index
    %42 = vector.load %arg11[%c0_33, %c0_34, %c0_35, %c0_36] : memref<1x4x8x16xf32, #tpu.memory_space<vmem>>, vector<1x4x8x16xf32>
    %43 = vector.broadcast %41 : vector<8x1x8x16xf32> to vector<8x4x8x16xf32>
    %44 = vector.broadcast %42 : vector<1x4x8x16xf32> to vector<8x4x8x16xf32>
    %45 = arith.mulf %43, %44 : vector<8x4x8x16xf32>
    %46 = vector.shape_cast %45 : vector<8x4x8x16xf32> to vector<8x32x16xf32>
    %47 = vector.shape_cast %39 : vector<64x32xf32> to vector<8x8x32xf32>
    "tpu.trace_start"() <{level = 10 : i32, message = "tip,tpc->tic"}> : () -> ()
    %cst_37 = arith.constant dense<0.000000e+00> : vector<8x8x16xf32>
    %48 = tpu.matmul %47, %46, %cst_37 {dimension_numbers = #tpu.dot_dimension_numbers<[2], [1], [1], [2], [0, 0, 0, 1, 1, 2], [0], [0]>} : vector<8x8x32xf32>, vector<8x32x16xf32>, vector<8x8x16xf32> -> vector<8x8x16xf32>
    "tpu.trace_stop"() : () -> ()
    %49 = vector.shape_cast %48 : vector<8x8x16xf32> to vector<64x16xf32>
    %50 = arith.addf %49, %1 : vector<64x16xf32>
    %c0_38 = arith.constant 0 : index
    %c0_39 = arith.constant 0 : index
    %c0_40 = arith.constant 0 : index
    %51 = vector.load %arg13[%c0_38, %c0_39, %c0_40] : memref<2x64x16xf32, #tpu.memory_space<vmem>>, vector<1x64x16xf32>
    %52 = vector.shape_cast %51 : vector<1x64x16xf32> to vector<64x16xf32>
    %c1 = arith.constant 1 : index
    %c0_41 = arith.constant 0 : index
    %c0_42 = arith.constant 0 : index
    %53 = vector.load %arg13[%c1, %c0_41, %c0_42] : memref<2x64x16xf32, #tpu.memory_space<vmem>>, vector<1x64x16xf32>
    %54 = vector.shape_cast %53 : vector<1x64x16xf32> to vector<64x16xf32>
    %55 = vector.shape_cast %50 : vector<64x16xf32> to vector<1x64x16xf32>
    %cst_43 = arith.constant dense<0.000000e+00> : vector<1xf32>
    %56 = vector.multi_reduction <add>, %55, %cst_43 [1, 2] : vector<1x64x16xf32> to vector<1xf32>
    %57 = vector.shape_cast %56 : vector<1xf32> to vector<1x1x1xf32>
    %58 = vector.extract %57[0, 0, 0] : f32 from vector<1x1x1xf32>
    %59 = arith.mulf %50, %50 : vector<64x16xf32>
    %60 = vector.shape_cast %59 : vector<64x16xf32> to vector<1x64x16xf32>
    %cst_44 = arith.constant dense<0.000000e+00> : vector<1xf32>
    %61 = vector.multi_reduction <add>, %60, %cst_44 [1, 2] : vector<1x64x16xf32> to vector<1xf32>
    %62 = vector.shape_cast %61 : vector<1xf32> to vector<1x1x1xf32>
    %63 = vector.extract %62[0, 0, 0] : f32 from vector<1x1x1xf32>
    %cst_45 = arith.constant 1.024000e+03 : f32
    %64 = arith.divf %58, %cst_45 : f32
    %cst_46 = arith.constant 1.024000e+03 : f32
    %65 = arith.divf %63, %cst_46 : f32
    %66 = arith.mulf %64, %64 : f32
    %67 = arith.subf %65, %66 : f32
    %68 = vector.broadcast %64 : f32 to vector<64x16xf32>
    %69 = arith.subf %50, %68 : vector<64x16xf32>
    %cst_47 = arith.constant 9.99999974E-6 : f32
    %70 = arith.addf %67, %cst_47 : f32
    %71 = math.rsqrt %70 : f32
    %72 = vector.broadcast %71 : f32 to vector<64x16xf32>
    %73 = arith.mulf %69, %72 : vector<64x16xf32>
    %74 = arith.mulf %73, %52 : vector<64x16xf32>
    %75 = arith.addf %74, %54 : vector<64x16xf32>
    %c0_48 = arith.constant 0 : index
    %c0_49 = arith.constant 0 : index
    %76 = vector.load %arg12[%c0_48, %c0_49] : memref<64x64xf32, #tpu.memory_space<vmem>>, vector<64x64xf32>
    %cst_50 = arith.constant dense<0.000000e+00> : vector<64x16xf32>
    %77 = tpu.matmul %76, %75, %cst_50 {dimension_numbers = #tpu.dot_dimension_numbers<[1], [0], [0], [1], [0, 0, 1, 1], [], []>} : vector<64x64xf32>, vector<64x16xf32>, vector<64x16xf32> -> vector<64x16xf32>
    %c0_51 = arith.constant 0 : index
    %c0_52 = arith.constant 0 : index
    %78 = vector.load %arg14[%c0_51, %c0_52] : memref<16x16xf32, #tpu.memory_space<vmem>>, vector<16x16xf32>
    %cst_53 = arith.constant dense<0.000000e+00> : vector<64x16xf32>
    %79 = tpu.matmul %77, %78, %cst_53 {dimension_numbers = #tpu.dot_dimension_numbers<[1], [0], [0], [1], [0, 0, 1, 1], [], []>} : vector<64x16xf32>, vector<16x16xf32>, vector<64x16xf32> -> vector<64x16xf32>
    %c0_54 = arith.constant 0 : index
    %c0_55 = arith.constant 0 : index
    %80 = vector.load %arg15[%c0_54, %c0_55] : memref<1x16xf32, #tpu.memory_space<vmem>>, vector<1x16xf32>
    %81 = vector.broadcast %80 : vector<1x16xf32> to vector<64x16xf32>
    %82 = arith.addf %79, %81 : vector<64x16xf32>
    %c0_56 = arith.constant 0 : index
    %c0_57 = arith.constant 0 : index
    %83 = vector.load %arg16[%c0_56, %c0_57] : memref<16x16xf32, #tpu.memory_space<vmem>>, vector<16x16xf32>
    %cst_58 = arith.constant dense<0.000000e+00> : vector<64x16xf32>
    %84 = tpu.matmul %77, %83, %cst_58 {dimension_numbers = #tpu.dot_dimension_numbers<[1], [0], [0], [1], [0, 0, 1, 1], [], []>} : vector<64x16xf32>, vector<16x16xf32>, vector<64x16xf32> -> vector<64x16xf32>
    %c0_59 = arith.constant 0 : index
    %c0_60 = arith.constant 0 : index
    %85 = vector.load %arg17[%c0_59, %c0_60] : memref<1x16xf32, #tpu.memory_space<vmem>>, vector<1x16xf32>
    %86 = vector.broadcast %85 : vector<1x16xf32> to vector<64x16xf32>
    %87 = arith.addf %84, %86 : vector<64x16xf32>
    %c0_61 = arith.constant 0 : index
    %c0_62 = arith.constant 0 : index
    %88 = vector.load %arg18[%c0_61, %c0_62] : memref<16x16xf32, #tpu.memory_space<vmem>>, vector<16x16xf32>
    %cst_63 = arith.constant dense<0.000000e+00> : vector<64x16xf32>
    %89 = tpu.matmul %77, %88, %cst_63 {dimension_numbers = #tpu.dot_dimension_numbers<[1], [0], [0], [1], [0, 0, 1, 1], [], []>} : vector<64x16xf32>, vector<16x16xf32>, vector<64x16xf32> -> vector<64x16xf32>
    %c0_64 = arith.constant 0 : index
    %c0_65 = arith.constant 0 : index
    %90 = vector.load %arg19[%c0_64, %c0_65] : memref<1x16xf32, #tpu.memory_space<vmem>>, vector<1x16xf32>
    %91 = vector.broadcast %90 : vector<1x16xf32> to vector<64x16xf32>
    %92 = arith.addf %89, %91 : vector<64x16xf32>
    %93 = vector.shape_cast %82 : vector<64x16xf32> to vector<8x8x16xf32>
    %94 = vector.shape_cast %87 : vector<64x16xf32> to vector<8x8x16xf32>
    %95 = vector.shape_cast %92 : vector<64x16xf32> to vector<8x8x16xf32>
    %96 = vector.shape_cast %94 : vector<8x8x16xf32> to vector<8x1x8x16xf32>
    %c0_66 = arith.constant 0 : index
    %c0_67 = arith.constant 0 : index
    %c0_68 = arith.constant 0 : index
    %c0_69 = arith.constant 0 : index
    %97 = vector.load %arg22[%c0_66, %c0_67, %c0_68, %c0_69] : memref<1x4x8x16xf32, #tpu.memory_space<vmem>>, vector<1x4x8x16xf32>
    %98 = vector.broadcast %96 : vector<8x1x8x16xf32> to vector<8x4x8x16xf32>
    %99 = vector.broadcast %97 : vector<1x4x8x16xf32> to vector<8x4x8x16xf32>
    %100 = arith.mulf %98, %99 : vector<8x4x8x16xf32>
    %101 = vector.shape_cast %100 : vector<8x4x8x16xf32> to vector<8x32x16xf32>
    "tpu.trace_start"() <{level = 10 : i32, message = "ntf,npf->ntp"}> : () -> ()
    %cst_70 = arith.constant dense<0.000000e+00> : vector<8x8x32xf32>
    %102 = tpu.matmul %93, %101, %cst_70 {dimension_numbers = #tpu.dot_dimension_numbers<[2], [2], [1], [1], [0, 0, 0, 1, 1, 1], [0], [0]>} : vector<8x8x16xf32>, vector<8x32x16xf32>, vector<8x8x32xf32> -> vector<8x8x32xf32>
    "tpu.trace_stop"() : () -> ()
    %103 = vector.shape_cast %102 : vector<8x8x32xf32> to vector<64x32xf32>
    %cst_71 = arith.constant dense<0xFF800000> : vector<64xf32>
    %104 = vector.multi_reduction <maximumf>, %103, %cst_71 [1] : vector<64x32xf32> to vector<64xf32>
    %105 = vector.shape_cast %104 : vector<64xf32> to vector<64x1xf32>
    %106 = vector.broadcast %105 : vector<64x1xf32> to vector<64x32xf32>
    %107 = arith.subf %103, %106 : vector<64x32xf32>
    %108 = math.exp %107 : vector<64x32xf32>
    %c0_72 = arith.constant 0 : index
    %c0_73 = arith.constant 0 : index
    %109 = vector.load %arg23[%c0_72, %c0_73] : memref<32x4xf32, #tpu.memory_space<vmem>>, vector<32x4xf32>
    %cst_74 = arith.constant dense<0.000000e+00> : vector<64x4xf32>
    %110 = tpu.matmul %108, %109, %cst_74 {dimension_numbers = #tpu.dot_dimension_numbers<[1], [0], [0], [1], [0, 0, 1, 1], [], []>} : vector<64x32xf32>, vector<32x4xf32>, vector<64x4xf32> -> vector<64x4xf32>
    %c0_75 = arith.constant 0 : index
    %c0_76 = arith.constant 0 : index
    %111 = vector.load %arg24[%c0_75, %c0_76] : memref<4x32xf32, #tpu.memory_space<vmem>>, vector<4x32xf32>
    %cst_77 = arith.constant dense<0.000000e+00> : vector<64x32xf32>
    %112 = tpu.matmul %110, %111, %cst_77 {dimension_numbers = #tpu.dot_dimension_numbers<[1], [0], [0], [1], [0, 0, 1, 1], [], []>} : vector<64x4xf32>, vector<4x32xf32>, vector<64x32xf32> -> vector<64x32xf32>
    %113 = tpu.reciprocal %112 {approx = true} : vector<64x32xf32> -> vector<64x32xf32>
    %114 = arith.mulf %108, %113 : vector<64x32xf32>
    %115 = vector.shape_cast %95 : vector<8x8x16xf32> to vector<8x1x8x16xf32>
    %c0_78 = arith.constant 0 : index
    %c0_79 = arith.constant 0 : index
    %c0_80 = arith.constant 0 : index
    %c0_81 = arith.constant 0 : index
    %116 = vector.load %arg22[%c0_78, %c0_79, %c0_80, %c0_81] : memref<1x4x8x16xf32, #tpu.memory_space<vmem>>, vector<1x4x8x16xf32>
    %117 = vector.broadcast %115 : vector<8x1x8x16xf32> to vector<8x4x8x16xf32>
    %118 = vector.broadcast %116 : vector<1x4x8x16xf32> to vector<8x4x8x16xf32>
    %119 = arith.mulf %117, %118 : vector<8x4x8x16xf32>
    %120 = vector.shape_cast %119 : vector<8x4x8x16xf32> to vector<8x32x16xf32>
    %121 = vector.shape_cast %114 : vector<64x32xf32> to vector<8x8x32xf32>
    "tpu.trace_start"() <{level = 10 : i32, message = "ntp,npf->ntf"}> : () -> ()
    %cst_82 = arith.constant dense<0.000000e+00> : vector<8x8x16xf32>
    %122 = tpu.matmul %121, %120, %cst_82 {dimension_numbers = #tpu.dot_dimension_numbers<[2], [1], [1], [2], [0, 0, 0, 1, 1, 2], [0], [0]>} : vector<8x8x32xf32>, vector<8x32x16xf32>, vector<8x8x16xf32> -> vector<8x8x16xf32>
    "tpu.trace_stop"() : () -> ()
    %123 = vector.shape_cast %122 : vector<8x8x16xf32> to vector<64x16xf32>
    %c0_83 = arith.constant 0 : index
    %c0_84 = arith.constant 0 : index
    %124 = vector.load %arg20[%c0_83, %c0_84] : memref<16x16xf32, #tpu.memory_space<vmem>>, vector<16x16xf32>
    %cst_85 = arith.constant dense<0.000000e+00> : vector<64x16xf32>
    %125 = tpu.matmul %123, %124, %cst_85 {dimension_numbers = #tpu.dot_dimension_numbers<[1], [0], [0], [1], [0, 0, 1, 1], [], []>} : vector<64x16xf32>, vector<16x16xf32>, vector<64x16xf32> -> vector<64x16xf32>
    %c0_86 = arith.constant 0 : index
    %c0_87 = arith.constant 0 : index
    %126 = vector.load %arg21[%c0_86, %c0_87] : memref<1x16xf32, #tpu.memory_space<vmem>>, vector<1x16xf32>
    %127 = vector.broadcast %126 : vector<1x16xf32> to vector<64x16xf32>
    %128 = arith.addf %125, %127 : vector<64x16xf32>
    %129 = arith.addf %128, %77 : vector<64x16xf32>
    %c0_88 = arith.constant 0 : index
    %c0_89 = arith.constant 0 : index
    %c0_90 = arith.constant 0 : index
    %130 = vector.load %arg25[%c0_88, %c0_89, %c0_90] : memref<2x64x16xf32, #tpu.memory_space<vmem>>, vector<1x64x16xf32>
    %131 = vector.shape_cast %130 : vector<1x64x16xf32> to vector<64x16xf32>
    %c1_91 = arith.constant 1 : index
    %c0_92 = arith.constant 0 : index
    %c0_93 = arith.constant 0 : index
    %132 = vector.load %arg25[%c1_91, %c0_92, %c0_93] : memref<2x64x16xf32, #tpu.memory_space<vmem>>, vector<1x64x16xf32>
    %133 = vector.shape_cast %132 : vector<1x64x16xf32> to vector<64x16xf32>
    %134 = vector.shape_cast %129 : vector<64x16xf32> to vector<1x64x16xf32>
    %cst_94 = arith.constant dense<0.000000e+00> : vector<1xf32>
    %135 = vector.multi_reduction <add>, %134, %cst_94 [1, 2] : vector<1x64x16xf32> to vector<1xf32>
    %136 = vector.shape_cast %135 : vector<1xf32> to vector<1x1x1xf32>
    %137 = vector.extract %136[0, 0, 0] : f32 from vector<1x1x1xf32>
    %138 = arith.mulf %129, %129 : vector<64x16xf32>
    %139 = vector.shape_cast %138 : vector<64x16xf32> to vector<1x64x16xf32>
    %cst_95 = arith.constant dense<0.000000e+00> : vector<1xf32>
    %140 = vector.multi_reduction <add>, %139, %cst_95 [1, 2] : vector<1x64x16xf32> to vector<1xf32>
    %141 = vector.shape_cast %140 : vector<1xf32> to vector<1x1x1xf32>
    %142 = vector.extract %141[0, 0, 0] : f32 from vector<1x1x1xf32>
    %cst_96 = arith.constant 1.024000e+03 : f32
    %143 = arith.divf %137, %cst_96 : f32
    %cst_97 = arith.constant 1.024000e+03 : f32
    %144 = arith.divf %142, %cst_97 : f32
    %145 = arith.mulf %143, %143 : f32
    %146 = arith.subf %144, %145 : f32
    %147 = vector.broadcast %143 : f32 to vector<64x16xf32>
    %148 = arith.subf %129, %147 : vector<64x16xf32>
    %cst_98 = arith.constant 9.99999974E-6 : f32
    %149 = arith.addf %146, %cst_98 : f32
    %150 = math.rsqrt %149 : f32
    %151 = vector.broadcast %150 : f32 to vector<64x16xf32>
    %152 = arith.mulf %148, %151 : vector<64x16xf32>
    %153 = arith.mulf %152, %131 : vector<64x16xf32>
    %154 = arith.addf %153, %133 : vector<64x16xf32>
    %c0_99 = arith.constant 0 : index
    %c0_100 = arith.constant 0 : index
    %155 = vector.load %arg26[%c0_99, %c0_100] : memref<16x32xf32, #tpu.memory_space<vmem>>, vector<16x32xf32>
    %cst_101 = arith.constant dense<0.000000e+00> : vector<64x32xf32>
    %156 = tpu.matmul %154, %155, %cst_101 {dimension_numbers = #tpu.dot_dimension_numbers<[1], [0], [0], [1], [0, 0, 1, 1], [], []>} : vector<64x16xf32>, vector<16x32xf32>, vector<64x32xf32> -> vector<64x32xf32>
    %c0_102 = arith.constant 0 : index
    %c0_103 = arith.constant 0 : index
    %157 = vector.load %arg27[%c0_102, %c0_103] : memref<1x32xf32, #tpu.memory_space<vmem>>, vector<1x32xf32>
    %158 = vector.broadcast %157 : vector<1x32xf32> to vector<64x32xf32>
    %159 = arith.addf %156, %158 : vector<64x32xf32>
    %cst_104 = arith.constant 0.000000e+00 : f32
    %160 = vector.broadcast %cst_104 : f32 to vector<64x32xf32>
    %161 = arith.maximumf %159, %160 : vector<64x32xf32>
    %c0_105 = arith.constant 0 : index
    %c0_106 = arith.constant 0 : index
    %162 = vector.load %arg28[%c0_105, %c0_106] : memref<32x16xf32, #tpu.memory_space<vmem>>, vector<32x16xf32>
    %cst_107 = arith.constant dense<0.000000e+00> : vector<64x16xf32>
    %163 = tpu.matmul %161, %162, %cst_107 {dimension_numbers = #tpu.dot_dimension_numbers<[1], [0], [0], [1], [0, 0, 1, 1], [], []>} : vector<64x32xf32>, vector<32x16xf32>, vector<64x16xf32> -> vector<64x16xf32>
    %c0_108 = arith.constant 0 : index
    %c0_109 = arith.constant 0 : index
    %164 = vector.load %arg29[%c0_108, %c0_109] : memref<1x16xf32, #tpu.memory_space<vmem>>, vector<1x16xf32>
    %165 = vector.broadcast %164 : vector<1x16xf32> to vector<64x16xf32>
    %166 = arith.addf %163, %165 : vector<64x16xf32>
    %167 = arith.addf %166, %154 : vector<64x16xf32>
    %c0_110 = arith.constant 0 : index
    %c0_111 = arith.constant 0 : index
    %c0_112 = arith.constant 0 : index
    %168 = vector.load %arg30[%c0_110, %c0_111, %c0_112] : memref<2x64x16xf32, #tpu.memory_space<vmem>>, vector<1x64x16xf32>
    %169 = vector.shape_cast %168 : vector<1x64x16xf32> to vector<64x16xf32>
    %c1_113 = arith.constant 1 : index
    %c0_114 = arith.constant 0 : index
    %c0_115 = arith.constant 0 : index
    %170 = vector.load %arg30[%c1_113, %c0_114, %c0_115] : memref<2x64x16xf32, #tpu.memory_space<vmem>>, vector<1x64x16xf32>
    %171 = vector.shape_cast %170 : vector<1x64x16xf32> to vector<64x16xf32>
    %172 = vector.shape_cast %167 : vector<64x16xf32> to vector<1x64x16xf32>
    %cst_116 = arith.constant dense<0.000000e+00> : vector<1xf32>
    %173 = vector.multi_reduction <add>, %172, %cst_116 [1, 2] : vector<1x64x16xf32> to vector<1xf32>
    %174 = vector.shape_cast %173 : vector<1xf32> to vector<1x1x1xf32>
    %175 = vector.extract %174[0, 0, 0] : f32 from vector<1x1x1xf32>
    %176 = arith.mulf %167, %167 : vector<64x16xf32>
    %177 = vector.shape_cast %176 : vector<64x16xf32> to vector<1x64x16xf32>
    %cst_117 = arith.constant dense<0.000000e+00> : vector<1xf32>
    %178 = vector.multi_reduction <add>, %177, %cst_117 [1, 2] : vector<1x64x16xf32> to vector<1xf32>
    %179 = vector.shape_cast %178 : vector<1xf32> to vector<1x1x1xf32>
    %180 = vector.extract %179[0, 0, 0] : f32 from vector<1x1x1xf32>
    %cst_118 = arith.constant 1.024000e+03 : f32
    %181 = arith.divf %175, %cst_118 : f32
    %cst_119 = arith.constant 1.024000e+03 : f32
    %182 = arith.divf %180, %cst_119 : f32
    %183 = arith.mulf %181, %181 : f32
    %184 = arith.subf %182, %183 : f32
    %185 = vector.broadcast %181 : f32 to vector<64x16xf32>
    %186 = arith.subf %167, %185 : vector<64x16xf32>
    %cst_120 = arith.constant 9.99999974E-6 : f32
    %187 = arith.addf %184, %cst_120 : f32
    %188 = math.rsqrt %187 : f32
    %189 = vector.broadcast %188 : f32 to vector<64x16xf32>
    %190 = arith.mulf %186, %189 : vector<64x16xf32>
    %191 = arith.mulf %190, %169 : vector<64x16xf32>
    %192 = arith.addf %191, %171 : vector<64x16xf32>
    %c0_121 = arith.constant 0 : index
    %c0_122 = arith.constant 0 : index
    %c0_123 = arith.constant 0 : index
    %193 = vector.load %arg31[%c0_121, %c0_122, %c0_123] : memref<1x64x16xf32, #tpu.memory_space<vmem>>, vector<1x64x16xf32>
    %194 = vector.shape_cast %193 : vector<1x64x16xf32> to vector<64x16xf32>
    %195 = vector.shape_cast %192 : vector<64x16xf32> to vector<1x64x16xf32>
    tpu.vector_store %arg31[%c0_121, %c0_122, %c0_123], %195 {strides = array<i32>} : memref<1x64x16xf32, #tpu.memory_space<vmem>>, vector<1x64x16xf32>,
    return
  }
  func.func @transform_0(%arg0: i32) -> (i32, i32, i32) {
    %c0_i32 = arith.constant 0 : i32
    %c0_i32_0 = arith.constant 0 : i32
    %c0_i32_1 = arith.constant 0 : i32
    return %arg0, %c0_i32, %c0_i32_0 : i32, i32, i32
  }
  func.func @transform_1(%arg0: i32) -> (i32, i32) {
    %c0_i32 = arith.constant 0 : i32
    %c0_i32_0 = arith.constant 0 : i32
    %c0_i32_1 = arith.constant 0 : i32
    return %c0_i32, %c0_i32_0 : i32, i32
  }
  func.func @transform_2(%arg0: i32) -> (i32, i32) {
    %c0_i32 = arith.constant 0 : i32
    %c0_i32_0 = arith.constant 0 : i32
    %c0_i32_1 = arith.constant 0 : i32
    return %c0_i32, %c0_i32_0 : i32, i32
  }
  func.func @transform_3(%arg0: i32) -> (i32, i32) {
    %c0_i32 = arith.constant 0 : i32
    %c0_i32_0 = arith.constant 0 : i32
    %c0_i32_1 = arith.constant 0 : i32
    return %c0_i32, %c0_i32_0 : i32, i32
  }
  func.func @transform_4(%arg0: i32) -> (i32, i32) {
    %c0_i32 = arith.constant 0 : i32
    %c0_i32_0 = arith.constant 0 : i32
    %c0_i32_1 = arith.constant 0 : i32
    return %c0_i32, %c0_i32_0 : i32, i32
  }
  func.func @transform_5(%arg0: i32) -> (i32, i32) {
    %c0_i32 = arith.constant 0 : i32
    %c0_i32_0 = arith.constant 0 : i32
    %c0_i32_1 = arith.constant 0 : i32
    return %c0_i32, %c0_i32_0 : i32, i32
  }
  func.func @transform_6(%arg0: i32) -> (i32, i32) {
    %c0_i32 = arith.constant 0 : i32
    %c0_i32_0 = arith.constant 0 : i32
    %c0_i32_1 = arith.constant 0 : i32
    return %c0_i32, %c0_i32_0 : i32, i32
  }
  func.func @transform_7(%arg0: i32) -> (i32, i32) {
    %c0_i32 = arith.constant 0 : i32
    %c0_i32_0 = arith.constant 0 : i32
    %c0_i32_1 = arith.constant 0 : i32
    return %c0_i32, %c0_i32_0 : i32, i32
  }
  func.func @transform_8(%arg0: i32) -> (i32, i32) {
    %c0_i32 = arith.constant 0 : i32
    %c0_i32_0 = arith.constant 0 : i32
    %c0_i32_1 = arith.constant 0 : i32
    return %c0_i32, %c0_i32_0 : i32, i32
  }
  func.func @transform_9(%arg0: i32) -> (i32, i32) {
    %c0_i32 = arith.constant 0 : i32
    %c0_i32_0 = arith.constant 0 : i32
    %c0_i32_1 = arith.constant 0 : i32
    return %c0_i32, %c0_i32_0 : i32, i32
  }
  func.func @transform_10(%arg0: i32) -> (i32, i32, i32, i32) {
    %c0_i32 = arith.constant 0 : i32
    %c0_i32_0 = arith.constant 0 : i32
    %c0_i32_1 = arith.constant 0 : i32
    %c0_i32_2 = arith.constant 0 : i32
    %c0_i32_3 = arith.constant 0 : i32
    return %c0_i32, %c0_i32_0, %c0_i32_1, %c0_i32_2 : i32, i32, i32, i32
  }
  func.func @transform_11(%arg0: i32) -> (i32, i32) {
    %c0_i32 = arith.constant 0 : i32
    %c0_i32_0 = arith.constant 0 : i32
    %c0_i32_1 = arith.constant 0 : i32
    return %c0_i32, %c0_i32_0 : i32, i32
  }
  func.func @transform_12(%arg0: i32) -> (i32, i32, i32) {
    %c0_i32 = arith.constant 0 : i32
    %c0_i32_0 = arith.constant 0 : i32
    %c0_i32_1 = arith.constant 0 : i32
    %c0_i32_2 = arith.constant 0 : i32
    return %c0_i32, %c0_i32_0, %c0_i32_1 : i32, i32, i32
  }
  func.func @transform_13(%arg0: i32) -> (i32, i32) {
    %c0_i32 = arith.constant 0 : i32
    %c0_i32_0 = arith.constant 0 : i32
    %c0_i32_1 = arith.constant 0 : i32
    return %c0_i32, %c0_i32_0 : i32, i32
  }
  func.func @transform_14(%arg0: i32) -> (i32, i32) {
    %c0_i32 = arith.constant 0 : i32
    %c0_i32_0 = arith.constant 0 : i32
    %c0_i32_1 = arith.constant 0 : i32
    return %c0_i32, %c0_i32_0 : i32, i32
  }
  func.func @transform_15(%arg0: i32) -> (i32, i32) {
    %c0_i32 = arith.constant 0 : i32
    %c0_i32_0 = arith.constant 0 : i32
    %c0_i32_1 = arith.constant 0 : i32
    return %c0_i32, %c0_i32_0 : i32, i32
  }
  func.func @transform_16(%arg0: i32) -> (i32, i32) {
    %c0_i32 = arith.constant 0 : i32
    %c0_i32_0 = arith.constant 0 : i32
    %c0_i32_1 = arith.constant 0 : i32
    return %c0_i32, %c0_i32_0 : i32, i32
  }
  func.func @transform_17(%arg0: i32) -> (i32, i32) {
    %c0_i32 = arith.constant 0 : i32
    %c0_i32_0 = arith.constant 0 : i32
    %c0_i32_1 = arith.constant 0 : i32
    return %c0_i32, %c0_i32_0 : i32, i32
  }
  func.func @transform_18(%arg0: i32) -> (i32, i32) {
    %c0_i32 = arith.constant 0 : i32
    %c0_i32_0 = arith.constant 0 : i32
    %c0_i32_1 = arith.constant 0 : i32
    return %c0_i32, %c0_i32_0 : i32, i32
  }
  func.func @transform_19(%arg0: i32) -> (i32, i32) {
    %c0_i32 = arith.constant 0 : i32
    %c0_i32_0 = arith.constant 0 : i32
    %c0_i32_1 = arith.constant 0 : i32
    return %c0_i32, %c0_i32_0 : i32, i32
  }
  func.func @transform_20(%arg0: i32) -> (i32, i32) {
    %c0_i32 = arith.constant 0 : i32
    %c0_i32_0 = arith.constant 0 : i32
    %c0_i32_1 = arith.constant 0 : i32
    return %c0_i32, %c0_i32_0 : i32, i32
  }
  func.func @transform_21(%arg0: i32) -> (i32, i32, i32, i32) {
    %c0_i32 = arith.constant 0 : i32
    %c0_i32_0 = arith.constant 0 : i32
    %c0_i32_1 = arith.constant 0 : i32
    %c0_i32_2 = arith.constant 0 : i32
    %c0_i32_3 = arith.constant 0 : i32
    return %c0_i32, %c0_i32_0, %c0_i32_1, %c0_i32_2 : i32, i32, i32, i32
  }
  func.func @transform_22(%arg0: i32) -> (i32, i32) {
    %c0_i32 = arith.constant 0 : i32
    %c0_i32_0 = arith.constant 0 : i32
    %c0_i32_1 = arith.constant 0 : i32
    return %c0_i32, %c0_i32_0 : i32, i32
  }
  func.func @transform_23(%arg0: i32) -> (i32, i32) {
    %c0_i32 = arith.constant 0 : i32
    %c0_i32_0 = arith.constant 0 : i32
    %c0_i32_1 = arith.constant 0 : i32
    return %c0_i32, %c0_i32_0 : i32, i32
  }
  func.func @transform_24(%arg0: i32) -> (i32, i32, i32) {
    %c0_i32 = arith.constant 0 : i32
    %c0_i32_0 = arith.constant 0 : i32
    %c0_i32_1 = arith.constant 0 : i32
    %c0_i32_2 = arith.constant 0 : i32
    return %c0_i32, %c0_i32_0, %c0_i32_1 : i32, i32, i32
  }
  func.func @transform_25(%arg0: i32) -> (i32, i32) {
    %c0_i32 = arith.constant 0 : i32
    %c0_i32_0 = arith.constant 0 : i32
    %c0_i32_1 = arith.constant 0 : i32
    return %c0_i32, %c0_i32_0 : i32, i32
  }
  func.func @transform_26(%arg0: i32) -> (i32, i32) {
    %c0_i32 = arith.constant 0 : i32
    %c0_i32_0 = arith.constant 0 : i32
    %c0_i32_1 = arith.constant 0 : i32
    return %c0_i32, %c0_i32_0 : i32, i32
  }
  func.func @transform_27(%arg0: i32) -> (i32, i32) {
    %c0_i32 = arith.constant 0 : i32
    %c0_i32_0 = arith.constant 0 : i32
    %c0_i32_1 = arith.constant 0 : i32
    return %c0_i32, %c0_i32_0 : i32, i32
  }
  func.func @transform_28(%arg0: i32) -> (i32, i32) {
    %c0_i32 = arith.constant 0 : i32
    %c0_i32_0 = arith.constant 0 : i32
    %c0_i32_1 = arith.constant 0 : i32
    return %c0_i32, %c0_i32_0 : i32, i32
  }
  func.func @transform_29(%arg0: i32) -> (i32, i32, i32) {
    %c0_i32 = arith.constant 0 : i32
    %c0_i32_0 = arith.constant 0 : i32
    %c0_i32_1 = arith.constant 0 : i32
    %c0_i32_2 = arith.constant 0 : i32
    return %c0_i32, %c0_i32_0, %c0_i32_1 : i32, i32, i32
  }
  func.func @transform_30(%arg0: i32) -> (i32, i32, i32) {
    %c0_i32 = arith.constant 0 : i32
    %c0_i32_0 = arith.constant 0 : i32
    %c0_i32_1 = arith.constant 0 : i32
    return %arg0, %c0_i32, %c0_i32_0 : i32, i32, i32
  }
}

</mosaic_0001>

<llo_original>
// kernel: forward.1
$region0: #{forward.1}
  #allocation0 [shape = 'u32[]', space=smem, size = 0x4, offset = 0x4, fixed_abs, tag = 'smem constant byte address 0x4 - core index']
  #allocation1 [shape = 'u32[144,128]{1,0:T(1,128)}', space=vmem, size = 0x12000, scoped, tag = 'internal scratch']
  %s0 = inlined_call_operand.smem [shape: u32[31], index: -1, kind: input, shape index: {}]
  %s1 = sld [smem:[%s0]]
  %s2 = scalar_lea.smem %s0, 1
  %s3 = sld [smem:[%s2]]
  %s4 = scalar_lea.smem %s0, 2
  %s5 = sld [smem:[%s4]]
  %s6 = scalar_lea.smem %s0, 3
  %s7 = sld [smem:[%s6]]
  %s8 = scalar_lea.smem %s0, 4
  %s9 = sld [smem:[%s8]]
  %s10 = scalar_lea.smem %s0, 5
  %s11 = sld [smem:[%s10]]
  %s12 = scalar_lea.smem %s0, 6
  %s13 = sld [smem:[%s12]]
  %s14 = scalar_lea.smem %s0, 7
  %s15 = sld [smem:[%s14]]
  %s16 = scalar_lea.smem %s0, 8
  %s17 = sld [smem:[%s16]]
  %s18 = scalar_lea.smem %s0, 9
  %s19 = sld [smem:[%s18]]
  %s20 = scalar_lea.smem %s0, 10
  %s21 = sld [smem:[%s20]]
  %s22 = scalar_lea.smem %s0, 11
  %s23 = sld [smem:[%s22]]
  %s24 = scalar_lea.smem %s0, 12
  %s25 = sld [smem:[%s24]]
  %s26 = scalar_lea.smem %s0, 13
  %s27 = sld [smem:[%s26]]
  %s28 = scalar_lea.smem %s0, 14
  %s29 = sld [smem:[%s28]]
  %s30 = scalar_lea.smem %s0, 15
  %s31 = sld [smem:[%s30]]
  %s32 = scalar_lea.smem %s0, 16
  %s33 = sld [smem:[%s32]]
  %s34 = scalar_lea.smem %s0, 17
  %s35 = sld [smem:[%s34]]
  %s36 = scalar_lea.smem %s0, 18
  %s37 = sld [smem:[%s36]]
  %s38 = scalar_lea.smem %s0, 19
  %s39 = sld [smem:[%s38]]
  %s40 = scalar_lea.smem %s0, 20
  %s41 = sld [smem:[%s40]]
  %s42 = scalar_lea.smem %s0, 21
  %s43 = sld [smem:[%s42]]
  %s44 = scalar_lea.smem %s0, 22
  %s45 = sld [smem:[%s44]]
  %s46 = scalar_lea.smem %s0, 23
  %s47 = sld [smem:[%s46]]
  %s48 = scalar_lea.smem %s0, 24
  %s49 = sld [smem:[%s48]]
  %s50 = scalar_lea.smem %s0, 25
  %s51 = sld [smem:[%s50]]
  %s52 = scalar_lea.smem %s0, 26
  %s53 = sld [smem:[%s52]]
  %s54 = scalar_lea.smem %s0, 27
  %s55 = sld [smem:[%s54]]
  %s56 = scalar_lea.smem %s0, 28
  %s57 = sld [smem:[%s56]]
  %s58 = scalar_lea.smem %s0, 29
  %s59 = sld [smem:[%s58]]
  %s60 = scalar_lea.smem %s0, 30
  %s61 = sld [smem:[%s60]]
  %s62 = sld [smem:[#allocation0]]
  $region209: #{forward.1} parent=0
    _
  %s64 = ssub.s32 1, %s62
  %s65 = scalar_select 0, %s64, %s62
  $region1: #{forward.1} parent=0
    #allocation2 [shape = 'u8[8192]{0}', space=vmem, size = 0x2000, scoped, tag = 'input window, operand 1, single buffered']
    #allocation3 [shape = 's32[2]{0}', space=sflag, size = 0x8, scoped, tag = 'scoped memory for forward.1']
    #allocation4 [shape = 's32[2]{0}', space=sflag, size = 0x8, scoped, tag = 'scoped memory for forward.1']
    #allocation5 [shape = 'u8[512]{0}', space=vmem, size = 0x400, scoped, tag = 'input window, operand 2, single buffered']
    #allocation6 [shape = 's32[1]{0}', space=sflag, size = 0x4, scoped, tag = 'scoped memory for forward.1']
    #allocation7 [shape = 'u8[8192]{0}', space=vmem, size = 0x2000, scoped, tag = 'input window, operand 3, single buffered']
    #allocation8 [shape = 'u8[2048]{0}', space=vmem, size = 0x800, scoped, tag = 'input window, operand 4, single buffered']
    #allocation9 [shape = 's32[1]{0}', space=sflag, size = 0x4, scoped, tag = 'scoped memory for forward.1']
    #allocation10 [shape = 'u8[32768]{0}', space=vmem, size = 0x8000, scoped, tag = 'input window, operand 6, single buffered']
    #allocation11 [shape = 'u8[32768]{0}', space=vmem, size = 0x8000, scoped, tag = 'input window, operand 7, single buffered']
    #allocation12 [shape = 's32[1]{0}', space=sflag, size = 0x4, scoped, tag = 'scoped memory for forward.1']
    #allocation13 [shape = 'u8[32768]{0}', space=vmem, size = 0x8000, scoped, tag = 'input window, operand 8, single buffered']
    #allocation14 [shape = 'u8[32768]{0}', space=vmem, size = 0x8000, scoped, tag = 'input window, operand 9, single buffered']
    #allocation15 [shape = 's32[1]{0}', space=sflag, size = 0x4, scoped, tag = 'scoped memory for forward.1']
    #allocation16 [shape = 'u8[8192]{0}', space=vmem, size = 0x2000, scoped, tag = 'input window, operand 13, single buffered']
    #allocation17 [shape = 'u8[512]{0}', space=vmem, size = 0x400, scoped, tag = 'input window, operand 14, single buffered']
    #allocation18 [shape = 's32[1]{0}', space=sflag, size = 0x4, scoped, tag = 'scoped memory for forward.1']
    #allocation19 [shape = 'u8[8192]{0}', space=vmem, size = 0x2000, scoped, tag = 'input window, operand 15, single buffered']
    #allocation20 [shape = 'u8[512]{0}', space=vmem, size = 0x400, scoped, tag = 'input window, operand 16, single buffered']
    #allocation21 [shape = 's32[1]{0}', space=sflag, size = 0x4, scoped, tag = 'scoped memory for forward.1']
    #allocation22 [shape = 'u8[8192]{0}', space=vmem, size = 0x2000, scoped, tag = 'input window, operand 17, single buffered']
    #allocation23 [shape = 'u8[2048]{0}', space=vmem, size = 0x800, scoped, tag = 'input window, operand 23, single buffered']
    #allocation24 [shape = 's32[1]{0}', space=sflag, size = 0x4, scoped, tag = 'scoped memory for forward.1']
    #allocation25 [shape = 'u8[65536]{0}', space=vmem, size = 0x10000, scoped, tag = 'output window, operand 0']
    %66 = vsyncpa [#allocation3], 0
    %67 = vsyncpa [#allocation6], 0
    %68 = vsyncpa [#allocation9], 0
    %69 = vsyncpa [#allocation12], 0
    %70 = vsyncpa [#allocation15], 0
    %71 = vsyncpa [#allocation18], 0
    %72 = vsyncpa [#allocation21], 0
    %73 = vsyncpa [#allocation24], 0
    %74 = vsyncpa [#allocation4], 0
    %s75 = scalar_lea.sflag [#allocation4], 1
    %76 = vsyncpa %s75, 0
    loop: start=0, step=1, limit=4
    $region2: #{forward.1} parent=1 // loop_pre_header
      _
    $region3: #{forward.1} parent=1 // loop_header
      %s78 = sphi 0, %s82
      %p79 = scmp.ge.s32.totalorder %s78, 4
      %s88 = sphi 0, %s90
      %s91 = sphi 0, %s88
      %s92 = sphi 0, %s91
      %s108 = sphi 0, %s92
      %s112 = sphi 0, %s112
      %s114 = sphi 0, %s112
      %s115 = sphi 0, %s114
      %s129 = sphi 0, %s115
      %s133 = sphi 0, %s133
      %s135 = sphi 0, %s133
      %s136 = sphi 0, %s135
      %s150 = sphi 0, %s136
      %s154 = sphi 0, %s154
      %s156 = sphi 0, %s154
      %s157 = sphi 0, %s156
      %s171 = sphi 0, %s157
      %s175 = sphi 0, %s175
      %s177 = sphi 0, %s175
      %s178 = sphi 0, %s177
      %s192 = sphi 0, %s178
      %s196 = sphi 0, %s196
      %s198 = sphi 0, %s196
      %s199 = sphi 0, %s198
      %s213 = sphi 0, %s199
      %s217 = sphi 0, %s217
      %s219 = sphi 0, %s217
      %s220 = sphi 0, %s219
      %s234 = sphi 0, %s220
      %s238 = sphi 0, %s238
      %s240 = sphi 0, %s238
      %s241 = sphi 0, %s240
      %s255 = sphi 0, %s241
      %s259 = sphi 0, %s259
      %s261 = sphi 0, %s259
      %s262 = sphi 0, %s261
      %s276 = sphi 0, %s262
      %s280 = sphi 0, %s280
      %s282 = sphi 0, %s280
      %s283 = sphi 0, %s282
      %s297 = sphi 0, %s283
      %s301 = sphi 0, %s301
      %s303 = sphi 0, %s301
      %s304 = sphi 0, %s303
      %s318 = sphi 0, %s304
      %s322 = sphi 0, %s322
      %s324 = sphi 0, %s322
      %s325 = sphi 0, %s324
      %s339 = sphi 0, %s325
      %s343 = sphi 0, %s343
      %s345 = sphi 0, %s343
      %s346 = sphi 0, %s345
      %s360 = sphi 0, %s346
      %s364 = sphi 0, %s364
      %s366 = sphi 0, %s364
      %s367 = sphi 0, %s366
      %s381 = sphi 0, %s367
      %s385 = sphi 0, %s385
      %s387 = sphi 0, %s385
      %s388 = sphi 0, %s387
      %s402 = sphi 0, %s388
      %s406 = sphi 0, %s406
      %s408 = sphi 0, %s406
      %s409 = sphi 0, %s408
      %s423 = sphi 0, %s409
      %s427 = sphi 0, %s427
      %s429 = sphi 0, %s427
      %s430 = sphi 0, %s429
      %s444 = sphi 0, %s430
      %s448 = sphi 0, %s448
      %s450 = sphi 0, %s448
      %s451 = sphi 0, %s450
      %s465 = sphi 0, %s451
      %s469 = sphi 0, %s469
      %s471 = sphi 0, %s469
      %s472 = sphi 0, %s471
      %s486 = sphi 0, %s472
      %s490 = sphi 0, %s490
      %s492 = sphi 0, %s490
      %s493 = sphi 0, %s492
      %s507 = sphi 0, %s493
      %s511 = sphi 0, %s511
      %s513 = sphi 0, %s511
      %s514 = sphi 0, %s513
      %s528 = sphi 0, %s514
      %s532 = sphi 0, %s532
      %s534 = sphi 0, %s532
      %s535 = sphi 0, %s534
      %s549 = sphi 0, %s535
      %s553 = sphi 0, %s553
      %s555 = sphi 0, %s553
      %s556 = sphi 0, %s555
      %s570 = sphi 0, %s556
      %s574 = sphi 0, %s574
      %s576 = sphi 0, %s574
      %s577 = sphi 0, %s576
      %s591 = sphi 0, %s577
      %s595 = sphi 0, %s595
      %s597 = sphi 0, %s595
      %s598 = sphi 0, %s597
      %s612 = sphi 0, %s598
      %s616 = sphi 0, %s616
      %s618 = sphi 0, %s616
      %s619 = sphi 0, %s618
      %s633 = sphi 0, %s619
      %s637 = sphi 0, %s637
      %s639 = sphi 0, %s637
      %s640 = sphi 0, %s639
      %s654 = sphi 0, %s640
      %s658 = sphi 0, %s658
      %s660 = sphi 0, %s658
      %s661 = sphi 0, %s660
      %s675 = sphi 0, %s661
      %s679 = sphi 0, %s679
      %s681 = sphi 0, %s679
      %s682 = sphi 0, %s681
      %s696 = sphi 0, %s682
      %s700 = sphi 0, %s700
      %s702 = sphi 0, %s700
      %s703 = sphi 0, %s702
      %s717 = sphi 0, %s703
      %s723 = sphi 0, %s725
      %s726 = sphi 0, %s723
      %s727 = sphi 0, %s726
      %s743 = sphi 0, %s727
    $region4: #{forward.1} parent=1 // loop_header_branch
      %81 = sbr.rel (%p79) target = $region8
    $region5: #{forward.1} parent=1 // loop_body
      %s83 = ssub.s32 %s78, 1
      %s84 = ssub.s32 %s78, 2
      %s85 = sadd.s32 %s78, 1
      %s86 = ssub.s32 %s78, %s85
      %p87 = scmp.eq.s32.totalorder %s86, 0
      %s89 = sadd.s32 %s88, 1
      %s90 = scalar_select %p87, %s88, %s89
      %p93 = pneg %p87
      %p94 = scmp.eq.s32.totalorder %s78, 1
      %p95 = por %p93, %p94
      %p96 = scmp.ne.s32.totalorder %s88, %s91
      %p97 = scmp.eq.s32.totalorder %s78, 0
      %p98 = por %p96, %p97
      %p99 = scmp.ne.s32.totalorder %s88, %s91
      %p100 = scmp.eq.s32.totalorder %s83, 1
      %p101 = por %p99, %p100
      %p102 = scmp.ne.s32.totalorder %s91, %s92
      %p103 = scmp.eq.s32.totalorder %s83, 0
      %p104 = por %p102, %p103
      %p105 = scmp.ne.s32.totalorder %s91, %s92
      %p106 = scmp.eq.s32.totalorder %s84, 1
      %p107 = por %p105, %p106
      %p109 = scmp.ne.s32.totalorder %s92, %s108
      %p110 = scmp.eq.s32.totalorder %s84, 0
      %p111 = por %p109, %p110
      %s113 = sadd.s32 %s112, 1
      %p116 = scmp.eq.s32.totalorder %s78, 1
      %p117 = scmp.ne.s32.totalorder %s112, %s114
      %p118 = scmp.eq.s32.totalorder %s78, 0
      %p119 = por %p117, %p118
      %p120 = scmp.ne.s32.totalorder %s112, %s114
      %p121 = scmp.eq.s32.totalorder %s83, 1
      %p122 = por %p120, %p121
      %p123 = scmp.ne.s32.totalorder %s114, %s115
      %p124 = scmp.eq.s32.totalorder %s83, 0
      %p125 = por %p123, %p124
      %p126 = scmp.ne.s32.totalorder %s114, %s115
      %p127 = scmp.eq.s32.totalorder %s84, 1
      %p128 = por %p126, %p127
      %p130 = scmp.ne.s32.totalorder %s115, %s129
      %p131 = scmp.eq.s32.totalorder %s84, 0
      %p132 = por %p130, %p131
      %s134 = sadd.s32 %s133, 1
      %p137 = scmp.eq.s32.totalorder %s78, 1
      %p138 = scmp.ne.s32.totalorder %s133, %s135
      %p139 = scmp.eq.s32.totalorder %s78, 0
      %p140 = por %p138, %p139
      %p141 = scmp.ne.s32.totalorder %s133, %s135
      %p142 = scmp.eq.s32.totalorder %s83, 1
      %p143 = por %p141, %p142
      %p144 = scmp.ne.s32.totalorder %s135, %s136
      %p145 = scmp.eq.s32.totalorder %s83, 0
      %p146 = por %p144, %p145
      %p147 = scmp.ne.s32.totalorder %s135, %s136
      %p148 = scmp.eq.s32.totalorder %s84, 1
      %p149 = por %p147, %p148
      %p151 = scmp.ne.s32.totalorder %s136, %s150
      %p152 = scmp.eq.s32.totalorder %s84, 0
      %p153 = por %p151, %p152
      %s155 = sadd.s32 %s154, 1
      %p158 = scmp.eq.s32.totalorder %s78, 1
      %p159 = scmp.ne.s32.totalorder %s154, %s156
      %p160 = scmp.eq.s32.totalorder %s78, 0
      %p161 = por %p159, %p160
      %p162 = scmp.ne.s32.totalorder %s154, %s156
      %p163 = scmp.eq.s32.totalorder %s83, 1
      %p164 = por %p162, %p163
      %p165 = scmp.ne.s32.totalorder %s156, %s157
      %p166 = scmp.eq.s32.totalorder %s83, 0
      %p167 = por %p165, %p166
      %p168 = scmp.ne.s32.totalorder %s156, %s157
      %p169 = scmp.eq.s32.totalorder %s84, 1
      %p170 = por %p168, %p169
      %p172 = scmp.ne.s32.totalorder %s157, %s171
      %p173 = scmp.eq.s32.totalorder %s84, 0
      %p174 = por %p172, %p173
      %s176 = sadd.s32 %s175, 1
      %p179 = scmp.eq.s32.totalorder %s78, 1
      %p180 = scmp.ne.s32.totalorder %s175, %s177
      %p181 = scmp.eq.s32.totalorder %s78, 0
      %p182 = por %p180, %p181
      %p183 = scmp.ne.s32.totalorder %s175, %s177
      %p184 = scmp.eq.s32.totalorder %s83, 1
      %p185 = por %p183, %p184
      %p186 = scmp.ne.s32.totalorder %s177, %s178
      %p187 = scmp.eq.s32.totalorder %s83, 0
      %p188 = por %p186, %p187
      %p189 = scmp.ne.s32.totalorder %s177, %s178
      %p190 = scmp.eq.s32.totalorder %s84, 1
      %p191 = por %p189, %p190
      %p193 = scmp.ne.s32.totalorder %s178, %s192
      %p194 = scmp.eq.s32.totalorder %s84, 0
      %p195 = por %p193, %p194
      %s197 = sadd.s32 %s196, 1
      %p200 = scmp.eq.s32.totalorder %s78, 1
      %p201 = scmp.ne.s32.totalorder %s196, %s198
      %p202 = scmp.eq.s32.totalorder %s78, 0
      %p203 = por %p201, %p202
      %p204 = scmp.ne.s32.totalorder %s196, %s198
      %p205 = scmp.eq.s32.totalorder %s83, 1
      %p206 = por %p204, %p205
      %p207 = scmp.ne.s32.totalorder %s198, %s199
      %p208 = scmp.eq.s32.totalorder %s83, 0
      %p209 = por %p207, %p208
      %p210 = scmp.ne.s32.totalorder %s198, %s199
      %p211 = scmp.eq.s32.totalorder %s84, 1
      %p212 = por %p210, %p211
      %p214 = scmp.ne.s32.totalorder %s199, %s213
      %p215 = scmp.eq.s32.totalorder %s84, 0
      %p216 = por %p214, %p215
      %s218 = sadd.s32 %s217, 1
      %p221 = scmp.eq.s32.totalorder %s78, 1
      %p222 = scmp.ne.s32.totalorder %s217, %s219
      %p223 = scmp.eq.s32.totalorder %s78, 0
      %p224 = por %p222, %p223
      %p225 = scmp.ne.s32.totalorder %s217, %s219
      %p226 = scmp.eq.s32.totalorder %s83, 1
      %p227 = por %p225, %p226
      %p228 = scmp.ne.s32.totalorder %s219, %s220
      %p229 = scmp.eq.s32.totalorder %s83, 0
      %p230 = por %p228, %p229
      %p231 = scmp.ne.s32.totalorder %s219, %s220
      %p232 = scmp.eq.s32.totalorder %s84, 1
      %p233 = por %p231, %p232
      %p235 = scmp.ne.s32.totalorder %s220, %s234
      %p236 = scmp.eq.s32.totalorder %s84, 0
      %p237 = por %p235, %p236
      %s239 = sadd.s32 %s238, 1
      %p242 = scmp.eq.s32.totalorder %s78, 1
      %p243 = scmp.ne.s32.totalorder %s238, %s240
      %p244 = scmp.eq.s32.totalorder %s78, 0
      %p245 = por %p243, %p244
      %p246 = scmp.ne.s32.totalorder %s238, %s240
      %p247 = scmp.eq.s32.totalorder %s83, 1
      %p248 = por %p246, %p247
      %p249 = scmp.ne.s32.totalorder %s240, %s241
      %p250 = scmp.eq.s32.totalorder %s83, 0
      %p251 = por %p249, %p250
      %p252 = scmp.ne.s32.totalorder %s240, %s241
      %p253 = scmp.eq.s32.totalorder %s84, 1
      %p254 = por %p252, %p253
      %p256 = scmp.ne.s32.totalorder %s241, %s255
      %p257 = scmp.eq.s32.totalorder %s84, 0
      %p258 = por %p256, %p257
      %s260 = sadd.s32 %s259, 1
      %p263 = scmp.eq.s32.totalorder %s78, 1
      %p264 = scmp.ne.s32.totalorder %s259, %s261
      %p265 = scmp.eq.s32.totalorder %s78, 0
      %p266 = por %p264, %p265
      %p267 = scmp.ne.s32.totalorder %s259, %s261
      %p268 = scmp.eq.s32.totalorder %s83, 1
      %p269 = por %p267, %p268
      %p270 = scmp.ne.s32.totalorder %s261, %s262
      %p271 = scmp.eq.s32.totalorder %s83, 0
      %p272 = por %p270, %p271
      %p273 = scmp.ne.s32.totalorder %s261, %s262
      %p274 = scmp.eq.s32.totalorder %s84, 1
      %p275 = por %p273, %p274
      %p277 = scmp.ne.s32.totalorder %s262, %s276
      %p278 = scmp.eq.s32.totalorder %s84, 0
      %p279 = por %p277, %p278
      %s281 = sadd.s32 %s280, 1
      %p284 = scmp.eq.s32.totalorder %s78, 1
      %p285 = scmp.ne.s32.totalorder %s280, %s282
      %p286 = scmp.eq.s32.totalorder %s78, 0
      %p287 = por %p285, %p286
      %p288 = scmp.ne.s32.totalorder %s280, %s282
      %p289 = scmp.eq.s32.totalorder %s83, 1
      %p290 = por %p288, %p289
      %p291 = scmp.ne.s32.totalorder %s282, %s283
      %p292 = scmp.eq.s32.totalorder %s83, 0
      %p293 = por %p291, %p292
      %p294 = scmp.ne.s32.totalorder %s282, %s283
      %p295 = scmp.eq.s32.totalorder %s84, 1
      %p296 = por %p294, %p295
      %p298 = scmp.ne.s32.totalorder %s283, %s297
      %p299 = scmp.eq.s32.totalorder %s84, 0
      %p300 = por %p298, %p299
      %s302 = sadd.s32 %s301, 1
      %p305 = scmp.eq.s32.totalorder %s78, 1
      %p306 = scmp.ne.s32.totalorder %s301, %s303
      %p307 = scmp.eq.s32.totalorder %s78, 0
      %p308 = por %p306, %p307
      %p309 = scmp.ne.s32.totalorder %s301, %s303
      %p310 = scmp.eq.s32.totalorder %s83, 1
      %p311 = por %p309, %p310
      %p312 = scmp.ne.s32.totalorder %s303, %s304
      %p313 = scmp.eq.s32.totalorder %s83, 0
      %p314 = por %p312, %p313
      %p315 = scmp.ne.s32.totalorder %s303, %s304
      %p316 = scmp.eq.s32.totalorder %s84, 1
      %p317 = por %p315, %p316
      %p319 = scmp.ne.s32.totalorder %s304, %s318
      %p320 = scmp.eq.s32.totalorder %s84, 0
      %p321 = por %p319, %p320
      %s323 = sadd.s32 %s322, 1
      %p326 = scmp.eq.s32.totalorder %s78, 1
      %p327 = scmp.ne.s32.totalorder %s322, %s324
      %p328 = scmp.eq.s32.totalorder %s78, 0
      %p329 = por %p327, %p328
      %p330 = scmp.ne.s32.totalorder %s322, %s324
      %p331 = scmp.eq.s32.totalorder %s83, 1
      %p332 = por %p330, %p331
      %p333 = scmp.ne.s32.totalorder %s324, %s325
      %p334 = scmp.eq.s32.totalorder %s83, 0
      %p335 = por %p333, %p334
      %p336 = scmp.ne.s32.totalorder %s324, %s325
      %p337 = scmp.eq.s32.totalorder %s84, 1
      %p338 = por %p336, %p337
      %p340 = scmp.ne.s32.totalorder %s325, %s339
      %p341 = scmp.eq.s32.totalorder %s84, 0
      %p342 = por %p340, %p341
      %s344 = sadd.s32 %s343, 1
      %p347 = scmp.eq.s32.totalorder %s78, 1
      %p348 = scmp.ne.s32.totalorder %s343, %s345
      %p349 = scmp.eq.s32.totalorder %s78, 0
      %p350 = por %p348, %p349
      %p351 = scmp.ne.s32.totalorder %s343, %s345
      %p352 = scmp.eq.s32.totalorder %s83, 1
      %p353 = por %p351, %p352
      %p354 = scmp.ne.s32.totalorder %s345, %s346
      %p355 = scmp.eq.s32.totalorder %s83, 0
      %p356 = por %p354, %p355
      %p357 = scmp.ne.s32.totalorder %s345, %s346
      %p358 = scmp.eq.s32.totalorder %s84, 1
      %p359 = por %p357, %p358
      %p361 = scmp.ne.s32.totalorder %s346, %s360
      %p362 = scmp.eq.s32.totalorder %s84, 0
      %p363 = por %p361, %p362
      %s365 = sadd.s32 %s364, 1
      %p368 = scmp.eq.s32.totalorder %s78, 1
      %p369 = scmp.ne.s32.totalorder %s364, %s366
      %p370 = scmp.eq.s32.totalorder %s78, 0
      %p371 = por %p369, %p370
      %p372 = scmp.ne.s32.totalorder %s364, %s366
      %p373 = scmp.eq.s32.totalorder %s83, 1
      %p374 = por %p372, %p373
      %p375 = scmp.ne.s32.totalorder %s366, %s367
      %p376 = scmp.eq.s32.totalorder %s83, 0
      %p377 = por %p375, %p376
      %p378 = scmp.ne.s32.totalorder %s366, %s367
      %p379 = scmp.eq.s32.totalorder %s84, 1
      %p380 = por %p378, %p379
      %p382 = scmp.ne.s32.totalorder %s367, %s381
      %p383 = scmp.eq.s32.totalorder %s84, 0
      %p384 = por %p382, %p383
      %s386 = sadd.s32 %s385, 1
      %p389 = scmp.eq.s32.totalorder %s78, 1
      %p390 = scmp.ne.s32.totalorder %s385, %s387
      %p391 = scmp.eq.s32.totalorder %s78, 0
      %p392 = por %p390, %p391
      %p393 = scmp.ne.s32.totalorder %s385, %s387
      %p394 = scmp.eq.s32.totalorder %s83, 1
      %p395 = por %p393, %p394
      %p396 = scmp.ne.s32.totalorder %s387, %s388
      %p397 = scmp.eq.s32.totalorder %s83, 0
      %p398 = por %p396, %p397
      %p399 = scmp.ne.s32.totalorder %s387, %s388
      %p400 = scmp.eq.s32.totalorder %s84, 1
      %p401 = por %p399, %p400
      %p403 = scmp.ne.s32.totalorder %s388, %s402
      %p404 = scmp.eq.s32.totalorder %s84, 0
      %p405 = por %p403, %p404
      %s407 = sadd.s32 %s406, 1
      %p410 = scmp.eq.s32.totalorder %s78, 1
      %p411 = scmp.ne.s32.totalorder %s406, %s408
      %p412 = scmp.eq.s32.totalorder %s78, 0
      %p413 = por %p411, %p412
      %p414 = scmp.ne.s32.totalorder %s406, %s408
      %p415 = scmp.eq.s32.totalorder %s83, 1
      %p416 = por %p414, %p415
      %p417 = scmp.ne.s32.totalorder %s408, %s409
      %p418 = scmp.eq.s32.totalorder %s83, 0
      %p419 = por %p417, %p418
      %p420 = scmp.ne.s32.totalorder %s408, %s409
      %p421 = scmp.eq.s32.totalorder %s84, 1
      %p422 = por %p420, %p421
      %p424 = scmp.ne.s32.totalorder %s409, %s423
      %p425 = scmp.eq.s32.totalorder %s84, 0
      %p426 = por %p424, %p425
      %s428 = sadd.s32 %s427, 1
      %p431 = scmp.eq.s32.totalorder %s78, 1
      %p432 = scmp.ne.s32.totalorder %s427, %s429
      %p433 = scmp.eq.s32.totalorder %s78, 0
      %p434 = por %p432, %p433
      %p435 = scmp.ne.s32.totalorder %s427, %s429
      %p436 = scmp.eq.s32.totalorder %s83, 1
      %p437 = por %p435, %p436
      %p438 = scmp.ne.s32.totalorder %s429, %s430
      %p439 = scmp.eq.s32.totalorder %s83, 0
      %p440 = por %p438, %p439
      %p441 = scmp.ne.s32.totalorder %s429, %s430
      %p442 = scmp.eq.s32.totalorder %s84, 1
      %p443 = por %p441, %p442
      %p445 = scmp.ne.s32.totalorder %s430, %s444
      %p446 = scmp.eq.s32.totalorder %s84, 0
      %p447 = por %p445, %p446
      %s449 = sadd.s32 %s448, 1
      %p452 = scmp.eq.s32.totalorder %s78, 1
      %p453 = scmp.ne.s32.totalorder %s448, %s450
      %p454 = scmp.eq.s32.totalorder %s78, 0
      %p455 = por %p453, %p454
      %p456 = scmp.ne.s32.totalorder %s448, %s450
      %p457 = scmp.eq.s32.totalorder %s83, 1
      %p458 = por %p456, %p457
      %p459 = scmp.ne.s32.totalorder %s450, %s451
      %p460 = scmp.eq.s32.totalorder %s83, 0
      %p461 = por %p459, %p460
      %p462 = scmp.ne.s32.totalorder %s450, %s451
      %p463 = scmp.eq.s32.totalorder %s84, 1
      %p464 = por %p462, %p463
      %p466 = scmp.ne.s32.totalorder %s451, %s465
      %p467 = scmp.eq.s32.totalorder %s84, 0
      %p468 = por %p466, %p467
      %s470 = sadd.s32 %s469, 1
      %p473 = scmp.eq.s32.totalorder %s78, 1
      %p474 = scmp.ne.s32.totalorder %s469, %s471
      %p475 = scmp.eq.s32.totalorder %s78, 0
      %p476 = por %p474, %p475
      %p477 = scmp.ne.s32.totalorder %s469, %s471
      %p478 = scmp.eq.s32.totalorder %s83, 1
      %p479 = por %p477, %p478
      %p480 = scmp.ne.s32.totalorder %s471, %s472
      %p481 = scmp.eq.s32.totalorder %s83, 0
      %p482 = por %p480, %p481
      %p483 = scmp.ne.s32.totalorder %s471, %s472
      %p484 = scmp.eq.s32.totalorder %s84, 1
      %p485 = por %p483, %p484
      %p487 = scmp.ne.s32.totalorder %s472, %s486
      %p488 = scmp.eq.s32.totalorder %s84, 0
      %p489 = por %p487, %p488
      %s491 = sadd.s32 %s490, 1
      %p494 = scmp.eq.s32.totalorder %s78, 1
      %p495 = scmp.ne.s32.totalorder %s490, %s492
      %p496 = scmp.eq.s32.totalorder %s78, 0
      %p497 = por %p495, %p496
      %p498 = scmp.ne.s32.totalorder %s490, %s492
      %p499 = scmp.eq.s32.totalorder %s83, 1
      %p500 = por %p498, %p499
      %p501 = scmp.ne.s32.totalorder %s492, %s493
      %p502 = scmp.eq.s32.totalorder %s83, 0
      %p503 = por %p501, %p502
      %p504 = scmp.ne.s32.totalorder %s492, %s493
      %p505 = scmp.eq.s32.totalorder %s84, 1
      %p506 = por %p504, %p505
      %p508 = scmp.ne.s32.totalorder %s493, %s507
      %p509 = scmp.eq.s32.totalorder %s84, 0
      %p510 = por %p508, %p509
      %s512 = sadd.s32 %s511, 1
      %p515 = scmp.eq.s32.totalorder %s78, 1
      %p516 = scmp.ne.s32.totalorder %s511, %s513
      %p517 = scmp.eq.s32.totalorder %s78, 0
      %p518 = por %p516, %p517
      %p519 = scmp.ne.s32.totalorder %s511, %s513
      %p520 = scmp.eq.s32.totalorder %s83, 1
      %p521 = por %p519, %p520
      %p522 = scmp.ne.s32.totalorder %s513, %s514
      %p523 = scmp.eq.s32.totalorder %s83, 0
      %p524 = por %p522, %p523
      %p525 = scmp.ne.s32.totalorder %s513, %s514
      %p526 = scmp.eq.s32.totalorder %s84, 1
      %p527 = por %p525, %p526
      %p529 = scmp.ne.s32.totalorder %s514, %s528
      %p530 = scmp.eq.s32.totalorder %s84, 0
      %p531 = por %p529, %p530
      %s533 = sadd.s32 %s532, 1
      %p536 = scmp.eq.s32.totalorder %s78, 1
      %p537 = scmp.ne.s32.totalorder %s532, %s534
      %p538 = scmp.eq.s32.totalorder %s78, 0
      %p539 = por %p537, %p538
      %p540 = scmp.ne.s32.totalorder %s532, %s534
      %p541 = scmp.eq.s32.totalorder %s83, 1
      %p542 = por %p540, %p541
      %p543 = scmp.ne.s32.totalorder %s534, %s535
      %p544 = scmp.eq.s32.totalorder %s83, 0
      %p545 = por %p543, %p544
      %p546 = scmp.ne.s32.totalorder %s534, %s535
      %p547 = scmp.eq.s32.totalorder %s84, 1
      %p548 = por %p546, %p547
      %p550 = scmp.ne.s32.totalorder %s535, %s549
      %p551 = scmp.eq.s32.totalorder %s84, 0
      %p552 = por %p550, %p551
      %s554 = sadd.s32 %s553, 1
      %p557 = scmp.eq.s32.totalorder %s78, 1
      %p558 = scmp.ne.s32.totalorder %s553, %s555
      %p559 = scmp.eq.s32.totalorder %s78, 0
      %p560 = por %p558, %p559
      %p561 = scmp.ne.s32.totalorder %s553, %s555
      %p562 = scmp.eq.s32.totalorder %s83, 1
      %p563 = por %p561, %p562
      %p564 = scmp.ne.s32.totalorder %s555, %s556
      %p565 = scmp.eq.s32.totalorder %s83, 0
      %p566 = por %p564, %p565
      %p567 = scmp.ne.s32.totalorder %s555, %s556
      %p568 = scmp.eq.s32.totalorder %s84, 1
      %p569 = por %p567, %p568
      %p571 = scmp.ne.s32.totalorder %s556, %s570
      %p572 = scmp.eq.s32.totalorder %s84, 0
      %p573 = por %p571, %p572
      %s575 = sadd.s32 %s574, 1
      %p578 = scmp.eq.s32.totalorder %s78, 1
      %p579 = scmp.ne.s32.totalorder %s574, %s576
      %p580 = scmp.eq.s32.totalorder %s78, 0
      %p581 = por %p579, %p580
      %p582 = scmp.ne.s32.totalorder %s574, %s576
      %p583 = scmp.eq.s32.totalorder %s83, 1
      %p584 = por %p582, %p583
      %p585 = scmp.ne.s32.totalorder %s576, %s577
      %p586 = scmp.eq.s32.totalorder %s83, 0
      %p587 = por %p585, %p586
      %p588 = scmp.ne.s32.totalorder %s576, %s577
      %p589 = scmp.eq.s32.totalorder %s84, 1
      %p590 = por %p588, %p589
      %p592 = scmp.ne.s32.totalorder %s577, %s591
      %p593 = scmp.eq.s32.totalorder %s84, 0
      %p594 = por %p592, %p593
      %s596 = sadd.s32 %s595, 1
      %p599 = scmp.eq.s32.totalorder %s78, 1
      %p600 = scmp.ne.s32.totalorder %s595, %s597
      %p601 = scmp.eq.s32.totalorder %s78, 0
      %p602 = por %p600, %p601
      %p603 = scmp.ne.s32.totalorder %s595, %s597
      %p604 = scmp.eq.s32.totalorder %s83, 1
      %p605 = por %p603, %p604
      %p606 = scmp.ne.s32.totalorder %s597, %s598
      %p607 = scmp.eq.s32.totalorder %s83, 0
      %p608 = por %p606, %p607
      %p609 = scmp.ne.s32.totalorder %s597, %s598
      %p610 = scmp.eq.s32.totalorder %s84, 1
      %p611 = por %p609, %p610
      %p613 = scmp.ne.s32.totalorder %s598, %s612
      %p614 = scmp.eq.s32.totalorder %s84, 0
      %p615 = por %p613, %p614
      %s617 = sadd.s32 %s616, 1
      %p620 = scmp.eq.s32.totalorder %s78, 1
      %p621 = scmp.ne.s32.totalorder %s616, %s618
      %p622 = scmp.eq.s32.totalorder %s78, 0
      %p623 = por %p621, %p622
      %p624 = scmp.ne.s32.totalorder %s616, %s618
      %p625 = scmp.eq.s32.totalorder %s83, 1
      %p626 = por %p624, %p625
      %p627 = scmp.ne.s32.totalorder %s618, %s619
      %p628 = scmp.eq.s32.totalorder %s83, 0
      %p629 = por %p627, %p628
      %p630 = scmp.ne.s32.totalorder %s618, %s619
      %p631 = scmp.eq.s32.totalorder %s84, 1
      %p632 = por %p630, %p631
      %p634 = scmp.ne.s32.totalorder %s619, %s633
      %p635 = scmp.eq.s32.totalorder %s84, 0
      %p636 = por %p634, %p635
      %s638 = sadd.s32 %s637, 1
      %p641 = scmp.eq.s32.totalorder %s78, 1
      %p642 = scmp.ne.s32.totalorder %s637, %s639
      %p643 = scmp.eq.s32.totalorder %s78, 0
      %p644 = por %p642, %p643
      %p645 = scmp.ne.s32.totalorder %s637, %s639
      %p646 = scmp.eq.s32.totalorder %s83, 1
      %p647 = por %p645, %p646
      %p648 = scmp.ne.s32.totalorder %s639, %s640
      %p649 = scmp.eq.s32.totalorder %s83, 0
      %p650 = por %p648, %p649
      %p651 = scmp.ne.s32.totalorder %s639, %s640
      %p652 = scmp.eq.s32.totalorder %s84, 1
      %p653 = por %p651, %p652
      %p655 = scmp.ne.s32.totalorder %s640, %s654
      %p656 = scmp.eq.s32.totalorder %s84, 0
      %p657 = por %p655, %p656
      %s659 = sadd.s32 %s658, 1
      %p662 = scmp.eq.s32.totalorder %s78, 1
      %p663 = scmp.ne.s32.totalorder %s658, %s660
      %p664 = scmp.eq.s32.totalorder %s78, 0
      %p665 = por %p663, %p664
      %p666 = scmp.ne.s32.totalorder %s658, %s660
      %p667 = scmp.eq.s32.totalorder %s83, 1
      %p668 = por %p666, %p667
      %p669 = scmp.ne.s32.totalorder %s660, %s661
      %p670 = scmp.eq.s32.totalorder %s83, 0
      %p671 = por %p669, %p670
      %p672 = scmp.ne.s32.totalorder %s660, %s661
      %p673 = scmp.eq.s32.totalorder %s84, 1
      %p674 = por %p672, %p673
      %p676 = scmp.ne.s32.totalorder %s661, %s675
      %p677 = scmp.eq.s32.totalorder %s84, 0
      %p678 = por %p676, %p677
      %s680 = sadd.s32 %s679, 1
      %p683 = scmp.eq.s32.totalorder %s78, 1
      %p684 = scmp.ne.s32.totalorder %s679, %s681
      %p685 = scmp.eq.s32.totalorder %s78, 0
      %p686 = por %p684, %p685
      %p687 = scmp.ne.s32.totalorder %s679, %s681
      %p688 = scmp.eq.s32.totalorder %s83, 1
      %p689 = por %p687, %p688
      %p690 = scmp.ne.s32.totalorder %s681, %s682
      %p691 = scmp.eq.s32.totalorder %s83, 0
      %p692 = por %p690, %p691
      %p693 = scmp.ne.s32.totalorder %s681, %s682
      %p694 = scmp.eq.s32.totalorder %s84, 1
      %p695 = por %p693, %p694
      %p697 = scmp.ne.s32.totalorder %s682, %s696
      %p698 = scmp.eq.s32.totalorder %s84, 0
      %p699 = por %p697, %p698
      %s701 = sadd.s32 %s700, 1
      %p704 = scmp.eq.s32.totalorder %s78, 1
      %p705 = scmp.ne.s32.totalorder %s700, %s702
      %p706 = scmp.eq.s32.totalorder %s78, 0
      %p707 = por %p705, %p706
      %p708 = scmp.ne.s32.totalorder %s700, %s702
      %p709 = scmp.eq.s32.totalorder %s83, 1
      %p710 = por %p708, %p709
      %p711 = scmp.ne.s32.totalorder %s702, %s703
      %p712 = scmp.eq.s32.totalorder %s83, 0
      %p713 = por %p711, %p712
      %p714 = scmp.ne.s32.totalorder %s702, %s703
      %p715 = scmp.eq.s32.totalorder %s84, 1
      %p716 = por %p714, %p715
      %p718 = scmp.ne.s32.totalorder %s703, %s717
      %p719 = scmp.eq.s32.totalorder %s84, 0
      %p720 = por %p718, %p719
      %s721 = ssub.s32 %s78, %s85
      %p722 = scmp.eq.s32.totalorder %s721, 0
      %s724 = sadd.s32 %s723, 1
      %s725 = scalar_select %p722, %s723, %s724
      %p728 = pneg %p722
      %p729 = scmp.eq.s32.totalorder %s78, 1
      %p730 = por %p728, %p729
      %p731 = scmp.ne.s32.totalorder %s723, %s726
      %p732 = scmp.eq.s32.totalorder %s78, 0
      %p733 = por %p731, %p732
      %p734 = scmp.ne.s32.totalorder %s723, %s726
      %p735 = scmp.eq.s32.totalorder %s83, 1
      %p736 = por %p734, %p735
      %p737 = scmp.ne.s32.totalorder %s726, %s727
      %p738 = scmp.eq.s32.totalorder %s83, 0
      %p739 = por %p737, %p738
      %p740 = scmp.ne.s32.totalorder %s726, %s727
      %p741 = scmp.eq.s32.totalorder %s84, 1
      %p742 = por %p740, %p741
      %p744 = scmp.ne.s32.totalorder %s727, %s743
      %p745 = scmp.eq.s32.totalorder %s84, 0
      %p746 = por %p744, %p745
      %p747 = scmp.le.s32.totalorder 1, %s78
      %p748 = scmp.lt.s32.totalorder %s78, 3
      %p749 = pnand %p747, %p748
      %p750 = pneg %p749
      // Predicated region
      $region9: #{forward.1} parent=5 // pred_check
        _
      $region10: #{forward.1} parent=5 // pred_check_branch
        %752 = sbr.rel (%p749) target = $region12
      $region11: #{forward.1} parent=5 // pred_region
        %s753 = ssub.s32 %s78, 1
        // Predicated region
        $region13: #{forward.1} parent=11 // pred_check
          %p754 = pneg %p125
        $region14: #{forward.1} parent=11 // pred_check_branch
          %756 = sbr.rel (%p754) target = $region16
        $region15: #{forward.1} parent=11 // pred_region
          %s758 = ssub.s32 256, 256
          %759 = vsyncadd [#allocation3], %s758
          %s760 = sshll.u32 [#allocation2], 4
          %s761 = int_to_ptr.vmem [resolvable:$true] %s760
          %766 = dma.hbm_to_vmem [thread:$0]  %s3, 256, %s761, [#allocation3], 128, 128, 8
        $region16: #{forward.1} parent=11 // pred_fallthru
          _
        // Predicated region
        $region17: #{forward.1} parent=11 // pred_check
          %p767 = pneg %p146
        $region18: #{forward.1} parent=11 // pred_check_branch
          %769 = sbr.rel (%p767) target = $region20
        $region19: #{forward.1} parent=11 // pred_region
          %s771 = ssub.s32 16, 16
          %772 = vsyncadd [#allocation6], %s771
          %s774 = sshll.u32 [#allocation5], 4
          %s775 = int_to_ptr.vmem [resolvable:$true] %s774
          %777 = dma.hbm_to_vmem [thread:$0]  %s5, 16, %s775, [#allocation6]
        $region20: #{forward.1} parent=11 // pred_fallthru
          _
        // Predicated region
        $region21: #{forward.1} parent=11 // pred_check
          %p778 = pneg %p167
        $region22: #{forward.1} parent=11 // pred_check_branch
          %780 = sbr.rel (%p778) target = $region24
        $region23: #{forward.1} parent=11 // pred_region
          %s782 = ssub.s32 256, 256
          %783 = vsyncadd [#allocation6], %s782
          %s784 = sshll.u32 [#allocation7], 4
          %s785 = int_to_ptr.vmem [resolvable:$true] %s784
          %790 = dma.hbm_to_vmem [thread:$0]  %s7, 256, %s785, [#allocation6], 128, 128, 8
        $region24: #{forward.1} parent=11 // pred_fallthru
          _
        // Predicated region
        $region25: #{forward.1} parent=11 // pred_check
          %p791 = pneg %p188
        $region26: #{forward.1} parent=11 // pred_check_branch
          %793 = sbr.rel (%p791) target = $region28
        $region27: #{forward.1} parent=11 // pred_region
          %s795 = ssub.s32 64, 64
          %796 = vsyncadd [#allocation9], %s795
          %s798 = sshll.u32 [#allocation8], 4
          %s799 = int_to_ptr.vmem [resolvable:$true] %s798
          %801 = dma.hbm_to_vmem [thread:$0]  %s9, 64, %s799, [#allocation9]
        $region28: #{forward.1} parent=11 // pred_fallthru
          _
        // Predicated region
        $region29: #{forward.1} parent=11 // pred_check
          %p802 = pneg %p209
        $region30: #{forward.1} parent=11 // pred_check_branch
          %804 = sbr.rel (%p802) target = $region32
        $region31: #{forward.1} parent=11 // pred_region
          _
        $region32: #{forward.1} parent=11 // pred_fallthru
          _
        // Predicated region
        $region33: #{forward.1} parent=11 // pred_check
          %p805 = pneg %p230
        $region34: #{forward.1} parent=11 // pred_check_branch
          %807 = sbr.rel (%p805) target = $region36
        $region35: #{forward.1} parent=11 // pred_region
          %s809 = ssub.s32 1024, 1024
          %810 = vsyncadd [#allocation9], %s809
          %s811 = sshll.u32 [#allocation10], 4
          %s812 = int_to_ptr.vmem [resolvable:$true] %s811
          %817 = dma.hbm_to_vmem [thread:$0]  %s13, 1024, %s812, [#allocation9], 128, 128, 8
        $region36: #{forward.1} parent=11 // pred_fallthru
          _
        // Predicated region
        $region37: #{forward.1} parent=11 // pred_check
          %p818 = pneg %p251
        $region38: #{forward.1} parent=11 // pred_check_branch
          %820 = sbr.rel (%p818) target = $region40
        $region39: #{forward.1} parent=11 // pred_region
          %s822 = ssub.s32 1024, 1024
          %823 = vsyncadd [#allocation12], %s822
          %s824 = sshll.u32 [#allocation11], 4
          %s825 = int_to_ptr.vmem [resolvable:$true] %s824
          %830 = dma.hbm_to_vmem [thread:$0]  %s15, 1024, %s825, [#allocation12], 128, 128, 8
        $region40: #{forward.1} parent=11 // pred_fallthru
          _
        // Predicated region
        $region41: #{forward.1} parent=11 // pred_check
          %p831 = pneg %p272
        $region42: #{forward.1} parent=11 // pred_check_branch
          %833 = sbr.rel (%p831) target = $region44
        $region43: #{forward.1} parent=11 // pred_region
          %s835 = ssub.s32 1024, 1024
          %836 = vsyncadd [#allocation12], %s835
          %s837 = sshll.u32 [#allocation13], 4
          %s838 = int_to_ptr.vmem [resolvable:$true] %s837
          %843 = dma.hbm_to_vmem [thread:$0]  %s17, 1024, %s838, [#allocation12], 128, 128, 8
        $region44: #{forward.1} parent=11 // pred_fallthru
          _
        // Predicated region
        $region45: #{forward.1} parent=11 // pred_check
          %p844 = pneg %p293
        $region46: #{forward.1} parent=11 // pred_check_branch
          %846 = sbr.rel (%p844) target = $region48
        $region47: #{forward.1} parent=11 // pred_region
          %s848 = ssub.s32 1024, 1024
          %849 = vsyncadd [#allocation15], %s848
          %s850 = sshll.u32 [#allocation14], 4
          %s851 = int_to_ptr.vmem [resolvable:$true] %s850
          %856 = dma.hbm_to_vmem [thread:$0]  %s19, 1024, %s851, [#allocation15], 128, 128, 8
        $region48: #{forward.1} parent=11 // pred_fallthru
          _
        // Predicated region
        $region49: #{forward.1} parent=11 // pred_check
          %p857 = pneg %p314
        $region50: #{forward.1} parent=11 // pred_check_branch
          %859 = sbr.rel (%p857) target = $region52
        $region51: #{forward.1} parent=11 // pred_region
          _
        $region52: #{forward.1} parent=11 // pred_fallthru
          _
        // Predicated region
        $region53: #{forward.1} parent=11 // pred_check
          %p860 = pneg %p335
        $region54: #{forward.1} parent=11 // pred_check_branch
          %862 = sbr.rel (%p860) target = $region56
        $region55: #{forward.1} parent=11 // pred_region
          _
        $region56: #{forward.1} parent=11 // pred_fallthru
          _
        // Predicated region
        $region57: #{forward.1} parent=11 // pred_check
          %p863 = pneg %p356
        $region58: #{forward.1} parent=11 // pred_check_branch
          %865 = sbr.rel (%p863) target = $region60
        $region59: #{forward.1} parent=11 // pred_region
          _
        $region60: #{forward.1} parent=11 // pred_fallthru
          _
        // Predicated region
        $region61: #{forward.1} parent=11 // pred_check
          %p866 = pneg %p377
        $region62: #{forward.1} parent=11 // pred_check_branch
          %868 = sbr.rel (%p866) target = $region64
        $region63: #{forward.1} parent=11 // pred_region
          %s870 = ssub.s32 256, 256
          %871 = vsyncadd [#allocation15], %s870
          %s872 = sshll.u32 [#allocation16], 4
          %s873 = int_to_ptr.vmem [resolvable:$true] %s872
          %878 = dma.hbm_to_vmem [thread:$0]  %s27, 256, %s873, [#allocation15], 128, 128, 8
        $region64: #{forward.1} parent=11 // pred_fallthru
          _
        // Predicated region
        $region65: #{forward.1} parent=11 // pred_check
          %p879 = pneg %p398
        $region66: #{forward.1} parent=11 // pred_check_branch
          %881 = sbr.rel (%p879) target = $region68
        $region67: #{forward.1} parent=11 // pred_region
          %s883 = ssub.s32 16, 16
          %884 = vsyncadd [#allocation18], %s883
          %s886 = sshll.u32 [#allocation17], 4
          %s887 = int_to_ptr.vmem [resolvable:$true] %s886
          %889 = dma.hbm_to_vmem [thread:$0]  %s29, 16, %s887, [#allocation18]
        $region68: #{forward.1} parent=11 // pred_fallthru
          _
        // Predicated region
        $region69: #{forward.1} parent=11 // pred_check
          %p890 = pneg %p419
        $region70: #{forward.1} parent=11 // pred_check_branch
          %892 = sbr.rel (%p890) target = $region72
        $region71: #{forward.1} parent=11 // pred_region
          %s894 = ssub.s32 256, 256
          %895 = vsyncadd [#allocation18], %s894
          %s896 = sshll.u32 [#allocation19], 4
          %s897 = int_to_ptr.vmem [resolvable:$true] %s896
          %902 = dma.hbm_to_vmem [thread:$0]  %s31, 256, %s897, [#allocation18], 128, 128, 8
        $region72: #{forward.1} parent=11 // pred_fallthru
          _
        // Predicated region
        $region73: #{forward.1} parent=11 // pred_check
          %p903 = pneg %p440
        $region74: #{forward.1} parent=11 // pred_check_branch
          %905 = sbr.rel (%p903) target = $region76
        $region75: #{forward.1} parent=11 // pred_region
          %s907 = ssub.s32 16, 16
          %908 = vsyncadd [#allocation21], %s907
          %s910 = sshll.u32 [#allocation20], 4
          %s911 = int_to_ptr.vmem [resolvable:$true] %s910
          %913 = dma.hbm_to_vmem [thread:$0]  %s33, 16, %s911, [#allocation21]
        $region76: #{forward.1} parent=11 // pred_fallthru
          _
        // Predicated region
        $region77: #{forward.1} parent=11 // pred_check
          %p914 = pneg %p461
        $region78: #{forward.1} parent=11 // pred_check_branch
          %916 = sbr.rel (%p914) target = $region80
        $region79: #{forward.1} parent=11 // pred_region
          %s918 = ssub.s32 256, 256
          %919 = vsyncadd [#allocation21], %s918
          %s920 = sshll.u32 [#allocation22], 4
          %s921 = int_to_ptr.vmem [resolvable:$true] %s920
          %926 = dma.hbm_to_vmem [thread:$0]  %s35, 256, %s921, [#allocation21], 128, 128, 8
        $region80: #{forward.1} parent=11 // pred_fallthru
          _
        // Predicated region
        $region81: #{forward.1} parent=11 // pred_check
          %p927 = pneg %p482
        $region82: #{forward.1} parent=11 // pred_check_branch
          %929 = sbr.rel (%p927) target = $region84
        $region83: #{forward.1} parent=11 // pred_region
          _
        $region84: #{forward.1} parent=11 // pred_fallthru
          _
        // Predicated region
        $region85: #{forward.1} parent=11 // pred_check
          %p930 = pneg %p503
        $region86: #{forward.1} parent=11 // pred_check_branch
          %932 = sbr.rel (%p930) target = $region88
        $region87: #{forward.1} parent=11 // pred_region
          _
        $region88: #{forward.1} parent=11 // pred_fallthru
          _
        // Predicated region
        $region89: #{forward.1} parent=11 // pred_check
          %p933 = pneg %p524
        $region90: #{forward.1} parent=11 // pred_check_branch
          %935 = sbr.rel (%p933) target = $region92
        $region91: #{forward.1} parent=11 // pred_region
          _
        $region92: #{forward.1} parent=11 // pred_fallthru
          _
        // Predicated region
        $region93: #{forward.1} parent=11 // pred_check
          %p936 = pneg %p545
        $region94: #{forward.1} parent=11 // pred_check_branch
          %938 = sbr.rel (%p936) target = $region96
        $region95: #{forward.1} parent=11 // pred_region
          _
        $region96: #{forward.1} parent=11 // pred_fallthru
          _
        // Predicated region
        $region97: #{forward.1} parent=11 // pred_check
          %p939 = pneg %p566
        $region98: #{forward.1} parent=11 // pred_check_branch
          %941 = sbr.rel (%p939) target = $region100
        $region99: #{forward.1} parent=11 // pred_region
          _
        $region100: #{forward.1} parent=11 // pred_fallthru
          _
        // Predicated region
        $region101: #{forward.1} parent=11 // pred_check
          %p942 = pneg %p587
        $region102: #{forward.1} parent=11 // pred_check_branch
          %944 = sbr.rel (%p942) target = $region104
        $region103: #{forward.1} parent=11 // pred_region
          %s946 = ssub.s32 64, 64
          %947 = vsyncadd [#allocation24], %s946
          %s949 = sshll.u32 [#allocation23], 4
          %s950 = int_to_ptr.vmem [resolvable:$true] %s949
          %952 = dma.hbm_to_vmem [thread:$0]  %s47, 64, %s950, [#allocation24]
        $region104: #{forward.1} parent=11 // pred_fallthru
          _
        // Predicated region
        $region105: #{forward.1} parent=11 // pred_check
          %p953 = pneg %p608
        $region106: #{forward.1} parent=11 // pred_check_branch
          %955 = sbr.rel (%p953) target = $region108
        $region107: #{forward.1} parent=11 // pred_region
          _
        $region108: #{forward.1} parent=11 // pred_fallthru
          _
        // Predicated region
        $region109: #{forward.1} parent=11 // pred_check
          %p956 = pneg %p629
        $region110: #{forward.1} parent=11 // pred_check_branch
          %958 = sbr.rel (%p956) target = $region112
        $region111: #{forward.1} parent=11 // pred_region
          _
        $region112: #{forward.1} parent=11 // pred_fallthru
          _
        // Predicated region
        $region113: #{forward.1} parent=11 // pred_check
          %p959 = pneg %p650
        $region114: #{forward.1} parent=11 // pred_check_branch
          %961 = sbr.rel (%p959) target = $region116
        $region115: #{forward.1} parent=11 // pred_region
          _
        $region116: #{forward.1} parent=11 // pred_fallthru
          _
        // Predicated region
        $region117: #{forward.1} parent=11 // pred_check
          %p962 = pneg %p671
        $region118: #{forward.1} parent=11 // pred_check_branch
          %964 = sbr.rel (%p962) target = $region120
        $region119: #{forward.1} parent=11 // pred_region
          _
        $region120: #{forward.1} parent=11 // pred_fallthru
          _
        // Predicated region
        $region121: #{forward.1} parent=11 // pred_check
          %p965 = pneg %p692
        $region122: #{forward.1} parent=11 // pred_check_branch
          %967 = sbr.rel (%p965) target = $region124
        $region123: #{forward.1} parent=11 // pred_region
          _
        $region124: #{forward.1} parent=11 // pred_fallthru
          _
        // Predicated region
        $region125: #{forward.1} parent=11 // pred_check
          %p968 = pneg %p713
        $region126: #{forward.1} parent=11 // pred_check_branch
          %970 = sbr.rel (%p968) target = $region128
        $region127: #{forward.1} parent=11 // pred_region
          _
        $region128: #{forward.1} parent=11 // pred_fallthru
          _
      $region12: #{forward.1} parent=5 // pred_fallthru
        _
      %p971 = scmp.lt.s32.totalorder %s78, 2
      // Predicated region
      $region129: #{forward.1} parent=5 // pred_check
        %p972 = pneg %p971
      $region130: #{forward.1} parent=5 // pred_check_branch
        %974 = sbr.rel (%p972) target = $region132
      $region131: #{forward.1} parent=5 // pred_region
        // Predicated region
        $region133: #{forward.1} parent=131 // pred_check
          %p975 = pneg %p98
        $region134: #{forward.1} parent=131 // pred_check_branch
          %977 = sbr.rel (%p975) target = $region136
        $region135: #{forward.1} parent=131 // pred_region
          %p978 = scmp.lt.s32.totalorder %s78, 1
          %s979 = scalar_select %p978, %s78, 1
          %s980 = smul.addr %s979, 8
          %s981 = smul.addr %s980, 8
          %s982 = scalar_lea.vmem %s1, %s981
        $region136: #{forward.1} parent=131 // pred_fallthru
          _
      $region132: #{forward.1} parent=5 // pred_fallthru
        _
      %p983 = scmp.le.s32.totalorder 1, %s78
      %p984 = scmp.lt.s32.totalorder %s78, 3
      %p985 = pnand %p983, %p984
      %p986 = pneg %p985
      // Predicated region
      $region137: #{forward.1} parent=5 // pred_check
        _
      $region138: #{forward.1} parent=5 // pred_check_branch
        %988 = sbr.rel (%p985) target = $region140
      $region139: #{forward.1} parent=5 // pred_region
        %s989 = ssub.s32 %s78, 1
        // Predicated region
        $region141: #{forward.1} parent=139 // pred_check
          %p990 = pneg %p125
        $region142: #{forward.1} parent=139 // pred_check_branch
          %992 = sbr.rel (%p990) target = $region144
        $region143: #{forward.1} parent=139 // pred_region
          %993 = dma.done [#allocation3], 256
        $region144: #{forward.1} parent=139 // pred_fallthru
          _
        // Predicated region
        $region145: #{forward.1} parent=139 // pred_check
          %p994 = pneg %p146
        $region146: #{forward.1} parent=139 // pred_check_branch
          %996 = sbr.rel (%p994) target = $region148
        $region147: #{forward.1} parent=139 // pred_region
          %997 = dma.done [#allocation6], 16
        $region148: #{forward.1} parent=139 // pred_fallthru
          _
        // Predicated region
        $region149: #{forward.1} parent=139 // pred_check
          %p998 = pneg %p167
        $region150: #{forward.1} parent=139 // pred_check_branch
          %1000 = sbr.rel (%p998) target = $region152
        $region151: #{forward.1} parent=139 // pred_region
          %1001 = dma.done [#allocation6], 256
        $region152: #{forward.1} parent=139 // pred_fallthru
          _
        // Predicated region
        $region153: #{forward.1} parent=139 // pred_check
          %p1002 = pneg %p188
        $region154: #{forward.1} parent=139 // pred_check_branch
          %1004 = sbr.rel (%p1002) target = $region156
        $region155: #{forward.1} parent=139 // pred_region
          %1005 = dma.done [#allocation9], 64
        $region156: #{forward.1} parent=139 // pred_fallthru
          _
        // Predicated region
        $region157: #{forward.1} parent=139 // pred_check
          %p1006 = pneg %p230
        $region158: #{forward.1} parent=139 // pred_check_branch
          %1008 = sbr.rel (%p1006) target = $region160
        $region159: #{forward.1} parent=139 // pred_region
          %1009 = dma.done [#allocation9], 1024
        $region160: #{forward.1} parent=139 // pred_fallthru
          _
        // Predicated region
        $region161: #{forward.1} parent=139 // pred_check
          %p1010 = pneg %p251
        $region162: #{forward.1} parent=139 // pred_check_branch
          %1012 = sbr.rel (%p1010) target = $region164
        $region163: #{forward.1} parent=139 // pred_region
          %1013 = dma.done [#allocation12], 1024
        $region164: #{forward.1} parent=139 // pred_fallthru
          _
        // Predicated region
        $region165: #{forward.1} parent=139 // pred_check
          %p1014 = pneg %p272
        $region166: #{forward.1} parent=139 // pred_check_branch
          %1016 = sbr.rel (%p1014) target = $region168
        $region167: #{forward.1} parent=139 // pred_region
          %1017 = dma.done [#allocation12], 1024
        $region168: #{forward.1} parent=139 // pred_fallthru
          _
        // Predicated region
        $region169: #{forward.1} parent=139 // pred_check
          %p1018 = pneg %p293
        $region170: #{forward.1} parent=139 // pred_check_branch
          %1020 = sbr.rel (%p1018) target = $region172
        $region171: #{forward.1} parent=139 // pred_region
          %1021 = dma.done [#allocation15], 1024
        $region172: #{forward.1} parent=139 // pred_fallthru
          _
        // Predicated region
        $region173: #{forward.1} parent=139 // pred_check
          %p1022 = pneg %p377
        $region174: #{forward.1} parent=139 // pred_check_branch
          %1024 = sbr.rel (%p1022) target = $region176
        $region175: #{forward.1} parent=139 // pred_region
          %1025 = dma.done [#allocation15], 256
        $region176: #{forward.1} parent=139 // pred_fallthru
          _
        // Predicated region
        $region177: #{forward.1} parent=139 // pred_check
          %p1026 = pneg %p398
        $region178: #{forward.1} parent=139 // pred_check_branch
          %1028 = sbr.rel (%p1026) target = $region180
        $region179: #{forward.1} parent=139 // pred_region
          %1029 = dma.done [#allocation18], 16
        $region180: #{forward.1} parent=139 // pred_fallthru
          _
        // Predicated region
        $region181: #{forward.1} parent=139 // pred_check
          %p1030 = pneg %p419
        $region182: #{forward.1} parent=139 // pred_check_branch
          %1032 = sbr.rel (%p1030) target = $region184
        $region183: #{forward.1} parent=139 // pred_region
          %1033 = dma.done [#allocation18], 256
        $region184: #{forward.1} parent=139 // pred_fallthru
          _
        // Predicated region
        $region185: #{forward.1} parent=139 // pred_check
          %p1034 = pneg %p440
        $region186: #{forward.1} parent=139 // pred_check_branch
          %1036 = sbr.rel (%p1034) target = $region188
        $region187: #{forward.1} parent=139 // pred_region
          %1037 = dma.done [#allocation21], 16
        $region188: #{forward.1} parent=139 // pred_fallthru
          _
        // Predicated region
        $region189: #{forward.1} parent=139 // pred_check
          %p1038 = pneg %p461
        $region190: #{forward.1} parent=139 // pred_check_branch
          %1040 = sbr.rel (%p1038) target = $region192
        $region191: #{forward.1} parent=139 // pred_region
          %1041 = dma.done [#allocation21], 256
        $region192: #{forward.1} parent=139 // pred_fallthru
          _
        // Predicated region
        $region193: #{forward.1} parent=139 // pred_check
          %p1042 = pneg %p587
        $region194: #{forward.1} parent=139 // pred_check_branch
          %1044 = sbr.rel (%p1042) target = $region196
        $region195: #{forward.1} parent=139 // pred_region
          %1045 = dma.done [#allocation24], 64
        $region196: #{forward.1} parent=139 // pred_fallthru
          _
        %p1046 = scmp.lt.s32.totalorder %s83, 1
        %s1047 = scalar_select %p1046, %s83, 1
        %s1048 = smul.addr %s1047, 8
        %s1049 = smul.addr %s1048, 8
        %s1050 = scalar_lea.vmem %s1, %s1049
        %p1051 = pneg %p104
        %p1052 = pneg %p101
        %p1053 = pneg %p125
        %p1054 = pneg %p122
        %p1055 = pneg %p146
        %p1056 = pneg %p143
        %p1057 = pneg %p167
        %p1058 = pneg %p164
        %p1059 = pneg %p188
        %p1060 = pneg %p185
        %p1061 = pneg %p209
        %p1062 = pneg %p206
        %p1063 = pneg %p230
        %p1064 = pneg %p227
        %p1065 = pneg %p251
        %p1066 = pneg %p248
        %p1067 = pneg %p272
        %p1068 = pneg %p269
        %p1069 = pneg %p293
        %p1070 = pneg %p290
        %p1071 = pneg %p314
        %p1072 = pneg %p311
        %p1073 = pneg %p335
        %p1074 = pneg %p332
        %p1075 = pneg %p356
        %p1076 = pneg %p353
        %p1077 = pneg %p377
        %p1078 = pneg %p374
        %p1079 = pneg %p398
        %p1080 = pneg %p395
        %p1081 = pneg %p419
        %p1082 = pneg %p416
        %p1083 = pneg %p440
        %p1084 = pneg %p437
        %p1085 = pneg %p461
        %p1086 = pneg %p458
        %p1087 = pneg %p482
        %p1088 = pneg %p479
        %p1089 = pneg %p503
        %p1090 = pneg %p500
        %p1091 = pneg %p524
        %p1092 = pneg %p521
        %p1093 = pneg %p545
        %p1094 = pneg %p542
        %p1095 = pneg %p566
        %p1096 = pneg %p563
        %p1097 = pneg %p587
        %p1098 = pneg %p584
        %p1099 = pneg %p608
        %p1100 = pneg %p605
        %p1101 = pneg %p629
        %p1102 = pneg %p626
        %p1103 = pneg %p650
        %p1104 = pneg %p647
        %p1105 = pneg %p671
        %p1106 = pneg %p668
        %p1107 = pneg %p692
        %p1108 = pneg %p689
        %p1109 = pneg %p713
        %p1110 = pneg %p710
        %p1111 = pneg %p739
        %p1112 = pneg %p736
        %s1113 = sand.u32 %s726, 1
        %s1114 = scalar_lea.sflag [#allocation4], %s1113
        %s1115 = sand.u32 %s726, 1
        %s1116 = smul.addr %s1115, 64
        %s1117 = scalar_lea.vmem [#allocation25], %s1116
        %p1118 = scmp.lt.s32.totalorder %s83, 1
        %s1119 = scalar_select %p1118, %s83, 1
        %s1120 = smul.addr %s1119, 8
        %s1121 = smul.addr %s1120, 8
        %s1122 = scalar_lea.vmem %s1, %s1121
        %v1123 = vld [vmem:[%s1122] sm:$0xff]
        %v1124 = vld [vmem:[%s1122 + $0x8] sm:$0xff]
        %v1125 = vld [vmem:[%s1122 + $0x10] sm:$0xff]
        %v1126 = vld [vmem:[%s1122 + $0x18] sm:$0xff]
        %v1127 = vld [vmem:[%s1122 + $0x20] sm:$0xff]
        %v1128 = vld [vmem:[%s1122 + $0x28] sm:$0xff]
        %v1129 = vld [vmem:[%s1122 + $0x30] sm:$0xff]
        %v1130 = vld [vmem:[%s1122 + $0x38] sm:$0xff]
        %v1131 = vld [vmem:[#allocation2] sm:$0xff]
        %v1132 = vld [vmem:[#allocation2 + $0x8] sm:$0xff]
        %v1133 = vld [vmem:[#allocation5] sm:$0x1]
        %v1135 = vlaneseq
        %v1136 = vshrl.u32 %v1135, 7
        %v1137 = vsub.s32 0, %v1136
        %v1138 = vrot.slane %v1133, %v1137
        %vm1140 = vcmask 130048
        %v1142 = vsel %vm1140, %v1123, 0
        %v1145 = vsel %vm1140, %v1124, 0
        %v1148 = vsel %vm1140, %v1125, 0
        %v1151 = vsel %vm1140, %v1126, 0
        %v1154 = vsel %vm1140, %v1127, 0
        %v1157 = vsel %vm1140, %v1128, 0
        %v1160 = vsel %vm1140, %v1129, 0
        %v1163 = vsel %vm1140, %v1130, 0
        %1165 = vmatprep.subr.mxu0 0.0
        %1166 = vmatpush1.msra.mxu0 %v1131
        %1167 = vmatprep.subr.mxu0 0.0
        %1168 = vmatpush1.msra.mxu0 %v1132
        %1169 = vmatprep.subr.mxu0 0.0
        %1170 = vmatpush1.msra.mxu0 0.0
        %1171 = vmatprep.subr.mxu0 0.0
        %1172 = vmatpush1.msra.mxu0 0.0
        %1173 = vmatprep.subr.mxu0 0.0
        %1174 = vmatpush1.msra.mxu0 0.0
        %1175 = vmatprep.subr.mxu0 0.0
        %1176 = vmatpush1.msra.mxu0 0.0
        %1177 = vmatprep.subr.mxu0 0.0
        %1178 = vmatpush1.msra.mxu0 0.0
        %1179 = vmatprep.subr.mxu0 0.0
        %1180 = vmatpush1.msra.mxu0 0.0
        %1181 = vmatprep.subr.mxu0 0.0
        %1182 = vmatpush1.msra.mxu0 0.0
        %1183 = vmatprep.subr.mxu0 0.0
        %1184 = vmatpush1.msra.mxu0 0.0
        %1185 = vmatprep.subr.mxu0 0.0
        %1186 = vmatpush1.msra.mxu0 0.0
        %1187 = vmatprep.subr.mxu0 0.0
        %1188 = vmatpush1.msra.mxu0 0.0
        %1189 = vmatprep.subr.mxu0 0.0
        %1190 = vmatpush1.msra.mxu0 0.0
        %1191 = vmatprep.subr.mxu0 0.0
        %1192 = vmatpush1.msra.mxu0 0.0
        %1193 = vmatprep.subr.mxu0 0.0
        %1194 = vmatpush1.msra.mxu0 0.0
        %1195 = vmatprep.subr.mxu0 0.0
        %1196 = vmatpush1.msra.mxu0 0.0
        %1197 = vmatprep.subr.mxu0 0.0
        %1198 = vmatpush1.msra.mxu0 0.0
        %1199 = vmatprep.subr.mxu0 0.0
        %1200 = vmatpush1.msra.mxu0 0.0
        %1201 = vmatprep.subr.mxu0 0.0
        %1202 = vmatpush1.msra.mxu0 0.0
        %1203 = vmatprep.subr.mxu0 0.0
        %1204 = vmatpush1.msra.mxu0 0.0
        %1205 = vmatprep.subr.mxu0 0.0
        %1206 = vmatpush1.msra.mxu0 0.0
        %1207 = vmatprep.subr.mxu0 0.0
        %1208 = vmatpush1.msra.mxu0 0.0
        %1209 = vmatprep.subr.mxu0 0.0
        %1210 = vmatpush1.msra.mxu0 0.0
        %1211 = vmatprep.subr.mxu0 0.0
        %1212 = vmatpush1.msra.mxu0 0.0
        %1213 = vmatprep.subr.mxu0 0.0
        %1214 = vmatpush1.msra.mxu0 0.0
        %1215 = vmatprep.subr.mxu0 0.0
        %1216 = vmatpush1.msra.mxu0 0.0
        %1217 = vmatprep.subr.mxu0 0.0
        %1218 = vmatpush1.msra.mxu0 0.0
        %1219 = vmatprep.subr.mxu0 0.0
        %1220 = vmatpush1.msra.mxu0 0.0
        %1221 = vmatprep.subr.mxu0 0.0
        %1222 = vmatpush1.msra.mxu0 0.0
        %1223 = vmatprep.subr.mxu0 0.0
        %1224 = vmatpush1.msra.mxu0 0.0
        %1225 = vmatprep.subr.mxu0 0.0
        %1226 = vmatpush1.msra.mxu0 0.0
        %1227 = vmatprep.subr.mxu0 0.0
        %1228 = vmatpush1.msra.mxu0 0.0
        %1229 = vmatprep.mubr.f32.mxu0 0.0
        %1230 = vmatmul.mubr.f32.gmra.mrb[0].mxu0 %v1142
        %v1231 = vpop.f32.mrb[0].mxu0
        %v1232 = vadd.f32 %v1138, %v1231
        %v1233 = vpop.f32.mrb[0].mxu0
        %1234 = vmatprep.mubr.f32.mxu0 0.0
        %1235 = vmatmul.mubr.f32.gmra.mrb[0].mxu0 %v1145
        %v1236 = vpop.f32.mrb[0].mxu0
        %v1237 = vadd.f32 %v1138, %v1236
        %v1238 = vpop.f32.mrb[0].mxu0
        %1239 = vmatprep.mubr.f32.mxu0 0.0
        %1240 = vmatmul.mubr.f32.gmra.mrb[0].mxu0 %v1148
        %v1241 = vpop.f32.mrb[0].mxu0
        %v1242 = vadd.f32 %v1138, %v1241
        %v1243 = vpop.f32.mrb[0].mxu0
        %1244 = vmatprep.mubr.f32.mxu0 0.0
        %1245 = vmatmul.mubr.f32.gmra.mrb[0].mxu0 %v1151
        %v1246 = vpop.f32.mrb[0].mxu0
        %v1247 = vadd.f32 %v1138, %v1246
        %v1248 = vpop.f32.mrb[0].mxu0
        %1249 = vmatprep.mubr.f32.mxu0 0.0
        %1250 = vmatmul.mubr.f32.gmra.mrb[0].mxu0 %v1154
        %v1251 = vpop.f32.mrb[0].mxu0
        %v1252 = vadd.f32 %v1138, %v1251
        %v1253 = vpop.f32.mrb[0].mxu0
        %1254 = vmatprep.mubr.f32.mxu0 0.0
        %1255 = vmatmul.mubr.f32.gmra.mrb[0].mxu0 %v1157
        %v1256 = vpop.f32.mrb[0].mxu0
        %v1257 = vadd.f32 %v1138, %v1256
        %v1258 = vpop.f32.mrb[0].mxu0
        %1259 = vmatprep.mubr.f32.mxu0 0.0
        %1260 = vmatmul.mubr.f32.gmra.mrb[0].mxu0 %v1160
        %v1261 = vpop.f32.mrb[0].mxu0
        %v1262 = vadd.f32 %v1138, %v1261
        %v1263 = vpop.f32.mrb[0].mxu0
        %1264 = vmatprep.mubr.f32.mxu0 0.0
        %1265 = vmatmul.mubr.f32.gmra.mrb[0].mxu0 %v1163
        %v1266 = vpop.f32.mrb[0].mxu0
        %v1267 = vadd.f32 %v1138, %v1266
        %v1268 = vpop.f32.mrb[0].mxu0
        %1269 = vdwg.mxu0
        %v1270 = vld [vmem:[#allocation7] sm:$0xff]
        %v1271 = vld [vmem:[#allocation7 + $0x8] sm:$0xff]
        %v1273 = vsel %vm1140, %v1232, 0
        %v1276 = vsel %vm1140, %v1237, 0
        %v1279 = vsel %vm1140, %v1242, 0
        %v1282 = vsel %vm1140, %v1247, 0
        %v1285 = vsel %vm1140, %v1252, 0
        %v1288 = vsel %vm1140, %v1257, 0
        %v1291 = vsel %vm1140, %v1262, 0
        %v1294 = vsel %vm1140, %v1267, 0
        %1296 = vmatprep.subr.mxu0 0.0
        %1297 = vmatpush1.msra.mxu0 %v1270
        %1298 = vmatprep.subr.mxu0 0.0
        %1299 = vmatpush1.msra.mxu0 %v1271
        %1300 = vmatprep.subr.mxu0 0.0
        %1301 = vmatpush1.msra.mxu0 0.0
        %1302 = vmatprep.subr.mxu0 0.0
        %1303 = vmatpush1.msra.mxu0 0.0
        %1304 = vmatprep.subr.mxu0 0.0
        %1305 = vmatpush1.msra.mxu0 0.0
        %1306 = vmatprep.subr.mxu0 0.0
        %1307 = vmatpush1.msra.mxu0 0.0
        %1308 = vmatprep.subr.mxu0 0.0
        %1309 = vmatpush1.msra.mxu0 0.0
        %1310 = vmatprep.subr.mxu0 0.0
        %1311 = vmatpush1.msra.mxu0 0.0
        %1312 = vmatprep.subr.mxu0 0.0
        %1313 = vmatpush1.msra.mxu0 0.0
        %1314 = vmatprep.subr.mxu0 0.0
        %1315 = vmatpush1.msra.mxu0 0.0
        %1316 = vmatprep.subr.mxu0 0.0
        %1317 = vmatpush1.msra.mxu0 0.0
        %1318 = vmatprep.subr.mxu0 0.0
        %1319 = vmatpush1.msra.mxu0 0.0
        %1320 = vmatprep.subr.mxu0 0.0
        %1321 = vmatpush1.msra.mxu0 0.0
        %1322 = vmatprep.subr.mxu0 0.0
        %1323 = vmatpush1.msra.mxu0 0.0
        %1324 = vmatprep.subr.mxu0 0.0
        %1325 = vmatpush1.msra.mxu0 0.0
        %1326 = vmatprep.subr.mxu0 0.0
        %1327 = vmatpush1.msra.mxu0 0.0
        %1328 = vmatprep.subr.mxu0 0.0
        %1329 = vmatpush1.msra.mxu0 0.0
        %1330 = vmatprep.subr.mxu0 0.0
        %1331 = vmatpush1.msra.mxu0 0.0
        %1332 = vmatprep.subr.mxu0 0.0
        %1333 = vmatpush1.msra.mxu0 0.0
        %1334 = vmatprep.subr.mxu0 0.0
        %1335 = vmatpush1.msra.mxu0 0.0
        %1336 = vmatprep.subr.mxu0 0.0
        %1337 = vmatpush1.msra.mxu0 0.0
        %1338 = vmatprep.subr.mxu0 0.0
        %1339 = vmatpush1.msra.mxu0 0.0
        %1340 = vmatprep.subr.mxu0 0.0
        %1341 = vmatpush1.msra.mxu0 0.0
        %1342 = vmatprep.subr.mxu0 0.0
        %1343 = vmatpush1.msra.mxu0 0.0
        %1344 = vmatprep.subr.mxu0 0.0
        %1345 = vmatpush1.msra.mxu0 0.0
        %1346 = vmatprep.subr.mxu0 0.0
        %1347 = vmatpush1.msra.mxu0 0.0
        %1348 = vmatprep.subr.mxu0 0.0
        %1349 = vmatpush1.msra.mxu0 0.0
        %1350 = vmatprep.subr.mxu0 0.0
        %1351 = vmatpush1.msra.mxu0 0.0
        %1352 = vmatprep.subr.mxu0 0.0
        %1353 = vmatpush1.msra.mxu0 0.0
        %1354 = vmatprep.subr.mxu0 0.0
        %1355 = vmatpush1.msra.mxu0 0.0
        %1356 = vmatprep.subr.mxu0 0.0
        %1357 = vmatpush1.msra.mxu0 0.0
        %1358 = vmatprep.subr.mxu0 0.0
        %1359 = vmatpush1.msra.mxu0 0.0
        %1360 = vmatprep.mubr.f32.mxu0 0.0
        %1361 = vmatmul.mubr.f32.gmra.mrb[0].mxu0 %v1273
        %v1362 = vpop.f32.mrb[0].mxu0
        %v1363 = vadd.f32 0.0, %v1362
        %v1364 = vpop.f32.mrb[0].mxu0
        %1365 = vmatprep.mubr.f32.mxu0 0.0
        %1366 = vmatmul.mubr.f32.gmra.mrb[0].mxu0 %v1276
        %v1367 = vpop.f32.mrb[0].mxu0
        %v1368 = vadd.f32 0.0, %v1367
        %v1369 = vpop.f32.mrb[0].mxu0
        %1370 = vmatprep.mubr.f32.mxu0 0.0
        %1371 = vmatmul.mubr.f32.gmra.mrb[0].mxu0 %v1279
        %v1372 = vpop.f32.mrb[0].mxu0
        %v1373 = vadd.f32 0.0, %v1372
        %v1374 = vpop.f32.mrb[0].mxu0
        %1375 = vmatprep.mubr.f32.mxu0 0.0
        %1376 = vmatmul.mubr.f32.gmra.mrb[0].mxu0 %v1282
        %v1377 = vpop.f32.mrb[0].mxu0
        %v1378 = vadd.f32 0.0, %v1377
        %v1379 = vpop.f32.mrb[0].mxu0
        %1380 = vmatprep.mubr.f32.mxu0 0.0
        %1381 = vmatmul.mubr.f32.gmra.mrb[0].mxu0 %v1285
        %v1382 = vpop.f32.mrb[0].mxu0
        %v1383 = vadd.f32 0.0, %v1382
        %v1384 = vpop.f32.mrb[0].mxu0
        %1385 = vmatprep.mubr.f32.mxu0 0.0
        %1386 = vmatmul.mubr.f32.gmra.mrb[0].mxu0 %v1288
        %v1387 = vpop.f32.mrb[0].mxu0
        %v1388 = vadd.f32 0.0, %v1387
        %v1389 = vpop.f32.mrb[0].mxu0
        %1390 = vmatprep.mubr.f32.mxu0 0.0
        %1391 = vmatmul.mubr.f32.gmra.mrb[0].mxu0 %v1291
        %v1392 = vpop.f32.mrb[0].mxu0
        %v1393 = vadd.f32 0.0, %v1392
        %v1394 = vpop.f32.mrb[0].mxu0
        %1395 = vmatprep.mubr.f32.mxu0 0.0
        %1396 = vmatmul.mubr.f32.gmra.mrb[0].mxu0 %v1294
        %v1397 = vpop.f32.mrb[0].mxu0
        %v1398 = vadd.f32 0.0, %v1397
        %v1399 = vpop.f32.mrb[0].mxu0
        %1400 = vdwg.mxu0
        %v1401 = vld [vmem:[#allocation8] sm:$0xf]
        %v1402 = vld [vmem:[#allocation10] sm:$0xff]
        %v1403 = vld [vmem:[#allocation10 + $0x8] sm:$0xff]
        %v1404 = vld [vmem:[#allocation10 + $0x10] sm:$0xff]
        %v1405 = vld [vmem:[#allocation10 + $0x18] sm:$0xff]
        %v1406 = vld [vmem:[#allocation10 + $0x20] sm:$0xff]
        %v1407 = vld [vmem:[#allocation10 + $0x28] sm:$0xff]
        %v1408 = vld [vmem:[#allocation10 + $0x30] sm:$0xff]
        %v1409 = vld [vmem:[#allocation10 + $0x38] sm:$0xff]
        %1418 = vrot.lane.b32.xlu0 %v1363, 124
        %v1419 = vpop.permute.xlu0 %1418
        %1420 = vrot.lane.b32.xlu0 %v1368, 124
        %v1421 = vpop.permute.xlu0 %1420
        %1422 = vrot.lane.b32.xlu0 %v1373, 124
        %v1423 = vpop.permute.xlu0 %1422
        %1424 = vrot.lane.b32.xlu0 %v1378, 124
        %v1425 = vpop.permute.xlu0 %1424
        %1426 = vrot.lane.b32.xlu0 %v1383, 124
        %v1427 = vpop.permute.xlu0 %1426
        %1428 = vrot.lane.b32.xlu0 %v1388, 124
        %v1429 = vpop.permute.xlu0 %1428
        %1430 = vrot.lane.b32.xlu0 %v1393, 124
        %v1431 = vpop.permute.xlu0 %1430
        %1432 = vrot.lane.b32.xlu0 %v1398, 124
        %v1433 = vpop.permute.xlu0 %1432
        %vm1434 = vcmask 31744
        %v1435 = vsel %vm1434, %v1419, 0
        %v1437 = vsel %vm1434, %v1421, 0
        %v1439 = vsel %vm1434, %v1423, 0
        %v1441 = vsel %vm1434, %v1425, 0
        %v1443 = vsel %vm1434, %v1427, 0
        %v1445 = vsel %vm1434, %v1429, 0
        %v1447 = vsel %vm1434, %v1431, 0
        %v1449 = vsel %vm1434, %v1433, 0
        %vm1451 = vcmask 1043456
        %v1453 = vsel %vm1451, %v1401, 0
        %1455 = vmatprep.subr.mxu0 0.0
        %1456 = vmatpush1.msra.mxu0 %v1453
        %1457 = vmatprep.subr.mxu0 0.0
        %1458 = vmatpush1.msra.mxu0 0.0
        %1459 = vmatprep.subr.mxu0 0.0
        %1460 = vmatpush1.msra.mxu0 0.0
        %1461 = vmatprep.subr.mxu0 0.0
        %1462 = vmatpush1.msra.mxu0 0.0
        %1463 = vmatprep.subr.mxu0 0.0
        %1464 = vmatpush1.msra.mxu0 0.0
        %1465 = vmatprep.subr.mxu0 0.0
        %1466 = vmatpush1.msra.mxu0 0.0
        %1467 = vmatprep.subr.mxu0 0.0
        %1468 = vmatpush1.msra.mxu0 0.0
        %1469 = vmatprep.subr.mxu0 0.0
        %1470 = vmatpush1.msra.mxu0 0.0
        %1471 = vmatprep.subr.mxu0 0.0
        %1472 = vmatpush1.msra.mxu0 0.0
        %1473 = vmatprep.subr.mxu0 0.0
        %1474 = vmatpush1.msra.mxu0 0.0
        %1475 = vmatprep.subr.mxu0 0.0
        %1476 = vmatpush1.msra.mxu0 0.0
        %1477 = vmatprep.subr.mxu0 0.0
        %1478 = vmatpush1.msra.mxu0 0.0
        %1479 = vmatprep.subr.mxu0 0.0
        %1480 = vmatpush1.msra.mxu0 0.0
        %1481 = vmatprep.subr.mxu0 0.0
        %1482 = vmatpush1.msra.mxu0 0.0
        %1483 = vmatprep.subr.mxu0 0.0
        %1484 = vmatpush1.msra.mxu0 0.0
        %1485 = vmatprep.subr.mxu0 0.0
        %1486 = vmatpush1.msra.mxu0 0.0
        %1487 = vmatprep.subr.mxu0 0.0
        %1488 = vmatpush1.msra.mxu0 0.0
        %1489 = vmatprep.subr.mxu0 0.0
        %1490 = vmatpush1.msra.mxu0 0.0
        %1491 = vmatprep.subr.mxu0 0.0
        %1492 = vmatpush1.msra.mxu0 0.0
        %1493 = vmatprep.subr.mxu0 0.0
        %1494 = vmatpush1.msra.mxu0 0.0
        %1495 = vmatprep.subr.mxu0 0.0
        %1496 = vmatpush1.msra.mxu0 0.0
        %1497 = vmatprep.subr.mxu0 0.0
        %1498 = vmatpush1.msra.mxu0 0.0
        %1499 = vmatprep.subr.mxu0 0.0
        %1500 = vmatpush1.msra.mxu0 0.0
        %1501 = vmatprep.subr.mxu0 0.0
        %1502 = vmatpush1.msra.mxu0 0.0
        %1503 = vmatprep.subr.mxu0 0.0
        %1504 = vmatpush1.msra.mxu0 0.0
        %1505 = vmatprep.subr.mxu0 0.0
        %1506 = vmatpush1.msra.mxu0 0.0
        %1507 = vmatprep.subr.mxu0 0.0
        %1508 = vmatpush1.msra.mxu0 0.0
        %1509 = vmatprep.subr.mxu0 0.0
        %1510 = vmatpush1.msra.mxu0 0.0
        %1511 = vmatprep.subr.mxu0 0.0
        %1512 = vmatpush1.msra.mxu0 0.0
        %1513 = vmatprep.subr.mxu0 0.0
        %1514 = vmatpush1.msra.mxu0 0.0
        %1515 = vmatprep.subr.mxu0 0.0
        %1516 = vmatpush1.msra.mxu0 0.0
        %1517 = vmatprep.subr.mxu0 0.0
        %1518 = vmatpush1.msra.mxu0 0.0
        %1519 = vmatprep.mubr.f32.mxu0 0.0
        %1520 = vmatmul.mubr.f32.gmra.mrb[0].mxu0 %v1435
        %v1521 = vpop.f32.mrb[0].mxu0
        %v1522 = vadd.f32 0.0, %v1521
        %v1523 = vpop.f32.mrb[0].mxu0
        %1524 = vmatprep.mubr.f32.mxu0 0.0
        %1525 = vmatmul.mubr.f32.gmra.mrb[0].mxu0 %v1437
        %v1526 = vpop.f32.mrb[0].mxu0
        %v1527 = vadd.f32 0.0, %v1526
        %v1528 = vpop.f32.mrb[0].mxu0
        %1529 = vmatprep.mubr.f32.mxu0 0.0
        %1530 = vmatmul.mubr.f32.gmra.mrb[0].mxu0 %v1439
        %v1531 = vpop.f32.mrb[0].mxu0
        %v1532 = vadd.f32 0.0, %v1531
        %v1533 = vpop.f32.mrb[0].mxu0
        %1534 = vmatprep.mubr.f32.mxu0 0.0
        %1535 = vmatmul.mubr.f32.gmra.mrb[0].mxu0 %v1441
        %v1536 = vpop.f32.mrb[0].mxu0
        %v1537 = vadd.f32 0.0, %v1536
        %v1538 = vpop.f32.mrb[0].mxu0
        %1539 = vmatprep.mubr.f32.mxu0 0.0
        %1540 = vmatmul.mubr.f32.gmra.mrb[0].mxu0 %v1443
        %v1541 = vpop.f32.mrb[0].mxu0
        %v1542 = vadd.f32 0.0, %v1541
        %v1543 = vpop.f32.mrb[0].mxu0
        %1544 = vmatprep.mubr.f32.mxu0 0.0
        %1545 = vmatmul.mubr.f32.gmra.mrb[0].mxu0 %v1445
        %v1546 = vpop.f32.mrb[0].mxu0
        %v1547 = vadd.f32 0.0, %v1546
        %v1548 = vpop.f32.mrb[0].mxu0
        %1549 = vmatprep.mubr.f32.mxu0 0.0
        %1550 = vmatmul.mubr.f32.gmra.mrb[0].mxu0 %v1447
        %v1551 = vpop.f32.mrb[0].mxu0
        %v1552 = vadd.f32 0.0, %v1551
        %v1553 = vpop.f32.mrb[0].mxu0
        %1554 = vmatprep.mubr.f32.mxu0 0.0
        %1555 = vmatmul.mubr.f32.gmra.mrb[0].mxu0 %v1449
        %v1556 = vpop.f32.mrb[0].mxu0
        %v1557 = vadd.f32 0.0, %v1556
        %v1558 = vpop.f32.mrb[0].mxu0
        %1559 = vdwg.mxu0
        %v1560 = vld [vmem:[#allocation11] sm:$0xff]
        %v1561 = vld [vmem:[#allocation11 + $0x8] sm:$0xff]
        %v1562 = vld [vmem:[#allocation11 + $0x10] sm:$0xff]
        %v1563 = vld [vmem:[#allocation11 + $0x18] sm:$0xff]
        %v1564 = vld [vmem:[#allocation11 + $0x20] sm:$0xff]
        %v1565 = vld [vmem:[#allocation11 + $0x28] sm:$0xff]
        %v1566 = vld [vmem:[#allocation11 + $0x30] sm:$0xff]
        %v1567 = vld [vmem:[#allocation11 + $0x38] sm:$0xff]
        %v1568 = vmul.f32 %v1522, %v1560
        %v1569 = vmul.f32 %v1527, %v1561
        %v1570 = vmul.f32 %v1532, %v1562
        %v1571 = vmul.f32 %v1537, %v1563
        %v1572 = vmul.f32 %v1542, %v1564
        %v1573 = vmul.f32 %v1547, %v1565
        %v1574 = vmul.f32 %v1552, %v1566
        %v1575 = vmul.f32 %v1557, %v1567
        %vm1576 = vcmask 523264
        %v1578 = vsel %vm1576, %v1402, 0
        %v1581 = vsel %vm1576, %v1403, 0
        %v1584 = vsel %vm1576, %v1404, 0
        %v1587 = vsel %vm1576, %v1405, 0
        %v1590 = vsel %vm1576, %v1406, 0
        %v1593 = vsel %vm1576, %v1407, 0
        %v1596 = vsel %vm1576, %v1408, 0
        %v1599 = vsel %vm1576, %v1409, 0
        %1601 = vmatprep.subr.mxu0 0.0
        %1602 = vmatpush1.msra.mxu0 %v1568
        %1603 = vmatprep.subr.mxu0 0.0
        %1604 = vmatpush1.msra.mxu0 %v1569
        %1605 = vmatprep.subr.mxu0 0.0
        %1606 = vmatpush1.msra.mxu0 %v1570
        %1607 = vmatprep.subr.mxu0 0.0
        %1608 = vmatpush1.msra.mxu0 %v1571
        %1609 = vmatprep.subr.mxu0 0.0
        %1610 = vmatpush1.msra.mxu0 %v1572
        %1611 = vmatprep.subr.mxu0 0.0
        %1612 = vmatpush1.msra.mxu0 %v1573
        %1613 = vmatprep.subr.mxu0 0.0
        %1614 = vmatpush1.msra.mxu0 %v1574
        %1615 = vmatprep.subr.mxu0 0.0
        %1616 = vmatpush1.msra.mxu0 %v1575
        %1617 = vmatprep.subr.mxu0 0.0
        %1618 = vmatpush1.msra.mxu0 0.0
        %1619 = vmatprep.subr.mxu0 0.0
        %1620 = vmatpush1.msra.mxu0 0.0
        %1621 = vmatprep.subr.mxu0 0.0
        %1622 = vmatpush1.msra.mxu0 0.0
        %1623 = vmatprep.subr.mxu0 0.0
        %1624 = vmatpush1.msra.mxu0 0.0
        %1625 = vmatprep.subr.mxu0 0.0
        %1626 = vmatpush1.msra.mxu0 0.0
        %1627 = vmatprep.subr.mxu0 0.0
        %1628 = vmatpush1.msra.mxu0 0.0
        %1629 = vmatprep.subr.mxu0 0.0
        %1630 = vmatpush1.msra.mxu0 0.0
        %1631 = vmatprep.subr.mxu0 0.0
        %1632 = vmatpush1.msra.mxu0 0.0
        %1633 = vmatprep.subr.mxu0 0.0
        %1634 = vmatpush1.msra.mxu0 0.0
        %1635 = vmatprep.subr.mxu0 0.0
        %1636 = vmatpush1.msra.mxu0 0.0
        %1637 = vmatprep.subr.mxu0 0.0
        %1638 = vmatpush1.msra.mxu0 0.0
        %1639 = vmatprep.subr.mxu0 0.0
        %1640 = vmatpush1.msra.mxu0 0.0
        %1641 = vmatprep.subr.mxu0 0.0
        %1642 = vmatpush1.msra.mxu0 0.0
        %1643 = vmatprep.subr.mxu0 0.0
        %1644 = vmatpush1.msra.mxu0 0.0
        %1645 = vmatprep.subr.mxu0 0.0
        %1646 = vmatpush1.msra.mxu0 0.0
        %1647 = vmatprep.subr.mxu0 0.0
        %1648 = vmatpush1.msra.mxu0 0.0
        %1649 = vmatprep.subr.mxu0 0.0
        %1650 = vmatpush1.msra.mxu0 0.0
        %1651 = vmatprep.subr.mxu0 0.0
        %1652 = vmatpush1.msra.mxu0 0.0
        %1653 = vmatprep.subr.mxu0 0.0
        %1654 = vmatpush1.msra.mxu0 0.0
        %1655 = vmatprep.subr.mxu0 0.0
        %1656 = vmatpush1.msra.mxu0 0.0
        %1657 = vmatprep.subr.mxu0 0.0
        %1658 = vmatpush1.msra.mxu0 0.0
        %1659 = vmatprep.subr.mxu0 0.0
        %1660 = vmatpush1.msra.mxu0 0.0
        %1661 = vmatprep.subr.mxu0 0.0
        %1662 = vmatpush1.msra.mxu0 0.0
        %1663 = vmatprep.subr.mxu0 0.0
        %1664 = vmatpush1.msra.mxu0 0.0
        %1665 = vmatprep.mubr.f32.mxu0 0.0
        %1666 = vmatmul.mubr.f32.gmra.mrb[0].mxu0 %v1578
        %v1667 = vpop.f32.mrb[0].mxu0
        %v1668 = vadd.f32 0.0, %v1667
        %v1669 = vpop.f32.mrb[0].mxu0
        %1670 = vmatprep.mubr.f32.mxu0 0.0
        %1671 = vmatmul.mubr.f32.gmra.mrb[0].mxu0 %v1581
        %v1672 = vpop.f32.mrb[0].mxu0
        %v1673 = vadd.f32 0.0, %v1672
        %v1674 = vpop.f32.mrb[0].mxu0
        %1675 = vmatprep.mubr.f32.mxu0 0.0
        %1676 = vmatmul.mubr.f32.gmra.mrb[0].mxu0 %v1584
        %v1677 = vpop.f32.mrb[0].mxu0
        %v1678 = vadd.f32 0.0, %v1677
        %v1679 = vpop.f32.mrb[0].mxu0
        %1680 = vmatprep.mubr.f32.mxu0 0.0
        %1681 = vmatmul.mubr.f32.gmra.mrb[0].mxu0 %v1587
        %v1682 = vpop.f32.mrb[0].mxu0
        %v1683 = vadd.f32 0.0, %v1682
        %v1684 = vpop.f32.mrb[0].mxu0
        %1685 = vmatprep.mubr.f32.mxu0 0.0
        %1686 = vmatmul.mubr.f32.gmra.mrb[0].mxu0 %v1590
        %v1687 = vpop.f32.mrb[0].mxu0
        %v1688 = vadd.f32 0.0, %v1687
        %v1689 = vpop.f32.mrb[0].mxu0
        %1690 = vmatprep.mubr.f32.mxu0 0.0
        %1691 = vmatmul.mubr.f32.gmra.mrb[0].mxu0 %v1593
        %v1692 = vpop.f32.mrb[0].mxu0
        %v1693 = vadd.f32 0.0, %v1692
        %v1694 = vpop.f32.mrb[0].mxu0
        %1695 = vmatprep.mubr.f32.mxu0 0.0
        %1696 = vmatmul.mubr.f32.gmra.mrb[0].mxu0 %v1596
        %v1697 = vpop.f32.mrb[0].mxu0
        %v1698 = vadd.f32 0.0, %v1697
        %v1699 = vpop.f32.mrb[0].mxu0
        %1700 = vmatprep.mubr.f32.mxu0 0.0
        %1701 = vmatmul.mubr.f32.gmra.mrb[0].mxu0 %v1599
        %v1702 = vpop.f32.mrb[0].mxu0
        %v1703 = vadd.f32 0.0, %v1702
        %v1704 = vpop.f32.mrb[0].mxu0
        %1705 = vdwg.mxu0
        %v1706 = vsel %vm1434, %v1363, 0
        %v1708 = vsel %vm1434, %v1368, 0
        %v1710 = vsel %vm1434, %v1373, 0
        %v1712 = vsel %vm1434, %v1378, 0
        %v1714 = vsel %vm1434, %v1383, 0
        %v1716 = vsel %vm1434, %v1388, 0
        %v1718 = vsel %vm1434, %v1393, 0
        %v1720 = vsel %vm1434, %v1398, 0
        %1722 = vmatprep.subr.mxu0 0.0
        %1723 = vmatpush1.msra.mxu0 %v1453
        %1724 = vmatprep.subr.mxu0 0.0
        %1725 = vmatpush1.msra.mxu0 0.0
        %1726 = vmatprep.subr.mxu0 0.0
        %1727 = vmatpush1.msra.mxu0 0.0
        %1728 = vmatprep.subr.mxu0 0.0
        %1729 = vmatpush1.msra.mxu0 0.0
        %1730 = vmatprep.subr.mxu0 0.0
        %1731 = vmatpush1.msra.mxu0 0.0
        %1732 = vmatprep.subr.mxu0 0.0
        %1733 = vmatpush1.msra.mxu0 0.0
        %1734 = vmatprep.subr.mxu0 0.0
        %1735 = vmatpush1.msra.mxu0 0.0
        %1736 = vmatprep.subr.mxu0 0.0
        %1737 = vmatpush1.msra.mxu0 0.0
        %1738 = vmatprep.subr.mxu0 0.0
        %1739 = vmatpush1.msra.mxu0 0.0
        %1740 = vmatprep.subr.mxu0 0.0
        %1741 = vmatpush1.msra.mxu0 0.0
        %1742 = vmatprep.subr.mxu0 0.0
        %1743 = vmatpush1.msra.mxu0 0.0
        %1744 = vmatprep.subr.mxu0 0.0
        %1745 = vmatpush1.msra.mxu0 0.0
        %1746 = vmatprep.subr.mxu0 0.0
        %1747 = vmatpush1.msra.mxu0 0.0
        %1748 = vmatprep.subr.mxu0 0.0
        %1749 = vmatpush1.msra.mxu0 0.0
        %1750 = vmatprep.subr.mxu0 0.0
        %1751 = vmatpush1.msra.mxu0 0.0
        %1752 = vmatprep.subr.mxu0 0.0
        %1753 = vmatpush1.msra.mxu0 0.0
        %1754 = vmatprep.subr.mxu0 0.0
        %1755 = vmatpush1.msra.mxu0 0.0
        %1756 = vmatprep.subr.mxu0 0.0
        %1757 = vmatpush1.msra.mxu0 0.0
        %1758 = vmatprep.subr.mxu0 0.0
        %1759 = vmatpush1.msra.mxu0 0.0
        %1760 = vmatprep.subr.mxu0 0.0
        %1761 = vmatpush1.msra.mxu0 0.0
        %1762 = vmatprep.subr.mxu0 0.0
        %1763 = vmatpush1.msra.mxu0 0.0
        %1764 = vmatprep.subr.mxu0 0.0
        %1765 = vmatpush1.msra.mxu0 0.0
        %1766 = vmatprep.subr.mxu0 0.0
        %1767 = vmatpush1.msra.mxu0 0.0
        %1768 = vmatprep.subr.mxu0 0.0
        %1769 = vmatpush1.msra.mxu0 0.0
        %1770 = vmatprep.subr.mxu0 0.0
        %1771 = vmatpush1.msra.mxu0 0.0
        %1772 = vmatprep.subr.mxu0 0.0
        %1773 = vmatpush1.msra.mxu0 0.0
        %1774 = vmatprep.subr.mxu0 0.0
        %1775 = vmatpush1.msra.mxu0 0.0
        %1776 = vmatprep.subr.mxu0 0.0
        %1777 = vmatpush1.msra.mxu0 0.0
        %1778 = vmatprep.subr.mxu0 0.0
        %1779 = vmatpush1.msra.mxu0 0.0
        %1780 = vmatprep.subr.mxu0 0.0
        %1781 = vmatpush1.msra.mxu0 0.0
        %1782 = vmatprep.subr.mxu0 0.0
        %1783 = vmatpush1.msra.mxu0 0.0
        %1784 = vmatprep.subr.mxu0 0.0
        %1785 = vmatpush1.msra.mxu0 0.0
        %1786 = vmatprep.mubr.f32.mxu0 0.0
        %1787 = vmatmul.mubr.f32.gmra.mrb[0].mxu0 %v1706
        %v1788 = vpop.f32.mrb[0].mxu0
        %v1789 = vadd.f32 %v1668, %v1788
        %v1790 = vpop.f32.mrb[0].mxu0
        %1791 = vmatprep.mubr.f32.mxu0 0.0
        %1792 = vmatmul.mubr.f32.gmra.mrb[0].mxu0 %v1708
        %v1793 = vpop.f32.mrb[0].mxu0
        %v1794 = vadd.f32 %v1673, %v1793
        %v1795 = vpop.f32.mrb[0].mxu0
        %1796 = vmatprep.mubr.f32.mxu0 0.0
        %1797 = vmatmul.mubr.f32.gmra.mrb[0].mxu0 %v1710
        %v1798 = vpop.f32.mrb[0].mxu0
        %v1799 = vadd.f32 %v1678, %v1798
        %v1800 = vpop.f32.mrb[0].mxu0
        %1801 = vmatprep.mubr.f32.mxu0 0.0
        %1802 = vmatmul.mubr.f32.gmra.mrb[0].mxu0 %v1712
        %v1803 = vpop.f32.mrb[0].mxu0
        %v1804 = vadd.f32 %v1683, %v1803
        %v1805 = vpop.f32.mrb[0].mxu0
        %1806 = vmatprep.mubr.f32.mxu0 0.0
        %1807 = vmatmul.mubr.f32.gmra.mrb[0].mxu0 %v1714
        %v1808 = vpop.f32.mrb[0].mxu0
        %v1809 = vadd.f32 %v1688, %v1808
        %v1810 = vpop.f32.mrb[0].mxu0
        %1811 = vmatprep.mubr.f32.mxu0 0.0
        %1812 = vmatmul.mubr.f32.gmra.mrb[0].mxu0 %v1716
        %v1813 = vpop.f32.mrb[0].mxu0
        %v1814 = vadd.f32 %v1693, %v1813
        %v1815 = vpop.f32.mrb[0].mxu0
        %1816 = vmatprep.mubr.f32.mxu0 0.0
        %1817 = vmatmul.mubr.f32.gmra.mrb[0].mxu0 %v1718
        %v1818 = vpop.f32.mrb[0].mxu0
        %v1819 = vadd.f32 %v1698, %v1818
        %v1820 = vpop.f32.mrb[0].mxu0
        %1821 = vmatprep.mubr.f32.mxu0 0.0
        %1822 = vmatmul.mubr.f32.gmra.mrb[0].mxu0 %v1720
        %v1823 = vpop.f32.mrb[0].mxu0
        %v1824 = vadd.f32 %v1703, %v1823
        %v1825 = vpop.f32.mrb[0].mxu0
        %1826 = vdwg.mxu0
        %vm1827 = vcmp.gt.f32.partialorder %v1789, 0.0
        %vm1828 = vcmp.gt.f32.partialorder %v1794, 0.0
        %vm1829 = vcmp.gt.f32.partialorder %v1799, 0.0
        %vm1830 = vcmp.gt.f32.partialorder %v1804, 0.0
        %vm1831 = vcmp.gt.f32.partialorder %v1809, 0.0
        %vm1832 = vcmp.gt.f32.partialorder %v1814, 0.0
        %vm1833 = vcmp.gt.f32.partialorder %v1819, 0.0
        %vm1834 = vcmp.gt.f32.partialorder %v1824, 0.0
        %v1835 = vmul.f32 %v1789, 0.2
        %v1836 = vmul.f32 %v1794, 0.2
        %v1837 = vmul.f32 %v1799, 0.2
        %v1838 = vmul.f32 %v1804, 0.2
        %v1839 = vmul.f32 %v1809, 0.2
        %v1840 = vmul.f32 %v1814, 0.2
        %v1841 = vmul.f32 %v1819, 0.2
        %v1842 = vmul.f32 %v1824, 0.2
        %v1843 = vsel %vm1827, %v1789, %v1835
        %v1844 = vsel %vm1828, %v1794, %v1836
        %v1845 = vsel %vm1829, %v1799, %v1837
        %v1846 = vsel %vm1830, %v1804, %v1838
        %v1847 = vsel %vm1831, %v1809, %v1839
        %v1848 = vsel %vm1832, %v1814, %v1840
        %v1849 = vsel %vm1833, %v1819, %v1841
        %v1850 = vsel %vm1834, %v1824, %v1842
        %v1851 = vld [vmem:[#allocation13] sm:$0xff]
        %v1852 = vld [vmem:[#allocation13 + $0x8] sm:$0xff]
        %v1853 = vld [vmem:[#allocation13 + $0x10] sm:$0xff]
        %v1854 = vld [vmem:[#allocation13 + $0x18] sm:$0xff]
        %v1855 = vld [vmem:[#allocation13 + $0x20] sm:$0xff]
        %v1856 = vld [vmem:[#allocation13 + $0x28] sm:$0xff]
        %v1857 = vld [vmem:[#allocation13 + $0x30] sm:$0xff]
        %v1858 = vld [vmem:[#allocation13 + $0x38] sm:$0xff]
        %v1859 = vmul.f32 %v1843, %v1851
        %v1860 = vmul.f32 %v1844, %v1852
        %v1861 = vmul.f32 %v1845, %v1853
        %v1862 = vmul.f32 %v1846, %v1854
        %v1863 = vmul.f32 %v1847, %v1855
        %v1864 = vmul.f32 %v1848, %v1856
        %v1865 = vmul.f32 %v1849, %v1857
        %v1866 = vmul.f32 %v1850, %v1858
        %v1867 = vld [vmem:[#allocation14] sm:$0xff]
        %v1868 = vld [vmem:[#allocation14 + $0x8] sm:$0xff]
        %v1869 = vld [vmem:[#allocation14 + $0x10] sm:$0xff]
        %v1870 = vld [vmem:[#allocation14 + $0x18] sm:$0xff]
        %v1871 = vld [vmem:[#allocation14 + $0x20] sm:$0xff]
        %v1872 = vld [vmem:[#allocation14 + $0x28] sm:$0xff]
        %v1873 = vld [vmem:[#allocation14 + $0x30] sm:$0xff]
        %v1874 = vld [vmem:[#allocation14 + $0x38] sm:$0xff]
        %v1875 = vadd.f32 %v1859, %v1867
        %v1876 = vadd.f32 %v1860, %v1868
        %v1877 = vadd.f32 %v1861, %v1869
        %v1878 = vadd.f32 %v1862, %v1870
        %v1879 = vadd.f32 %v1863, %v1871
        %v1880 = vadd.f32 %v1864, %v1872
        %v1881 = vadd.f32 %v1865, %v1873
        %v1882 = vadd.f32 %v1866, %v1874
        %vm1883 = vcmask 261120
        %v1884 = vsel %vm1883, %v1875, -inf
        %1885 = vmax.xlane.f32.xlu0 %v1884
        %v1886 = vpop.xlane.xlu0 %1885
        %v1887 = vsel %vm1883, %v1876, -inf
        %1888 = vmax.xlane.f32.xlu0 %v1887
        %v1889 = vpop.xlane.xlu0 %1888
        %v1890 = vsel %vm1883, %v1877, -inf
        %1891 = vmax.xlane.f32.xlu0 %v1890
        %v1892 = vpop.xlane.xlu0 %1891
        %v1893 = vsel %vm1883, %v1878, -inf
        %1894 = vmax.xlane.f32.xlu0 %v1893
        %v1895 = vpop.xlane.xlu0 %1894
        %v1896 = vsel %vm1883, %v1879, -inf
        %1897 = vmax.xlane.f32.xlu0 %v1896
        %v1898 = vpop.xlane.xlu0 %1897
        %v1899 = vsel %vm1883, %v1880, -inf
        %1900 = vmax.xlane.f32.xlu0 %v1899
        %v1901 = vpop.xlane.xlu0 %1900
        %v1902 = vsel %vm1883, %v1881, -inf
        %1903 = vmax.xlane.f32.xlu0 %v1902
        %v1904 = vpop.xlane.xlu0 %1903
        %v1905 = vsel %vm1883, %v1882, -inf
        %1906 = vmax.xlane.f32.xlu0 %v1905
        %v1907 = vpop.xlane.xlu0 %1906
        %v1908 = vsub.f32 %v1875, %v1886
        %v1909 = vsub.f32 %v1876, %v1889
        %v1910 = vsub.f32 %v1877, %v1892
        %v1911 = vsub.f32 %v1878, %v1895
        %v1912 = vsub.f32 %v1879, %v1898
        %v1913 = vsub.f32 %v1880, %v1901
        %v1914 = vsub.f32 %v1881, %v1904
        %v1915 = vsub.f32 %v1882, %v1907
        %v1916 = vmul.f32 %v1908, 1.442695
        %v1917 = vpow.pop %v1916
        %v1918 = vmul.f32 %v1909, 1.442695
        %v1919 = vpow.pop %v1918
        %v1920 = vmul.f32 %v1910, 1.442695
        %v1921 = vpow.pop %v1920
        %v1922 = vmul.f32 %v1911, 1.442695
        %v1923 = vpow.pop %v1922
        %v1924 = vmul.f32 %v1912, 1.442695
        %v1925 = vpow.pop %v1924
        %v1926 = vmul.f32 %v1913, 1.442695
        %v1927 = vpow.pop %v1926
        %v1928 = vmul.f32 %v1914, 1.442695
        %v1929 = vpow.pop %v1928
        %v1930 = vmul.f32 %v1915, 1.442695
        %v1931 = vpow.pop %v1930
        %v1932 = vld [vmem:[%s11] sm:$0xff]
        %v1933 = vld [vmem:[%s11 + $0x8] sm:$0xff]
        %v1934 = vld [vmem:[%s11 + $0x10] sm:$0xff]
        %v1935 = vld [vmem:[%s11 + $0x18] sm:$0xff]
        %v1937 = vsel %vm1883, %v1917, 0
        %v1940 = vsel %vm1883, %v1919, 0
        %v1943 = vsel %vm1883, %v1921, 0
        %v1946 = vsel %vm1883, %v1923, 0
        %v1949 = vsel %vm1883, %v1925, 0
        %v1952 = vsel %vm1883, %v1927, 0
        %v1955 = vsel %vm1883, %v1929, 0
        %v1958 = vsel %vm1883, %v1931, 0
        %1960 = vmatprep.subr.mxu0 0.0
        %1961 = vmatpush1.msra.mxu0 %v1932
        %1962 = vmatprep.subr.mxu0 0.0
        %1963 = vmatpush1.msra.mxu0 %v1933
        %1964 = vmatprep.subr.mxu0 0.0
        %1965 = vmatpush1.msra.mxu0 %v1934
        %1966 = vmatprep.subr.mxu0 0.0
        %1967 = vmatpush1.msra.mxu0 %v1935
        %1968 = vmatprep.subr.mxu0 0.0
        %1969 = vmatpush1.msra.mxu0 0.0
        %1970 = vmatprep.subr.mxu0 0.0
        %1971 = vmatpush1.msra.mxu0 0.0
        %1972 = vmatprep.subr.mxu0 0.0
        %1973 = vmatpush1.msra.mxu0 0.0
        %1974 = vmatprep.subr.mxu0 0.0
        %1975 = vmatpush1.msra.mxu0 0.0
        %1976 = vmatprep.subr.mxu0 0.0
        %1977 = vmatpush1.msra.mxu0 0.0
        %1978 = vmatprep.subr.mxu0 0.0
        %1979 = vmatpush1.msra.mxu0 0.0
        %1980 = vmatprep.subr.mxu0 0.0
        %1981 = vmatpush1.msra.mxu0 0.0
        %1982 = vmatprep.subr.mxu0 0.0
        %1983 = vmatpush1.msra.mxu0 0.0
        %1984 = vmatprep.subr.mxu0 0.0
        %1985 = vmatpush1.msra.mxu0 0.0
        %1986 = vmatprep.subr.mxu0 0.0
        %1987 = vmatpush1.msra.mxu0 0.0
        %1988 = vmatprep.subr.mxu0 0.0
        %1989 = vmatpush1.msra.mxu0 0.0
        %1990 = vmatprep.subr.mxu0 0.0
        %1991 = vmatpush1.msra.mxu0 0.0
        %1992 = vmatprep.subr.mxu0 0.0
        %1993 = vmatpush1.msra.mxu0 0.0
        %1994 = vmatprep.subr.mxu0 0.0
        %1995 = vmatpush1.msra.mxu0 0.0
        %1996 = vmatprep.subr.mxu0 0.0
        %1997 = vmatpush1.msra.mxu0 0.0
        %1998 = vmatprep.subr.mxu0 0.0
        %1999 = vmatpush1.msra.mxu0 0.0
        %2000 = vmatprep.subr.mxu0 0.0
        %2001 = vmatpush1.msra.mxu0 0.0
        %2002 = vmatprep.subr.mxu0 0.0
        %2003 = vmatpush1.msra.mxu0 0.0
        %2004 = vmatprep.subr.mxu0 0.0
        %2005 = vmatpush1.msra.mxu0 0.0
        %2006 = vmatprep.subr.mxu0 0.0
        %2007 = vmatpush1.msra.mxu0 0.0
        %2008 = vmatprep.subr.mxu0 0.0
        %2009 = vmatpush1.msra.mxu0 0.0
        %2010 = vmatprep.subr.mxu0 0.0
        %2011 = vmatpush1.msra.mxu0 0.0
        %2012 = vmatprep.subr.mxu0 0.0
        %2013 = vmatpush1.msra.mxu0 0.0
        %2014 = vmatprep.subr.mxu0 0.0
        %2015 = vmatpush1.msra.mxu0 0.0
        %2016 = vmatprep.subr.mxu0 0.0
        %2017 = vmatpush1.msra.mxu0 0.0
        %2018 = vmatprep.subr.mxu0 0.0
        %2019 = vmatpush1.msra.mxu0 0.0
        %2020 = vmatprep.subr.mxu0 0.0
        %2021 = vmatpush1.msra.mxu0 0.0
        %2022 = vmatprep.subr.mxu0 0.0
        %2023 = vmatpush1.msra.mxu0 0.0
        %2024 = vmatprep.mubr.f32.mxu0 0.0
        %2025 = vmatmul.mubr.f32.gmra.mrb[0].mxu0 %v1937
        %v2026 = vpop.f32.mrb[0].mxu0
        %v2027 = vadd.f32 0.0, %v2026
        %v2028 = vpop.f32.mrb[0].mxu0
        %2029 = vmatprep.mubr.f32.mxu0 0.0
        %2030 = vmatmul.mubr.f32.gmra.mrb[0].mxu0 %v1940
        %v2031 = vpop.f32.mrb[0].mxu0
        %v2032 = vadd.f32 0.0, %v2031
        %v2033 = vpop.f32.mrb[0].mxu0
        %2034 = vmatprep.mubr.f32.mxu0 0.0
        %2035 = vmatmul.mubr.f32.gmra.mrb[0].mxu0 %v1943
        %v2036 = vpop.f32.mrb[0].mxu0
        %v2037 = vadd.f32 0.0, %v2036
        %v2038 = vpop.f32.mrb[0].mxu0
        %2039 = vmatprep.mubr.f32.mxu0 0.0
        %2040 = vmatmul.mubr.f32.gmra.mrb[0].mxu0 %v1946
        %v2041 = vpop.f32.mrb[0].mxu0
        %v2042 = vadd.f32 0.0, %v2041
        %v2043 = vpop.f32.mrb[0].mxu0
        %2044 = vmatprep.mubr.f32.mxu0 0.0
        %2045 = vmatmul.mubr.f32.gmra.mrb[0].mxu0 %v1949
        %v2046 = vpop.f32.mrb[0].mxu0
        %v2047 = vadd.f32 0.0, %v2046
        %v2048 = vpop.f32.mrb[0].mxu0
        %2049 = vmatprep.mubr.f32.mxu0 0.0
        %2050 = vmatmul.mubr.f32.gmra.mrb[0].mxu0 %v1952
        %v2051 = vpop.f32.mrb[0].mxu0
        %v2052 = vadd.f32 0.0, %v2051
        %v2053 = vpop.f32.mrb[0].mxu0
        %2054 = vmatprep.mubr.f32.mxu0 0.0
        %2055 = vmatmul.mubr.f32.gmra.mrb[0].mxu0 %v1955
        %v2056 = vpop.f32.mrb[0].mxu0
        %v2057 = vadd.f32 0.0, %v2056
        %v2058 = vpop.f32.mrb[0].mxu0
        %2059 = vmatprep.mubr.f32.mxu0 0.0
        %2060 = vmatmul.mubr.f32.gmra.mrb[0].mxu0 %v1958
        %v2061 = vpop.f32.mrb[0].mxu0
        %v2062 = vadd.f32 0.0, %v2061
        %v2063 = vpop.f32.mrb[0].mxu0
        %2064 = vdwg.mxu0
        %v2066 = vsel %vm1434, %v2027, 0
        %v2069 = vsel %vm1434, %v2032, 0
        %v2072 = vsel %vm1434, %v2037, 0
        %v2075 = vsel %vm1434, %v2042, 0
        %v2078 = vsel %vm1434, %v2047, 0
        %v2081 = vsel %vm1434, %v2052, 0
        %v2084 = vsel %vm1434, %v2057, 0
        %v2087 = vsel %vm1434, %v2062, 0
        %2089 = vmatprep.subr.mxu0 0.0
        %2090 = vmatpush1.msra.mxu0 %v1453
        %2091 = vmatprep.subr.mxu0 0.0
        %2092 = vmatpush1.msra.mxu0 0.0
        %2093 = vmatprep.subr.mxu0 0.0
        %2094 = vmatpush1.msra.mxu0 0.0
        %2095 = vmatprep.subr.mxu0 0.0
        %2096 = vmatpush1.msra.mxu0 0.0
        %2097 = vmatprep.subr.mxu0 0.0
        %2098 = vmatpush1.msra.mxu0 0.0
        %2099 = vmatprep.subr.mxu0 0.0
        %2100 = vmatpush1.msra.mxu0 0.0
        %2101 = vmatprep.subr.mxu0 0.0
        %2102 = vmatpush1.msra.mxu0 0.0
        %2103 = vmatprep.subr.mxu0 0.0
        %2104 = vmatpush1.msra.mxu0 0.0
        %2105 = vmatprep.subr.mxu0 0.0
        %2106 = vmatpush1.msra.mxu0 0.0
        %2107 = vmatprep.subr.mxu0 0.0
        %2108 = vmatpush1.msra.mxu0 0.0
        %2109 = vmatprep.subr.mxu0 0.0
        %2110 = vmatpush1.msra.mxu0 0.0
        %2111 = vmatprep.subr.mxu0 0.0
        %2112 = vmatpush1.msra.mxu0 0.0
        %2113 = vmatprep.subr.mxu0 0.0
        %2114 = vmatpush1.msra.mxu0 0.0
        %2115 = vmatprep.subr.mxu0 0.0
        %2116 = vmatpush1.msra.mxu0 0.0
        %2117 = vmatprep.subr.mxu0 0.0
        %2118 = vmatpush1.msra.mxu0 0.0
        %2119 = vmatprep.subr.mxu0 0.0
        %2120 = vmatpush1.msra.mxu0 0.0
        %2121 = vmatprep.subr.mxu0 0.0
        %2122 = vmatpush1.msra.mxu0 0.0
        %2123 = vmatprep.subr.mxu0 0.0
        %2124 = vmatpush1.msra.mxu0 0.0
        %2125 = vmatprep.subr.mxu0 0.0
        %2126 = vmatpush1.msra.mxu0 0.0
        %2127 = vmatprep.subr.mxu0 0.0
        %2128 = vmatpush1.msra.mxu0 0.0
        %2129 = vmatprep.subr.mxu0 0.0
        %2130 = vmatpush1.msra.mxu0 0.0
        %2131 = vmatprep.subr.mxu0 0.0
        %2132 = vmatpush1.msra.mxu0 0.0
        %2133 = vmatprep.subr.mxu0 0.0
        %2134 = vmatpush1.msra.mxu0 0.0
        %2135 = vmatprep.subr.mxu0 0.0
        %2136 = vmatpush1.msra.mxu0 0.0
        %2137 = vmatprep.subr.mxu0 0.0
        %2138 = vmatpush1.msra.mxu0 0.0
        %2139 = vmatprep.subr.mxu0 0.0
        %2140 = vmatpush1.msra.mxu0 0.0
        %2141 = vmatprep.subr.mxu0 0.0
        %2142 = vmatpush1.msra.mxu0 0.0
        %2143 = vmatprep.subr.mxu0 0.0
        %2144 = vmatpush1.msra.mxu0 0.0
        %2145 = vmatprep.subr.mxu0 0.0
        %2146 = vmatpush1.msra.mxu0 0.0
        %2147 = vmatprep.subr.mxu0 0.0
        %2148 = vmatpush1.msra.mxu0 0.0
        %2149 = vmatprep.subr.mxu0 0.0
        %2150 = vmatpush1.msra.mxu0 0.0
        %2151 = vmatprep.subr.mxu0 0.0
        %2152 = vmatpush1.msra.mxu0 0.0
        %2153 = vmatprep.mubr.f32.mxu0 0.0
        %2154 = vmatmul.mubr.f32.gmra.mrb[0].mxu0 %v2066
        %v2155 = vpop.f32.mrb[0].mxu0
        %v2156 = vadd.f32 0.0, %v2155
        %v2157 = vpop.f32.mrb[0].mxu0
        %2158 = vmatprep.mubr.f32.mxu0 0.0
        %2159 = vmatmul.mubr.f32.gmra.mrb[0].mxu0 %v2069
        %v2160 = vpop.f32.mrb[0].mxu0
        %v2161 = vadd.f32 0.0, %v2160
        %v2162 = vpop.f32.mrb[0].mxu0
        %2163 = vmatprep.mubr.f32.mxu0 0.0
        %2164 = vmatmul.mubr.f32.gmra.mrb[0].mxu0 %v2072
        %v2165 = vpop.f32.mrb[0].mxu0
        %v2166 = vadd.f32 0.0, %v2165
        %v2167 = vpop.f32.mrb[0].mxu0
        %2168 = vmatprep.mubr.f32.mxu0 0.0
        %2169 = vmatmul.mubr.f32.gmra.mrb[0].mxu0 %v2075
        %v2170 = vpop.f32.mrb[0].mxu0
        %v2171 = vadd.f32 0.0, %v2170
        %v2172 = vpop.f32.mrb[0].mxu0
        %2173 = vmatprep.mubr.f32.mxu0 0.0
        %2174 = vmatmul.mubr.f32.gmra.mrb[0].mxu0 %v2078
        %v2175 = vpop.f32.mrb[0].mxu0
        %v2176 = vadd.f32 0.0, %v2175
        %v2177 = vpop.f32.mrb[0].mxu0
        %2178 = vmatprep.mubr.f32.mxu0 0.0
        %2179 = vmatmul.mubr.f32.gmra.mrb[0].mxu0 %v2081
        %v2180 = vpop.f32.mrb[0].mxu0
        %v2181 = vadd.f32 0.0, %v2180
        %v2182 = vpop.f32.mrb[0].mxu0
        %2183 = vmatprep.mubr.f32.mxu0 0.0
        %2184 = vmatmul.mubr.f32.gmra.mrb[0].mxu0 %v2084
        %v2185 = vpop.f32.mrb[0].mxu0
        %v2186 = vadd.f32 0.0, %v2185
        %v2187 = vpop.f32.mrb[0].mxu0
        %2188 = vmatprep.mubr.f32.mxu0 0.0
        %2189 = vmatmul.mubr.f32.gmra.mrb[0].mxu0 %v2087
        %v2190 = vpop.f32.mrb[0].mxu0
        %v2191 = vadd.f32 0.0, %v2190
        %v2192 = vpop.f32.mrb[0].mxu0
        %2193 = vdwg.mxu0
        %v2194 = vrcp.pop %v2156
        %v2195 = vrcp.pop %v2161
        %v2196 = vrcp.pop %v2166
        %v2197 = vrcp.pop %v2171
        %v2198 = vrcp.pop %v2176
        %v2199 = vrcp.pop %v2181
        %v2200 = vrcp.pop %v2186
        %v2201 = vrcp.pop %v2191
        %v2202 = vmul.f32 %v1917, %v2194
        %v2203 = vmul.f32 %v1919, %v2195
        %v2204 = vmul.f32 %v1921, %v2196
        %v2205 = vmul.f32 %v1923, %v2197
        %v2206 = vmul.f32 %v1925, %v2198
        %v2207 = vmul.f32 %v1927, %v2199
        %v2208 = vmul.f32 %v1929, %v2200
        %v2209 = vmul.f32 %v1931, %v2201
        %v2210 = vld [vmem:[%s21] sm:$0xff]
        %v2211 = vld [vmem:[%s21 + $0x8] sm:$0xff]
        %v2212 = vld [vmem:[%s21 + $0x10] sm:$0xff]
        %v2213 = vld [vmem:[%s21 + $0x18] sm:$0xff]
        %v2214 = vmul.f32 %v1232, %v2210
        %v2215 = vmul.f32 %v1232, %v2211
        %v2216 = vmul.f32 %v1232, %v2212
        %v2217 = vmul.f32 %v1232, %v2213
        %v2218 = vmul.f32 %v1237, %v2210
        %v2219 = vmul.f32 %v1237, %v2211
        %v2220 = vmul.f32 %v1237, %v2212
        %v2221 = vmul.f32 %v1237, %v2213
        %v2222 = vmul.f32 %v1242, %v2210
        %v2223 = vmul.f32 %v1242, %v2211
        %v2224 = vmul.f32 %v1242, %v2212
        %v2225 = vmul.f32 %v1242, %v2213
        %v2226 = vmul.f32 %v1247, %v2210
        %v2227 = vmul.f32 %v1247, %v2211
        %v2228 = vmul.f32 %v1247, %v2212
        %v2229 = vmul.f32 %v1247, %v2213
        %v2230 = vmul.f32 %v1252, %v2210
        %v2231 = vmul.f32 %v1252, %v2211
        %v2232 = vmul.f32 %v1252, %v2212
        %v2233 = vmul.f32 %v1252, %v2213
        %v2234 = vmul.f32 %v1257, %v2210
        %v2235 = vmul.f32 %v1257, %v2211
        %v2236 = vmul.f32 %v1257, %v2212
        %v2237 = vmul.f32 %v1257, %v2213
        %v2238 = vmul.f32 %v1262, %v2210
        %v2239 = vmul.f32 %v1262, %v2211
        %v2240 = vmul.f32 %v1262, %v2212
        %v2241 = vmul.f32 %v1262, %v2213
        %v2242 = vmul.f32 %v1267, %v2210
        %v2243 = vmul.f32 %v1267, %v2211
        %v2244 = vmul.f32 %v1267, %v2212
        %v2245 = vmul.f32 %v1267, %v2213
        %v2247 = vsel %vm1883, %v2202, 0
        %2249 = vmatprep.subr.mxu0 0.0
        %2250 = vmatpush1.msra.mxu0 %v2214
        %2251 = vmatprep.subr.mxu0 0.0
        %2252 = vmatpush1.msra.mxu0 %v2215
        %2253 = vmatprep.subr.mxu0 0.0
        %2254 = vmatpush1.msra.mxu0 %v2216
        %2255 = vmatprep.subr.mxu0 0.0
        %2256 = vmatpush1.msra.mxu0 %v2217
        %2257 = vmatprep.subr.mxu0 0.0
        %2258 = vmatpush1.msra.mxu0 0.0
        %2259 = vmatprep.subr.mxu0 0.0
        %2260 = vmatpush1.msra.mxu0 0.0
        %2261 = vmatprep.subr.mxu0 0.0
        %2262 = vmatpush1.msra.mxu0 0.0
        %2263 = vmatprep.subr.mxu0 0.0
        %2264 = vmatpush1.msra.mxu0 0.0
        %2265 = vmatprep.subr.mxu0 0.0
        %2266 = vmatpush1.msra.mxu0 0.0
        %2267 = vmatprep.subr.mxu0 0.0
        %2268 = vmatpush1.msra.mxu0 0.0
        %2269 = vmatprep.subr.mxu0 0.0
        %2270 = vmatpush1.msra.mxu0 0.0
        %2271 = vmatprep.subr.mxu0 0.0
        %2272 = vmatpush1.msra.mxu0 0.0
        %2273 = vmatprep.subr.mxu0 0.0
        %2274 = vmatpush1.msra.mxu0 0.0
        %2275 = vmatprep.subr.mxu0 0.0
        %2276 = vmatpush1.msra.mxu0 0.0
        %2277 = vmatprep.subr.mxu0 0.0
        %2278 = vmatpush1.msra.mxu0 0.0
        %2279 = vmatprep.subr.mxu0 0.0
        %2280 = vmatpush1.msra.mxu0 0.0
        %2281 = vmatprep.subr.mxu0 0.0
        %2282 = vmatpush1.msra.mxu0 0.0
        %2283 = vmatprep.subr.mxu0 0.0
        %2284 = vmatpush1.msra.mxu0 0.0
        %2285 = vmatprep.subr.mxu0 0.0
        %2286 = vmatpush1.msra.mxu0 0.0
        %2287 = vmatprep.subr.mxu0 0.0
        %2288 = vmatpush1.msra.mxu0 0.0
        %2289 = vmatprep.subr.mxu0 0.0
        %2290 = vmatpush1.msra.mxu0 0.0
        %2291 = vmatprep.subr.mxu0 0.0
        %2292 = vmatpush1.msra.mxu0 0.0
        %2293 = vmatprep.subr.mxu0 0.0
        %2294 = vmatpush1.msra.mxu0 0.0
        %2295 = vmatprep.subr.mxu0 0.0
        %2296 = vmatpush1.msra.mxu0 0.0
        %2297 = vmatprep.subr.mxu0 0.0
        %2298 = vmatpush1.msra.mxu0 0.0
        %2299 = vmatprep.subr.mxu0 0.0
        %2300 = vmatpush1.msra.mxu0 0.0
        %2301 = vmatprep.subr.mxu0 0.0
        %2302 = vmatpush1.msra.mxu0 0.0
        %2303 = vmatprep.subr.mxu0 0.0
        %2304 = vmatpush1.msra.mxu0 0.0
        %2305 = vmatprep.subr.mxu0 0.0
        %2306 = vmatpush1.msra.mxu0 0.0
        %2307 = vmatprep.subr.mxu0 0.0
        %2308 = vmatpush1.msra.mxu0 0.0
        %2309 = vmatprep.subr.mxu0 0.0
        %2310 = vmatpush1.msra.mxu0 0.0
        %2311 = vmatprep.subr.mxu0 0.0
        %2312 = vmatpush1.msra.mxu0 0.0
        %2313 = vmatprep.mubr.f32.mxu0 0.0
        %2314 = vmatmul.mubr.f32.gmra.mrb[0].mxu0 %v2247
        %v2315 = vpop.f32.mrb[0].mxu0
        %v2316 = vadd.f32 0.0, %v2315
        %v2317 = vpop.f32.mrb[0].mxu0
        %2318 = vdwg.mxu0
        %v2320 = vsel %vm1883, %v2203, 0
        %2322 = vmatprep.subr.mxu0 0.0
        %2323 = vmatpush1.msra.mxu0 %v2218
        %2324 = vmatprep.subr.mxu0 0.0
        %2325 = vmatpush1.msra.mxu0 %v2219
        %2326 = vmatprep.subr.mxu0 0.0
        %2327 = vmatpush1.msra.mxu0 %v2220
        %2328 = vmatprep.subr.mxu0 0.0
        %2329 = vmatpush1.msra.mxu0 %v2221
        %2330 = vmatprep.subr.mxu0 0.0
        %2331 = vmatpush1.msra.mxu0 0.0
        %2332 = vmatprep.subr.mxu0 0.0
        %2333 = vmatpush1.msra.mxu0 0.0
        %2334 = vmatprep.subr.mxu0 0.0
        %2335 = vmatpush1.msra.mxu0 0.0
        %2336 = vmatprep.subr.mxu0 0.0
        %2337 = vmatpush1.msra.mxu0 0.0
        %2338 = vmatprep.subr.mxu0 0.0
        %2339 = vmatpush1.msra.mxu0 0.0
        %2340 = vmatprep.subr.mxu0 0.0
        %2341 = vmatpush1.msra.mxu0 0.0
        %2342 = vmatprep.subr.mxu0 0.0
        %2343 = vmatpush1.msra.mxu0 0.0
        %2344 = vmatprep.subr.mxu0 0.0
        %2345 = vmatpush1.msra.mxu0 0.0
        %2346 = vmatprep.subr.mxu0 0.0
        %2347 = vmatpush1.msra.mxu0 0.0
        %2348 = vmatprep.subr.mxu0 0.0
        %2349 = vmatpush1.msra.mxu0 0.0
        %2350 = vmatprep.subr.mxu0 0.0
        %2351 = vmatpush1.msra.mxu0 0.0
        %2352 = vmatprep.subr.mxu0 0.0
        %2353 = vmatpush1.msra.mxu0 0.0
        %2354 = vmatprep.subr.mxu0 0.0
        %2355 = vmatpush1.msra.mxu0 0.0
        %2356 = vmatprep.subr.mxu0 0.0
        %2357 = vmatpush1.msra.mxu0 0.0
        %2358 = vmatprep.subr.mxu0 0.0
        %2359 = vmatpush1.msra.mxu0 0.0
        %2360 = vmatprep.subr.mxu0 0.0
        %2361 = vmatpush1.msra.mxu0 0.0
        %2362 = vmatprep.subr.mxu0 0.0
        %2363 = vmatpush1.msra.mxu0 0.0
        %2364 = vmatprep.subr.mxu0 0.0
        %2365 = vmatpush1.msra.mxu0 0.0
        %2366 = vmatprep.subr.mxu0 0.0
        %2367 = vmatpush1.msra.mxu0 0.0
        %2368 = vmatprep.subr.mxu0 0.0
        %2369 = vmatpush1.msra.mxu0 0.0
        %2370 = vmatprep.subr.mxu0 0.0
        %2371 = vmatpush1.msra.mxu0 0.0
        %2372 = vmatprep.subr.mxu0 0.0
        %2373 = vmatpush1.msra.mxu0 0.0
        %2374 = vmatprep.subr.mxu0 0.0
        %2375 = vmatpush1.msra.mxu0 0.0
        %2376 = vmatprep.subr.mxu0 0.0
        %2377 = vmatpush1.msra.mxu0 0.0
        %2378 = vmatprep.subr.mxu0 0.0
        %2379 = vmatpush1.msra.mxu0 0.0
        %2380 = vmatprep.subr.mxu0 0.0
        %2381 = vmatpush1.msra.mxu0 0.0
        %2382 = vmatprep.subr.mxu0 0.0
        %2383 = vmatpush1.msra.mxu0 0.0
        %2384 = vmatprep.subr.mxu0 0.0
        %2385 = vmatpush1.msra.mxu0 0.0
        %2386 = vmatprep.mubr.f32.mxu0 0.0
        %2387 = vmatmul.mubr.f32.gmra.mrb[0].mxu0 %v2320
        %v2388 = vpop.f32.mrb[0].mxu0
        %v2389 = vadd.f32 0.0, %v2388
        %v2390 = vpop.f32.mrb[0].mxu0
        %2391 = vdwg.mxu0
        %v2393 = vsel %vm1883, %v2204, 0
        %2395 = vmatprep.subr.mxu0 0.0
        %2396 = vmatpush1.msra.mxu0 %v2222
        %2397 = vmatprep.subr.mxu0 0.0
        %2398 = vmatpush1.msra.mxu0 %v2223
        %2399 = vmatprep.subr.mxu0 0.0
        %2400 = vmatpush1.msra.mxu0 %v2224
        %2401 = vmatprep.subr.mxu0 0.0
        %2402 = vmatpush1.msra.mxu0 %v2225
        %2403 = vmatprep.subr.mxu0 0.0
        %2404 = vmatpush1.msra.mxu0 0.0
        %2405 = vmatprep.subr.mxu0 0.0
        %2406 = vmatpush1.msra.mxu0 0.0
        %2407 = vmatprep.subr.mxu0 0.0
        %2408 = vmatpush1.msra.mxu0 0.0
        %2409 = vmatprep.subr.mxu0 0.0
        %2410 = vmatpush1.msra.mxu0 0.0
        %2411 = vmatprep.subr.mxu0 0.0
        %2412 = vmatpush1.msra.mxu0 0.0
        %2413 = vmatprep.subr.mxu0 0.0
        %2414 = vmatpush1.msra.mxu0 0.0
        %2415 = vmatprep.subr.mxu0 0.0
        %2416 = vmatpush1.msra.mxu0 0.0
        %2417 = vmatprep.subr.mxu0 0.0
        %2418 = vmatpush1.msra.mxu0 0.0
        %2419 = vmatprep.subr.mxu0 0.0
        %2420 = vmatpush1.msra.mxu0 0.0
        %2421 = vmatprep.subr.mxu0 0.0
        %2422 = vmatpush1.msra.mxu0 0.0
        %2423 = vmatprep.subr.mxu0 0.0
        %2424 = vmatpush1.msra.mxu0 0.0
        %2425 = vmatprep.subr.mxu0 0.0
        %2426 = vmatpush1.msra.mxu0 0.0
        %2427 = vmatprep.subr.mxu0 0.0
        %2428 = vmatpush1.msra.mxu0 0.0
        %2429 = vmatprep.subr.mxu0 0.0
        %2430 = vmatpush1.msra.mxu0 0.0
        %2431 = vmatprep.subr.mxu0 0.0
        %2432 = vmatpush1.msra.mxu0 0.0
        %2433 = vmatprep.subr.mxu0 0.0
        %2434 = vmatpush1.msra.mxu0 0.0
        %2435 = vmatprep.subr.mxu0 0.0
        %2436 = vmatpush1.msra.mxu0 0.0
        %2437 = vmatprep.subr.mxu0 0.0
        %2438 = vmatpush1.msra.mxu0 0.0
        %2439 = vmatprep.subr.mxu0 0.0
        %2440 = vmatpush1.msra.mxu0 0.0
        %2441 = vmatprep.subr.mxu0 0.0
        %2442 = vmatpush1.msra.mxu0 0.0
        %2443 = vmatprep.subr.mxu0 0.0
        %2444 = vmatpush1.msra.mxu0 0.0
        %2445 = vmatprep.subr.mxu0 0.0
        %2446 = vmatpush1.msra.mxu0 0.0
        %2447 = vmatprep.subr.mxu0 0.0
        %2448 = vmatpush1.msra.mxu0 0.0
        %2449 = vmatprep.subr.mxu0 0.0
        %2450 = vmatpush1.msra.mxu0 0.0
        %2451 = vmatprep.subr.mxu0 0.0
        %2452 = vmatpush1.msra.mxu0 0.0
        %2453 = vmatprep.subr.mxu0 0.0
        %2454 = vmatpush1.msra.mxu0 0.0
        %2455 = vmatprep.subr.mxu0 0.0
        %2456 = vmatpush1.msra.mxu0 0.0
        %2457 = vmatprep.subr.mxu0 0.0
        %2458 = vmatpush1.msra.mxu0 0.0
        %2459 = vmatprep.mubr.f32.mxu0 0.0
        %2460 = vmatmul.mubr.f32.gmra.mrb[0].mxu0 %v2393
        %v2461 = vpop.f32.mrb[0].mxu0
        %v2462 = vadd.f32 0.0, %v2461
        %v2463 = vpop.f32.mrb[0].mxu0
        %2464 = vdwg.mxu0
        %v2466 = vsel %vm1883, %v2205, 0
        %2468 = vmatprep.subr.mxu0 0.0
        %2469 = vmatpush1.msra.mxu0 %v2226
        %2470 = vmatprep.subr.mxu0 0.0
        %2471 = vmatpush1.msra.mxu0 %v2227
        %2472 = vmatprep.subr.mxu0 0.0
        %2473 = vmatpush1.msra.mxu0 %v2228
        %2474 = vmatprep.subr.mxu0 0.0
        %2475 = vmatpush1.msra.mxu0 %v2229
        %2476 = vmatprep.subr.mxu0 0.0
        %2477 = vmatpush1.msra.mxu0 0.0
        %2478 = vmatprep.subr.mxu0 0.0
        %2479 = vmatpush1.msra.mxu0 0.0
        %2480 = vmatprep.subr.mxu0 0.0
        %2481 = vmatpush1.msra.mxu0 0.0
        %2482 = vmatprep.subr.mxu0 0.0
        %2483 = vmatpush1.msra.mxu0 0.0
        %2484 = vmatprep.subr.mxu0 0.0
        %2485 = vmatpush1.msra.mxu0 0.0
        %2486 = vmatprep.subr.mxu0 0.0
        %2487 = vmatpush1.msra.mxu0 0.0
        %2488 = vmatprep.subr.mxu0 0.0
        %2489 = vmatpush1.msra.mxu0 0.0
        %2490 = vmatprep.subr.mxu0 0.0
        %2491 = vmatpush1.msra.mxu0 0.0
        %2492 = vmatprep.subr.mxu0 0.0
        %2493 = vmatpush1.msra.mxu0 0.0
        %2494 = vmatprep.subr.mxu0 0.0
        %2495 = vmatpush1.msra.mxu0 0.0
        %2496 = vmatprep.subr.mxu0 0.0
        %2497 = vmatpush1.msra.mxu0 0.0
        %2498 = vmatprep.subr.mxu0 0.0
        %2499 = vmatpush1.msra.mxu0 0.0
        %2500 = vmatprep.subr.mxu0 0.0
        %2501 = vmatpush1.msra.mxu0 0.0
        %2502 = vmatprep.subr.mxu0 0.0
        %2503 = vmatpush1.msra.mxu0 0.0
        %2504 = vmatprep.subr.mxu0 0.0
        %2505 = vmatpush1.msra.mxu0 0.0
        %2506 = vmatprep.subr.mxu0 0.0
        %2507 = vmatpush1.msra.mxu0 0.0
        %2508 = vmatprep.subr.mxu0 0.0
        %2509 = vmatpush1.msra.mxu0 0.0
        %2510 = vmatprep.subr.mxu0 0.0
        %2511 = vmatpush1.msra.mxu0 0.0
        %2512 = vmatprep.subr.mxu0 0.0
        %2513 = vmatpush1.msra.mxu0 0.0
        %2514 = vmatprep.subr.mxu0 0.0
        %2515 = vmatpush1.msra.mxu0 0.0
        %2516 = vmatprep.subr.mxu0 0.0
        %2517 = vmatpush1.msra.mxu0 0.0
        %2518 = vmatprep.subr.mxu0 0.0
        %2519 = vmatpush1.msra.mxu0 0.0
        %2520 = vmatprep.subr.mxu0 0.0
        %2521 = vmatpush1.msra.mxu0 0.0
        %2522 = vmatprep.subr.mxu0 0.0
        %2523 = vmatpush1.msra.mxu0 0.0
        %2524 = vmatprep.subr.mxu0 0.0
        %2525 = vmatpush1.msra.mxu0 0.0
        %2526 = vmatprep.subr.mxu0 0.0
        %2527 = vmatpush1.msra.mxu0 0.0
        %2528 = vmatprep.subr.mxu0 0.0
        %2529 = vmatpush1.msra.mxu0 0.0
        %2530 = vmatprep.subr.mxu0 0.0
        %2531 = vmatpush1.msra.mxu0 0.0
        %2532 = vmatprep.mubr.f32.mxu0 0.0
        %2533 = vmatmul.mubr.f32.gmra.mrb[0].mxu0 %v2466
        %v2534 = vpop.f32.mrb[0].mxu0
        %v2535 = vadd.f32 0.0, %v2534
        %v2536 = vpop.f32.mrb[0].mxu0
        %2537 = vdwg.mxu0
        %v2539 = vsel %vm1883, %v2206, 0
        %2541 = vmatprep.subr.mxu0 0.0
        %2542 = vmatpush1.msra.mxu0 %v2230
        %2543 = vmatprep.subr.mxu0 0.0
        %2544 = vmatpush1.msra.mxu0 %v2231
        %2545 = vmatprep.subr.mxu0 0.0
        %2546 = vmatpush1.msra.mxu0 %v2232
        %2547 = vmatprep.subr.mxu0 0.0
        %2548 = vmatpush1.msra.mxu0 %v2233
        %2549 = vmatprep.subr.mxu0 0.0
        %2550 = vmatpush1.msra.mxu0 0.0
        %2551 = vmatprep.subr.mxu0 0.0
        %2552 = vmatpush1.msra.mxu0 0.0
        %2553 = vmatprep.subr.mxu0 0.0
        %2554 = vmatpush1.msra.mxu0 0.0
        %2555 = vmatprep.subr.mxu0 0.0
        %2556 = vmatpush1.msra.mxu0 0.0
        %2557 = vmatprep.subr.mxu0 0.0
        %2558 = vmatpush1.msra.mxu0 0.0
        %2559 = vmatprep.subr.mxu0 0.0
        %2560 = vmatpush1.msra.mxu0 0.0
        %2561 = vmatprep.subr.mxu0 0.0
        %2562 = vmatpush1.msra.mxu0 0.0
        %2563 = vmatprep.subr.mxu0 0.0
        %2564 = vmatpush1.msra.mxu0 0.0
        %2565 = vmatprep.subr.mxu0 0.0
        %2566 = vmatpush1.msra.mxu0 0.0
        %2567 = vmatprep.subr.mxu0 0.0
        %2568 = vmatpush1.msra.mxu0 0.0
        %2569 = vmatprep.subr.mxu0 0.0
        %2570 = vmatpush1.msra.mxu0 0.0
        %2571 = vmatprep.subr.mxu0 0.0
        %2572 = vmatpush1.msra.mxu0 0.0
        %2573 = vmatprep.subr.mxu0 0.0
        %2574 = vmatpush1.msra.mxu0 0.0
        %2575 = vmatprep.subr.mxu0 0.0
        %2576 = vmatpush1.msra.mxu0 0.0
        %2577 = vmatprep.subr.mxu0 0.0
        %2578 = vmatpush1.msra.mxu0 0.0
        %2579 = vmatprep.subr.mxu0 0.0
        %2580 = vmatpush1.msra.mxu0 0.0
        %2581 = vmatprep.subr.mxu0 0.0
        %2582 = vmatpush1.msra.mxu0 0.0
        %2583 = vmatprep.subr.mxu0 0.0
        %2584 = vmatpush1.msra.mxu0 0.0
        %2585 = vmatprep.subr.mxu0 0.0
        %2586 = vmatpush1.msra.mxu0 0.0
        %2587 = vmatprep.subr.mxu0 0.0
        %2588 = vmatpush1.msra.mxu0 0.0
        %2589 = vmatprep.subr.mxu0 0.0
        %2590 = vmatpush1.msra.mxu0 0.0
        %2591 = vmatprep.subr.mxu0 0.0
        %2592 = vmatpush1.msra.mxu0 0.0
        %2593 = vmatprep.subr.mxu0 0.0
        %2594 = vmatpush1.msra.mxu0 0.0
        %2595 = vmatprep.subr.mxu0 0.0
        %2596 = vmatpush1.msra.mxu0 0.0
        %2597 = vmatprep.subr.mxu0 0.0
        %2598 = vmatpush1.msra.mxu0 0.0
        %2599 = vmatprep.subr.mxu0 0.0
        %2600 = vmatpush1.msra.mxu0 0.0
        %2601 = vmatprep.subr.mxu0 0.0
        %2602 = vmatpush1.msra.mxu0 0.0
        %2603 = vmatprep.subr.mxu0 0.0
        %2604 = vmatpush1.msra.mxu0 0.0
        %2605 = vmatprep.mubr.f32.mxu0 0.0
        %2606 = vmatmul.mubr.f32.gmra.mrb[0].mxu0 %v2539
        %v2607 = vpop.f32.mrb[0].mxu0
        %v2608 = vadd.f32 0.0, %v2607
        %v2609 = vpop.f32.mrb[0].mxu0
        %2610 = vdwg.mxu0
        %v2612 = vsel %vm1883, %v2207, 0
        %2614 = vmatprep.subr.mxu0 0.0
        %2615 = vmatpush1.msra.mxu0 %v2234
        %2616 = vmatprep.subr.mxu0 0.0
        %2617 = vmatpush1.msra.mxu0 %v2235
        %2618 = vmatprep.subr.mxu0 0.0
        %2619 = vmatpush1.msra.mxu0 %v2236
        %2620 = vmatprep.subr.mxu0 0.0
        %2621 = vmatpush1.msra.mxu0 %v2237
        %2622 = vmatprep.subr.mxu0 0.0
        %2623 = vmatpush1.msra.mxu0 0.0
        %2624 = vmatprep.subr.mxu0 0.0
        %2625 = vmatpush1.msra.mxu0 0.0
        %2626 = vmatprep.subr.mxu0 0.0
        %2627 = vmatpush1.msra.mxu0 0.0
        %2628 = vmatprep.subr.mxu0 0.0
        %2629 = vmatpush1.msra.mxu0 0.0
        %2630 = vmatprep.subr.mxu0 0.0
        %2631 = vmatpush1.msra.mxu0 0.0
        %2632 = vmatprep.subr.mxu0 0.0
        %2633 = vmatpush1.msra.mxu0 0.0
        %2634 = vmatprep.subr.mxu0 0.0
        %2635 = vmatpush1.msra.mxu0 0.0
        %2636 = vmatprep.subr.mxu0 0.0
        %2637 = vmatpush1.msra.mxu0 0.0
        %2638 = vmatprep.subr.mxu0 0.0
        %2639 = vmatpush1.msra.mxu0 0.0
        %2640 = vmatprep.subr.mxu0 0.0
        %2641 = vmatpush1.msra.mxu0 0.0
        %2642 = vmatprep.subr.mxu0 0.0
        %2643 = vmatpush1.msra.mxu0 0.0
        %2644 = vmatprep.subr.mxu0 0.0
        %2645 = vmatpush1.msra.mxu0 0.0
        %2646 = vmatprep.subr.mxu0 0.0
        %2647 = vmatpush1.msra.mxu0 0.0
        %2648 = vmatprep.subr.mxu0 0.0
        %2649 = vmatpush1.msra.mxu0 0.0
        %2650 = vmatprep.subr.mxu0 0.0
        %2651 = vmatpush1.msra.mxu0 0.0
        %2652 = vmatprep.subr.mxu0 0.0
        %2653 = vmatpush1.msra.mxu0 0.0
        %2654 = vmatprep.subr.mxu0 0.0
        %2655 = vmatpush1.msra.mxu0 0.0
        %2656 = vmatprep.subr.mxu0 0.0
        %2657 = vmatpush1.msra.mxu0 0.0
        %2658 = vmatprep.subr.mxu0 0.0
        %2659 = vmatpush1.msra.mxu0 0.0
        %2660 = vmatprep.subr.mxu0 0.0
        %2661 = vmatpush1.msra.mxu0 0.0
        %2662 = vmatprep.subr.mxu0 0.0
        %2663 = vmatpush1.msra.mxu0 0.0
        %2664 = vmatprep.subr.mxu0 0.0
        %2665 = vmatpush1.msra.mxu0 0.0
        %2666 = vmatprep.subr.mxu0 0.0
        %2667 = vmatpush1.msra.mxu0 0.0
        %2668 = vmatprep.subr.mxu0 0.0
        %2669 = vmatpush1.msra.mxu0 0.0
        %2670 = vmatprep.subr.mxu0 0.0
        %2671 = vmatpush1.msra.mxu0 0.0
        %2672 = vmatprep.subr.mxu0 0.0
        %2673 = vmatpush1.msra.mxu0 0.0
        %2674 = vmatprep.subr.mxu0 0.0
        %2675 = vmatpush1.msra.mxu0 0.0
        %2676 = vmatprep.subr.mxu0 0.0
        %2677 = vmatpush1.msra.mxu0 0.0
        %2678 = vmatprep.mubr.f32.mxu0 0.0
        %2679 = vmatmul.mubr.f32.gmra.mrb[0].mxu0 %v2612
        %v2680 = vpop.f32.mrb[0].mxu0
        %v2681 = vadd.f32 0.0, %v2680
        %v2682 = vpop.f32.mrb[0].mxu0
        %2683 = vdwg.mxu0
        %v2685 = vsel %vm1883, %v2208, 0
        %2687 = vmatprep.subr.mxu0 0.0
        %2688 = vmatpush1.msra.mxu0 %v2238
        %2689 = vmatprep.subr.mxu0 0.0
        %2690 = vmatpush1.msra.mxu0 %v2239
        %2691 = vmatprep.subr.mxu0 0.0
        %2692 = vmatpush1.msra.mxu0 %v2240
        %2693 = vmatprep.subr.mxu0 0.0
        %2694 = vmatpush1.msra.mxu0 %v2241
        %2695 = vmatprep.subr.mxu0 0.0
        %2696 = vmatpush1.msra.mxu0 0.0
        %2697 = vmatprep.subr.mxu0 0.0
        %2698 = vmatpush1.msra.mxu0 0.0
        %2699 = vmatprep.subr.mxu0 0.0
        %2700 = vmatpush1.msra.mxu0 0.0
        %2701 = vmatprep.subr.mxu0 0.0
        %2702 = vmatpush1.msra.mxu0 0.0
        %2703 = vmatprep.subr.mxu0 0.0
        %2704 = vmatpush1.msra.mxu0 0.0
        %2705 = vmatprep.subr.mxu0 0.0
        %2706 = vmatpush1.msra.mxu0 0.0
        %2707 = vmatprep.subr.mxu0 0.0
        %2708 = vmatpush1.msra.mxu0 0.0
        %2709 = vmatprep.subr.mxu0 0.0
        %2710 = vmatpush1.msra.mxu0 0.0
        %2711 = vmatprep.subr.mxu0 0.0
        %2712 = vmatpush1.msra.mxu0 0.0
        %2713 = vmatprep.subr.mxu0 0.0
        %2714 = vmatpush1.msra.mxu0 0.0
        %2715 = vmatprep.subr.mxu0 0.0
        %2716 = vmatpush1.msra.mxu0 0.0
        %2717 = vmatprep.subr.mxu0 0.0
        %2718 = vmatpush1.msra.mxu0 0.0
        %2719 = vmatprep.subr.mxu0 0.0
        %2720 = vmatpush1.msra.mxu0 0.0
        %2721 = vmatprep.subr.mxu0 0.0
        %2722 = vmatpush1.msra.mxu0 0.0
        %2723 = vmatprep.subr.mxu0 0.0
        %2724 = vmatpush1.msra.mxu0 0.0
        %2725 = vmatprep.subr.mxu0 0.0
        %2726 = vmatpush1.msra.mxu0 0.0
        %2727 = vmatprep.subr.mxu0 0.0
        %2728 = vmatpush1.msra.mxu0 0.0
        %2729 = vmatprep.subr.mxu0 0.0
        %2730 = vmatpush1.msra.mxu0 0.0
        %2731 = vmatprep.subr.mxu0 0.0
        %2732 = vmatpush1.msra.mxu0 0.0
        %2733 = vmatprep.subr.mxu0 0.0
        %2734 = vmatpush1.msra.mxu0 0.0
        %2735 = vmatprep.subr.mxu0 0.0
        %2736 = vmatpush1.msra.mxu0 0.0
        %2737 = vmatprep.subr.mxu0 0.0
        %2738 = vmatpush1.msra.mxu0 0.0
        %2739 = vmatprep.subr.mxu0 0.0
        %2740 = vmatpush1.msra.mxu0 0.0
        %2741 = vmatprep.subr.mxu0 0.0
        %2742 = vmatpush1.msra.mxu0 0.0
        %2743 = vmatprep.subr.mxu0 0.0
        %2744 = vmatpush1.msra.mxu0 0.0
        %2745 = vmatprep.subr.mxu0 0.0
        %2746 = vmatpush1.msra.mxu0 0.0
        %2747 = vmatprep.subr.mxu0 0.0
        %2748 = vmatpush1.msra.mxu0 0.0
        %2749 = vmatprep.subr.mxu0 0.0
        %2750 = vmatpush1.msra.mxu0 0.0
        %2751 = vmatprep.mubr.f32.mxu0 0.0
        %2752 = vmatmul.mubr.f32.gmra.mrb[0].mxu0 %v2685
        %v2753 = vpop.f32.mrb[0].mxu0
        %v2754 = vadd.f32 0.0, %v2753
        %v2755 = vpop.f32.mrb[0].mxu0
        %2756 = vdwg.mxu0
        %v2758 = vsel %vm1883, %v2209, 0
        %2760 = vmatprep.subr.mxu0 0.0
        %2761 = vmatpush1.msra.mxu0 %v2242
        %2762 = vmatprep.subr.mxu0 0.0
        %2763 = vmatpush1.msra.mxu0 %v2243
        %2764 = vmatprep.subr.mxu0 0.0
        %2765 = vmatpush1.msra.mxu0 %v2244
        %2766 = vmatprep.subr.mxu0 0.0
        %2767 = vmatpush1.msra.mxu0 %v2245
        %2768 = vmatprep.subr.mxu0 0.0
        %2769 = vmatpush1.msra.mxu0 0.0
        %2770 = vmatprep.subr.mxu0 0.0
        %2771 = vmatpush1.msra.mxu0 0.0
        %2772 = vmatprep.subr.mxu0 0.0
        %2773 = vmatpush1.msra.mxu0 0.0
        %2774 = vmatprep.subr.mxu0 0.0
        %2775 = vmatpush1.msra.mxu0 0.0
        %2776 = vmatprep.subr.mxu0 0.0
        %2777 = vmatpush1.msra.mxu0 0.0
        %2778 = vmatprep.subr.mxu0 0.0
        %2779 = vmatpush1.msra.mxu0 0.0
        %2780 = vmatprep.subr.mxu0 0.0
        %2781 = vmatpush1.msra.mxu0 0.0
        %2782 = vmatprep.subr.mxu0 0.0
        %2783 = vmatpush1.msra.mxu0 0.0
        %2784 = vmatprep.subr.mxu0 0.0
        %2785 = vmatpush1.msra.mxu0 0.0
        %2786 = vmatprep.subr.mxu0 0.0
        %2787 = vmatpush1.msra.mxu0 0.0
        %2788 = vmatprep.subr.mxu0 0.0
        %2789 = vmatpush1.msra.mxu0 0.0
        %2790 = vmatprep.subr.mxu0 0.0
        %2791 = vmatpush1.msra.mxu0 0.0
        %2792 = vmatprep.subr.mxu0 0.0
        %2793 = vmatpush1.msra.mxu0 0.0
        %2794 = vmatprep.subr.mxu0 0.0
        %2795 = vmatpush1.msra.mxu0 0.0
        %2796 = vmatprep.subr.mxu0 0.0
        %2797 = vmatpush1.msra.mxu0 0.0
        %2798 = vmatprep.subr.mxu0 0.0
        %2799 = vmatpush1.msra.mxu0 0.0
        %2800 = vmatprep.subr.mxu0 0.0
        %2801 = vmatpush1.msra.mxu0 0.0
        %2802 = vmatprep.subr.mxu0 0.0
        %2803 = vmatpush1.msra.mxu0 0.0
        %2804 = vmatprep.subr.mxu0 0.0
        %2805 = vmatpush1.msra.mxu0 0.0
        %2806 = vmatprep.subr.mxu0 0.0
        %2807 = vmatpush1.msra.mxu0 0.0
        %2808 = vmatprep.subr.mxu0 0.0
        %2809 = vmatpush1.msra.mxu0 0.0
        %2810 = vmatprep.subr.mxu0 0.0
        %2811 = vmatpush1.msra.mxu0 0.0
        %2812 = vmatprep.subr.mxu0 0.0
        %2813 = vmatpush1.msra.mxu0 0.0
        %2814 = vmatprep.subr.mxu0 0.0
        %2815 = vmatpush1.msra.mxu0 0.0
        %2816 = vmatprep.subr.mxu0 0.0
        %2817 = vmatpush1.msra.mxu0 0.0
        %2818 = vmatprep.subr.mxu0 0.0
        %2819 = vmatpush1.msra.mxu0 0.0
        %2820 = vmatprep.subr.mxu0 0.0
        %2821 = vmatpush1.msra.mxu0 0.0
        %2822 = vmatprep.subr.mxu0 0.0
        %2823 = vmatpush1.msra.mxu0 0.0
        %2824 = vmatprep.mubr.f32.mxu0 0.0
        %2825 = vmatmul.mubr.f32.gmra.mrb[0].mxu0 %v2758
        %v2826 = vpop.f32.mrb[0].mxu0
        %v2827 = vadd.f32 0.0, %v2826
        %v2828 = vpop.f32.mrb[0].mxu0
        %2829 = vdwg.mxu0
        %v2830 = vadd.f32 %v2316, %v1123
        %v2831 = vadd.f32 %v2389, %v1124
        %v2832 = vadd.f32 %v2462, %v1125
        %v2833 = vadd.f32 %v2535, %v1126
        %v2834 = vadd.f32 %v2608, %v1127
        %v2835 = vadd.f32 %v2681, %v1128
        %v2836 = vadd.f32 %v2754, %v1129
        %v2837 = vadd.f32 %v2827, %v1130
        %v2838 = vld [vmem:[%s25] sm:$0xff]
        %v2839 = vld [vmem:[%s25 + $0x8] sm:$0xff]
        %v2840 = vld [vmem:[%s25 + $0x10] sm:$0xff]
        %v2841 = vld [vmem:[%s25 + $0x18] sm:$0xff]
        %v2842 = vld [vmem:[%s25 + $0x20] sm:$0xff]
        %v2843 = vld [vmem:[%s25 + $0x28] sm:$0xff]
        %v2844 = vld [vmem:[%s25 + $0x30] sm:$0xff]
        %v2845 = vld [vmem:[%s25 + $0x38] sm:$0xff]
        %s2846 = scalar_lea.vmem %s25, 64
        %v2847 = vld [vmem:[%s2846] sm:$0xff]
        %v2848 = vld [vmem:[%s2846 + $0x8] sm:$0xff]
        %v2849 = vld [vmem:[%s2846 + $0x10] sm:$0xff]
        %v2850 = vld [vmem:[%s2846 + $0x18] sm:$0xff]
        %v2851 = vld [vmem:[%s2846 + $0x20] sm:$0xff]
        %v2852 = vld [vmem:[%s2846 + $0x28] sm:$0xff]
        %v2853 = vld [vmem:[%s2846 + $0x30] sm:$0xff]
        %v2854 = vld [vmem:[%s2846 + $0x38] sm:$0xff]
        %v2855 = vsel %vm1140, %v2830, 0.0
        %v2856 = vsel %vm1140, %v2831, 0.0
        %v2857 = vadd.f32 %v2855, %v2856
        %v2858 = vsel %vm1140, %v2832, 0.0
        %v2859 = vadd.f32 %v2857, %v2858
        %v2860 = vsel %vm1140, %v2833, 0.0
        %v2861 = vadd.f32 %v2859, %v2860
        %v2862 = vsel %vm1140, %v2834, 0.0
        %v2863 = vadd.f32 %v2861, %v2862
        %v2864 = vsel %vm1140, %v2835, 0.0
        %v2865 = vadd.f32 %v2863, %v2864
        %v2866 = vsel %vm1140, %v2836, 0.0
        %v2867 = vadd.f32 %v2865, %v2866
        %v2868 = vsel %vm1140, %v2837, 0.0
        %v2869 = vadd.f32 %v2867, %v2868
        %2870 = vadd.xlane.f32.xlu0 %v2869
        %v2871 = vpop.xlane.xlu0 %2870
        %v2872 = vrot.slane %v2871, 4
        %v2873 = vadd.f32 %v2871, %v2872
        %v2874 = vrot.slane %v2873, 2
        %v2875 = vadd.f32 %v2873, %v2874
        %v2876 = vrot.slane %v2875, 1
        %v2877 = vadd.f32 %v2875, %v2876
        %s2878 = vtos %v2877
        %v2879 = vmul.f32 %v2830, %v2830
        %v2880 = vmul.f32 %v2831, %v2831
        %v2881 = vmul.f32 %v2832, %v2832
        %v2882 = vmul.f32 %v2833, %v2833
        %v2883 = vmul.f32 %v2834, %v2834
        %v2884 = vmul.f32 %v2835, %v2835
        %v2885 = vmul.f32 %v2836, %v2836
        %v2886 = vmul.f32 %v2837, %v2837
        %v2887 = vsel %vm1140, %v2879, 0.0
        %v2888 = vsel %vm1140, %v2880, 0.0
        %v2889 = vadd.f32 %v2887, %v2888
        %v2890 = vsel %vm1140, %v2881, 0.0
        %v2891 = vadd.f32 %v2889, %v2890
        %v2892 = vsel %vm1140, %v2882, 0.0
        %v2893 = vadd.f32 %v2891, %v2892
        %v2894 = vsel %vm1140, %v2883, 0.0
        %v2895 = vadd.f32 %v2893, %v2894
        %v2896 = vsel %vm1140, %v2884, 0.0
        %v2897 = vadd.f32 %v2895, %v2896
        %v2898 = vsel %vm1140, %v2885, 0.0
        %v2899 = vadd.f32 %v2897, %v2898
        %v2900 = vsel %vm1140, %v2886, 0.0
        %v2901 = vadd.f32 %v2899, %v2900
        %2902 = vadd.xlane.f32.xlu0 %v2901
        %v2903 = vpop.xlane.xlu0 %2902
        %v2904 = vrot.slane %v2903, 4
        %v2905 = vadd.f32 %v2903, %v2904
        %v2906 = vrot.slane %v2905, 2
        %v2907 = vadd.f32 %v2905, %v2906
        %v2908 = vrot.slane %v2907, 1
        %v2909 = vadd.f32 %v2907, %v2908
        %s2910 = vtos %v2909
        %v2911 = vrcp.pop 1024.0
        %s2912 = vtos %v2911
        %s2913 = smul.f32 %s2878, %s2912
        %v2914 = vrcp.pop 1024.0
        %s2915 = vtos %v2914
        %s2916 = smul.f32 %s2910, %s2915
        %s2917 = smul.f32 %s2913, %s2913
        %s2918 = ssub.f32 %s2916, %s2917
        %v2919 = vstv %s2913
        %v2920 = vsub.f32 %v2830, %v2919
        %v2921 = vsub.f32 %v2831, %v2919
        %v2922 = vsub.f32 %v2832, %v2919
        %v2923 = vsub.f32 %v2833, %v2919
        %v2924 = vsub.f32 %v2834, %v2919
        %v2925 = vsub.f32 %v2835, %v2919
        %v2926 = vsub.f32 %v2836, %v2919
        %v2927 = vsub.f32 %v2837, %v2919
        %s2928 = sadd.f32 %s2918, 1e-05
        %v2929 = vstv %s2928
        %v2930 = vrsqrt.pop %v2929
        %s2931 = vtos %v2930
        %v2932 = vstv %s2931
        %v2933 = vmul.f32 %v2920, %v2932
        %v2934 = vmul.f32 %v2921, %v2932
        %v2935 = vmul.f32 %v2922, %v2932
        %v2936 = vmul.f32 %v2923, %v2932
        %v2937 = vmul.f32 %v2924, %v2932
        %v2938 = vmul.f32 %v2925, %v2932
        %v2939 = vmul.f32 %v2926, %v2932
        %v2940 = vmul.f32 %v2927, %v2932
        %v2941 = vmul.f32 %v2933, %v2838
        %v2942 = vmul.f32 %v2934, %v2839
        %v2943 = vmul.f32 %v2935, %v2840
        %v2944 = vmul.f32 %v2936, %v2841
        %v2945 = vmul.f32 %v2937, %v2842
        %v2946 = vmul.f32 %v2938, %v2843
        %v2947 = vmul.f32 %v2939, %v2844
        %v2948 = vmul.f32 %v2940, %v2845
        %v2949 = vadd.f32 %v2941, %v2847
        %v2950 = vadd.f32 %v2942, %v2848
        %v2951 = vadd.f32 %v2943, %v2849
        %v2952 = vadd.f32 %v2944, %v2850
        %v2953 = vadd.f32 %v2945, %v2851
        %v2954 = vadd.f32 %v2946, %v2852
        %v2955 = vadd.f32 %v2947, %v2853
        %v2956 = vadd.f32 %v2948, %v2854
        %v2957 = vld [vmem:[%s23] sm:$0xff]
        %v2958 = vld [vmem:[%s23 + $0x8] sm:$0xff]
        %v2959 = vld [vmem:[%s23 + $0x10] sm:$0xff]
        %v2960 = vld [vmem:[%s23 + $0x18] sm:$0xff]
        %v2961 = vld [vmem:[%s23 + $0x20] sm:$0xff]
        %v2962 = vld [vmem:[%s23 + $0x28] sm:$0xff]
        %v2963 = vld [vmem:[%s23 + $0x30] sm:$0xff]
        %v2964 = vld [vmem:[%s23 + $0x38] sm:$0xff]
        %v2966 = vsel %vm1576, %v2957, 0
        %v2969 = vsel %vm1576, %v2958, 0
        %v2972 = vsel %vm1576, %v2959, 0
        %v2975 = vsel %vm1576, %v2960, 0
        %v2978 = vsel %vm1576, %v2961, 0
        %v2981 = vsel %vm1576, %v2962, 0
        %v2984 = vsel %vm1576, %v2963, 0
        %v2987 = vsel %vm1576, %v2964, 0
        %2989 = vmatprep.subr.mxu0 0.0
        %2990 = vmatpush1.msra.mxu0 %v2949
        %2991 = vmatprep.subr.mxu0 0.0
        %2992 = vmatpush1.msra.mxu0 %v2950
        %2993 = vmatprep.subr.mxu0 0.0
        %2994 = vmatpush1.msra.mxu0 %v2951
        %2995 = vmatprep.subr.mxu0 0.0
        %2996 = vmatpush1.msra.mxu0 %v2952
        %2997 = vmatprep.subr.mxu0 0.0
        %2998 = vmatpush1.msra.mxu0 %v2953
        %2999 = vmatprep.subr.mxu0 0.0
        %3000 = vmatpush1.msra.mxu0 %v2954
        %3001 = vmatprep.subr.mxu0 0.0
        %3002 = vmatpush1.msra.mxu0 %v2955
        %3003 = vmatprep.subr.mxu0 0.0
        %3004 = vmatpush1.msra.mxu0 %v2956
        %3005 = vmatprep.subr.mxu0 0.0
        %3006 = vmatpush1.msra.mxu0 0.0
        %3007 = vmatprep.subr.mxu0 0.0
        %3008 = vmatpush1.msra.mxu0 0.0
        %3009 = vmatprep.subr.mxu0 0.0
        %3010 = vmatpush1.msra.mxu0 0.0
        %3011 = vmatprep.subr.mxu0 0.0
        %3012 = vmatpush1.msra.mxu0 0.0
        %3013 = vmatprep.subr.mxu0 0.0
        %3014 = vmatpush1.msra.mxu0 0.0
        %3015 = vmatprep.subr.mxu0 0.0
        %3016 = vmatpush1.msra.mxu0 0.0
        %3017 = vmatprep.subr.mxu0 0.0
        %3018 = vmatpush1.msra.mxu0 0.0
        %3019 = vmatprep.subr.mxu0 0.0
        %3020 = vmatpush1.msra.mxu0 0.0
        %3021 = vmatprep.subr.mxu0 0.0
        %3022 = vmatpush1.msra.mxu0 0.0
        %3023 = vmatprep.subr.mxu0 0.0
        %3024 = vmatpush1.msra.mxu0 0.0
        %3025 = vmatprep.subr.mxu0 0.0
        %3026 = vmatpush1.msra.mxu0 0.0
        %3027 = vmatprep.subr.mxu0 0.0
        %3028 = vmatpush1.msra.mxu0 0.0
        %3029 = vmatprep.subr.mxu0 0.0
        %3030 = vmatpush1.msra.mxu0 0.0
        %3031 = vmatprep.subr.mxu0 0.0
        %3032 = vmatpush1.msra.mxu0 0.0
        %3033 = vmatprep.subr.mxu0 0.0
        %3034 = vmatpush1.msra.mxu0 0.0
        %3035 = vmatprep.subr.mxu0 0.0
        %3036 = vmatpush1.msra.mxu0 0.0
        %3037 = vmatprep.subr.mxu0 0.0
        %3038 = vmatpush1.msra.mxu0 0.0
        %3039 = vmatprep.subr.mxu0 0.0
        %3040 = vmatpush1.msra.mxu0 0.0
        %3041 = vmatprep.subr.mxu0 0.0
        %3042 = vmatpush1.msra.mxu0 0.0
        %3043 = vmatprep.subr.mxu0 0.0
        %3044 = vmatpush1.msra.mxu0 0.0
        %3045 = vmatprep.subr.mxu0 0.0
        %3046 = vmatpush1.msra.mxu0 0.0
        %3047 = vmatprep.subr.mxu0 0.0
        %3048 = vmatpush1.msra.mxu0 0.0
        %3049 = vmatprep.subr.mxu0 0.0
        %3050 = vmatpush1.msra.mxu0 0.0
        %3051 = vmatprep.subr.mxu0 0.0
        %3052 = vmatpush1.msra.mxu0 0.0
        %3053 = vmatprep.mubr.f32.mxu0 0.0
        %3054 = vmatmul.mubr.f32.gmra.mrb[0].mxu0 %v2966
        %v3055 = vpop.f32.mrb[0].mxu0
        %v3056 = vadd.f32 0.0, %v3055
        %v3057 = vpop.f32.mrb[0].mxu0
        %3058 = vmatprep.mubr.f32.mxu0 0.0
        %3059 = vmatmul.mubr.f32.gmra.mrb[0].mxu0 %v2969
        %v3060 = vpop.f32.mrb[0].mxu0
        %v3061 = vadd.f32 0.0, %v3060
        %v3062 = vpop.f32.mrb[0].mxu0
        %3063 = vmatprep.mubr.f32.mxu0 0.0
        %3064 = vmatmul.mubr.f32.gmra.mrb[0].mxu0 %v2972
        %v3065 = vpop.f32.mrb[0].mxu0
        %v3066 = vadd.f32 0.0, %v3065
        %v3067 = vpop.f32.mrb[0].mxu0
        %3068 = vmatprep.mubr.f32.mxu0 0.0
        %3069 = vmatmul.mubr.f32.gmra.mrb[0].mxu0 %v2975
        %v3070 = vpop.f32.mrb[0].mxu0
        %v3071 = vadd.f32 0.0, %v3070
        %v3072 = vpop.f32.mrb[0].mxu0
        %3073 = vmatprep.mubr.f32.mxu0 0.0
        %3074 = vmatmul.mubr.f32.gmra.mrb[0].mxu0 %v2978
        %v3075 = vpop.f32.mrb[0].mxu0
        %v3076 = vadd.f32 0.0, %v3075
        %v3077 = vpop.f32.mrb[0].mxu0
        %3078 = vmatprep.mubr.f32.mxu0 0.0
        %3079 = vmatmul.mubr.f32.gmra.mrb[0].mxu0 %v2981
        %v3080 = vpop.f32.mrb[0].mxu0
        %v3081 = vadd.f32 0.0, %v3080
        %v3082 = vpop.f32.mrb[0].mxu0
        %3083 = vmatprep.mubr.f32.mxu0 0.0
        %3084 = vmatmul.mubr.f32.gmra.mrb[0].mxu0 %v2984
        %v3085 = vpop.f32.mrb[0].mxu0
        %v3086 = vadd.f32 0.0, %v3085
        %v3087 = vpop.f32.mrb[0].mxu0
        %3088 = vmatprep.mubr.f32.mxu0 0.0
        %3089 = vmatmul.mubr.f32.gmra.mrb[0].mxu0 %v2987
        %v3090 = vpop.f32.mrb[0].mxu0
        %v3091 = vadd.f32 0.0, %v3090
        %v3092 = vpop.f32.mrb[0].mxu0
        %3093 = vdwg.mxu0
        %v3094 = vld [vmem:[#allocation16] sm:$0xff]
        %v3095 = vld [vmem:[#allocation16 + $0x8] sm:$0xff]
        %v3096 = vld [vmem:[#allocation17] sm:$0x1]
        %v3098 = vlaneseq
        %v3099 = vshrl.u32 %v3098, 7
        %v3100 = vsub.s32 0, %v3099
        %v3101 = vrot.slane %v3096, %v3100
        %v3104 = vsel %vm1140, %v3056, 0
        %v3107 = vsel %vm1140, %v3061, 0
        %v3110 = vsel %vm1140, %v3066, 0
        %v3113 = vsel %vm1140, %v3071, 0
        %v3116 = vsel %vm1140, %v3076, 0
        %v3119 = vsel %vm1140, %v3081, 0
        %v3122 = vsel %vm1140, %v3086, 0
        %v3125 = vsel %vm1140, %v3091, 0
        %3127 = vmatprep.subr.mxu0 0.0
        %3128 = vmatpush1.msra.mxu0 %v3094
        %3129 = vmatprep.subr.mxu0 0.0
        %3130 = vmatpush1.msra.mxu0 %v3095
        %3131 = vmatprep.subr.mxu0 0.0
        %3132 = vmatpush1.msra.mxu0 0.0
        %3133 = vmatprep.subr.mxu0 0.0
        %3134 = vmatpush1.msra.mxu0 0.0
        %3135 = vmatprep.subr.mxu0 0.0
        %3136 = vmatpush1.msra.mxu0 0.0
        %3137 = vmatprep.subr.mxu0 0.0
        %3138 = vmatpush1.msra.mxu0 0.0
        %3139 = vmatprep.subr.mxu0 0.0
        %3140 = vmatpush1.msra.mxu0 0.0
        %3141 = vmatprep.subr.mxu0 0.0
        %3142 = vmatpush1.msra.mxu0 0.0
        %3143 = vmatprep.subr.mxu0 0.0
        %3144 = vmatpush1.msra.mxu0 0.0
        %3145 = vmatprep.subr.mxu0 0.0
        %3146 = vmatpush1.msra.mxu0 0.0
        %3147 = vmatprep.subr.mxu0 0.0
        %3148 = vmatpush1.msra.mxu0 0.0
        %3149 = vmatprep.subr.mxu0 0.0
        %3150 = vmatpush1.msra.mxu0 0.0
        %3151 = vmatprep.subr.mxu0 0.0
        %3152 = vmatpush1.msra.mxu0 0.0
        %3153 = vmatprep.subr.mxu0 0.0
        %3154 = vmatpush1.msra.mxu0 0.0
        %3155 = vmatprep.subr.mxu0 0.0
        %3156 = vmatpush1.msra.mxu0 0.0
        %3157 = vmatprep.subr.mxu0 0.0
        %3158 = vmatpush1.msra.mxu0 0.0
        %3159 = vmatprep.subr.mxu0 0.0
        %3160 = vmatpush1.msra.mxu0 0.0
        %3161 = vmatprep.subr.mxu0 0.0
        %3162 = vmatpush1.msra.mxu0 0.0
        %3163 = vmatprep.subr.mxu0 0.0
        %3164 = vmatpush1.msra.mxu0 0.0
        %3165 = vmatprep.subr.mxu0 0.0
        %3166 = vmatpush1.msra.mxu0 0.0
        %3167 = vmatprep.subr.mxu0 0.0
        %3168 = vmatpush1.msra.mxu0 0.0
        %3169 = vmatprep.subr.mxu0 0.0
        %3170 = vmatpush1.msra.mxu0 0.0
        %3171 = vmatprep.subr.mxu0 0.0
        %3172 = vmatpush1.msra.mxu0 0.0
        %3173 = vmatprep.subr.mxu0 0.0
        %3174 = vmatpush1.msra.mxu0 0.0
        %3175 = vmatprep.subr.mxu0 0.0
        %3176 = vmatpush1.msra.mxu0 0.0
        %3177 = vmatprep.subr.mxu0 0.0
        %3178 = vmatpush1.msra.mxu0 0.0
        %3179 = vmatprep.subr.mxu0 0.0
        %3180 = vmatpush1.msra.mxu0 0.0
        %3181 = vmatprep.subr.mxu0 0.0
        %3182 = vmatpush1.msra.mxu0 0.0
        %3183 = vmatprep.subr.mxu0 0.0
        %3184 = vmatpush1.msra.mxu0 0.0
        %3185 = vmatprep.subr.mxu0 0.0
        %3186 = vmatpush1.msra.mxu0 0.0
        %3187 = vmatprep.subr.mxu0 0.0
        %3188 = vmatpush1.msra.mxu0 0.0
        %3189 = vmatprep.subr.mxu0 0.0
        %3190 = vmatpush1.msra.mxu0 0.0
        %3191 = vmatprep.mubr.f32.mxu0 0.0
        %3192 = vmatmul.mubr.f32.gmra.mrb[0].mxu0 %v3104
        %v3193 = vpop.f32.mrb[0].mxu0
        %v3194 = vadd.f32 %v3101, %v3193
        %v3195 = vpop.f32.mrb[0].mxu0
        %3196 = vmatprep.mubr.f32.mxu0 0.0
        %3197 = vmatmul.mubr.f32.gmra.mrb[0].mxu0 %v3107
        %v3198 = vpop.f32.mrb[0].mxu0
        %v3199 = vadd.f32 %v3101, %v3198
        %v3200 = vpop.f32.mrb[0].mxu0
        %3201 = vmatprep.mubr.f32.mxu0 0.0
        %3202 = vmatmul.mubr.f32.gmra.mrb[0].mxu0 %v3110
        %v3203 = vpop.f32.mrb[0].mxu0
        %v3204 = vadd.f32 %v3101, %v3203
        %v3205 = vpop.f32.mrb[0].mxu0
        %3206 = vmatprep.mubr.f32.mxu0 0.0
        %3207 = vmatmul.mubr.f32.gmra.mrb[0].mxu0 %v3113
        %v3208 = vpop.f32.mrb[0].mxu0
        %v3209 = vadd.f32 %v3101, %v3208
        %v3210 = vpop.f32.mrb[0].mxu0
        %3211 = vmatprep.mubr.f32.mxu0 0.0
        %3212 = vmatmul.mubr.f32.gmra.mrb[0].mxu0 %v3116
        %v3213 = vpop.f32.mrb[0].mxu0
        %v3214 = vadd.f32 %v3101, %v3213
        %v3215 = vpop.f32.mrb[0].mxu0
        %3216 = vmatprep.mubr.f32.mxu0 0.0
        %3217 = vmatmul.mubr.f32.gmra.mrb[0].mxu0 %v3119
        %v3218 = vpop.f32.mrb[0].mxu0
        %v3219 = vadd.f32 %v3101, %v3218
        %v3220 = vpop.f32.mrb[0].mxu0
        %3221 = vmatprep.mubr.f32.mxu0 0.0
        %3222 = vmatmul.mubr.f32.gmra.mrb[0].mxu0 %v3122
        %v3223 = vpop.f32.mrb[0].mxu0
        %v3224 = vadd.f32 %v3101, %v3223
        %v3225 = vpop.f32.mrb[0].mxu0
        %3226 = vmatprep.mubr.f32.mxu0 0.0
        %3227 = vmatmul.mubr.f32.gmra.mrb[0].mxu0 %v3125
        %v3228 = vpop.f32.mrb[0].mxu0
        %v3229 = vadd.f32 %v3101, %v3228
        %v3230 = vpop.f32.mrb[0].mxu0
        %3231 = vdwg.mxu0
        %v3232 = vld [vmem:[#allocation19] sm:$0xff]
        %v3233 = vld [vmem:[#allocation19 + $0x8] sm:$0xff]
        %v3234 = vld [vmem:[#allocation20] sm:$0x1]
        %v3236 = vlaneseq
        %v3237 = vshrl.u32 %v3236, 7
        %v3238 = vsub.s32 0, %v3237
        %v3239 = vrot.slane %v3234, %v3238
        %3241 = vmatprep.subr.mxu0 0.0
        %3242 = vmatpush1.msra.mxu0 %v3232
        %3243 = vmatprep.subr.mxu0 0.0
        %3244 = vmatpush1.msra.mxu0 %v3233
        %3245 = vmatprep.subr.mxu0 0.0
        %3246 = vmatpush1.msra.mxu0 0.0
        %3247 = vmatprep.subr.mxu0 0.0
        %3248 = vmatpush1.msra.mxu0 0.0
        %3249 = vmatprep.subr.mxu0 0.0
        %3250 = vmatpush1.msra.mxu0 0.0
        %3251 = vmatprep.subr.mxu0 0.0
        %3252 = vmatpush1.msra.mxu0 0.0
        %3253 = vmatprep.subr.mxu0 0.0
        %3254 = vmatpush1.msra.mxu0 0.0
        %3255 = vmatprep.subr.mxu0 0.0
        %3256 = vmatpush1.msra.mxu0 0.0
        %3257 = vmatprep.subr.mxu0 0.0
        %3258 = vmatpush1.msra.mxu0 0.0
        %3259 = vmatprep.subr.mxu0 0.0
        %3260 = vmatpush1.msra.mxu0 0.0
        %3261 = vmatprep.subr.mxu0 0.0
        %3262 = vmatpush1.msra.mxu0 0.0
        %3263 = vmatprep.subr.mxu0 0.0
        %3264 = vmatpush1.msra.mxu0 0.0
        %3265 = vmatprep.subr.mxu0 0.0
        %3266 = vmatpush1.msra.mxu0 0.0
        %3267 = vmatprep.subr.mxu0 0.0
        %3268 = vmatpush1.msra.mxu0 0.0
        %3269 = vmatprep.subr.mxu0 0.0
        %3270 = vmatpush1.msra.mxu0 0.0
        %3271 = vmatprep.subr.mxu0 0.0
        %3272 = vmatpush1.msra.mxu0 0.0
        %3273 = vmatprep.subr.mxu0 0.0
        %3274 = vmatpush1.msra.mxu0 0.0
        %3275 = vmatprep.subr.mxu0 0.0
        %3276 = vmatpush1.msra.mxu0 0.0
        %3277 = vmatprep.subr.mxu0 0.0
        %3278 = vmatpush1.msra.mxu0 0.0
        %3279 = vmatprep.subr.mxu0 0.0
        %3280 = vmatpush1.msra.mxu0 0.0
        %3281 = vmatprep.subr.mxu0 0.0
        %3282 = vmatpush1.msra.mxu0 0.0
        %3283 = vmatprep.subr.mxu0 0.0
        %3284 = vmatpush1.msra.mxu0 0.0
        %3285 = vmatprep.subr.mxu0 0.0
        %3286 = vmatpush1.msra.mxu0 0.0
        %3287 = vmatprep.subr.mxu0 0.0
        %3288 = vmatpush1.msra.mxu0 0.0
        %3289 = vmatprep.subr.mxu0 0.0
        %3290 = vmatpush1.msra.mxu0 0.0
        %3291 = vmatprep.subr.mxu0 0.0
        %3292 = vmatpush1.msra.mxu0 0.0
        %3293 = vmatprep.subr.mxu0 0.0
        %3294 = vmatpush1.msra.mxu0 0.0
        %3295 = vmatprep.subr.mxu0 0.0
        %3296 = vmatpush1.msra.mxu0 0.0
        %3297 = vmatprep.subr.mxu0 0.0
        %3298 = vmatpush1.msra.mxu0 0.0
        %3299 = vmatprep.subr.mxu0 0.0
        %3300 = vmatpush1.msra.mxu0 0.0
        %3301 = vmatprep.subr.mxu0 0.0
        %3302 = vmatpush1.msra.mxu0 0.0
        %3303 = vmatprep.subr.mxu0 0.0
        %3304 = vmatpush1.msra.mxu0 0.0
        %3305 = vmatprep.mubr.f32.mxu0 0.0
        %3306 = vmatmul.mubr.f32.gmra.mrb[0].mxu0 %v3104
        %v3307 = vpop.f32.mrb[0].mxu0
        %v3308 = vadd.f32 %v3239, %v3307
        %v3309 = vpop.f32.mrb[0].mxu0
        %3310 = vmatprep.mubr.f32.mxu0 0.0
        %3311 = vmatmul.mubr.f32.gmra.mrb[0].mxu0 %v3107
        %v3312 = vpop.f32.mrb[0].mxu0
        %v3313 = vadd.f32 %v3239, %v3312
        %v3314 = vpop.f32.mrb[0].mxu0
        %3315 = vmatprep.mubr.f32.mxu0 0.0
        %3316 = vmatmul.mubr.f32.gmra.mrb[0].mxu0 %v3110
        %v3317 = vpop.f32.mrb[0].mxu0
        %v3318 = vadd.f32 %v3239, %v3317
        %v3319 = vpop.f32.mrb[0].mxu0
        %3320 = vmatprep.mubr.f32.mxu0 0.0
        %3321 = vmatmul.mubr.f32.gmra.mrb[0].mxu0 %v3113
        %v3322 = vpop.f32.mrb[0].mxu0
        %v3323 = vadd.f32 %v3239, %v3322
        %v3324 = vpop.f32.mrb[0].mxu0
        %3325 = vmatprep.mubr.f32.mxu0 0.0
        %3326 = vmatmul.mubr.f32.gmra.mrb[0].mxu0 %v3116
        %v3327 = vpop.f32.mrb[0].mxu0
        %v3328 = vadd.f32 %v3239, %v3327
        %v3329 = vpop.f32.mrb[0].mxu0
        %3330 = vmatprep.mubr.f32.mxu0 0.0
        %3331 = vmatmul.mubr.f32.gmra.mrb[0].mxu0 %v3119
        %v3332 = vpop.f32.mrb[0].mxu0
        %v3333 = vadd.f32 %v3239, %v3332
        %v3334 = vpop.f32.mrb[0].mxu0
        %3335 = vmatprep.mubr.f32.mxu0 0.0
        %3336 = vmatmul.mubr.f32.gmra.mrb[0].mxu0 %v3122
        %v3337 = vpop.f32.mrb[0].mxu0
        %v3338 = vadd.f32 %v3239, %v3337
        %v3339 = vpop.f32.mrb[0].mxu0
        %3340 = vmatprep.mubr.f32.mxu0 0.0
        %3341 = vmatmul.mubr.f32.gmra.mrb[0].mxu0 %v3125
        %v3342 = vpop.f32.mrb[0].mxu0
        %v3343 = vadd.f32 %v3239, %v3342
        %v3344 = vpop.f32.mrb[0].mxu0
        %3345 = vdwg.mxu0
        %v3346 = vld [vmem:[#allocation22] sm:$0xff]
        %v3347 = vld [vmem:[#allocation22 + $0x8] sm:$0xff]
        %v3348 = vld [vmem:[%s37] sm:$0x1]
        %v3350 = vlaneseq
        %v3351 = vshrl.u32 %v3350, 7
        %v3352 = vsub.s32 0, %v3351
        %v3353 = vrot.slane %v3348, %v3352
        %3355 = vmatprep.subr.mxu0 0.0
        %3356 = vmatpush1.msra.mxu0 %v3346
        %3357 = vmatprep.subr.mxu0 0.0
        %3358 = vmatpush1.msra.mxu0 %v3347
        %3359 = vmatprep.subr.mxu0 0.0
        %3360 = vmatpush1.msra.mxu0 0.0
        %3361 = vmatprep.subr.mxu0 0.0
        %3362 = vmatpush1.msra.mxu0 0.0
        %3363 = vmatprep.subr.mxu0 0.0
        %3364 = vmatpush1.msra.mxu0 0.0
        %3365 = vmatprep.subr.mxu0 0.0
        %3366 = vmatpush1.msra.mxu0 0.0
        %3367 = vmatprep.subr.mxu0 0.0
        %3368 = vmatpush1.msra.mxu0 0.0
        %3369 = vmatprep.subr.mxu0 0.0
        %3370 = vmatpush1.msra.mxu0 0.0
        %3371 = vmatprep.subr.mxu0 0.0
        %3372 = vmatpush1.msra.mxu0 0.0
        %3373 = vmatprep.subr.mxu0 0.0
        %3374 = vmatpush1.msra.mxu0 0.0
        %3375 = vmatprep.subr.mxu0 0.0
        %3376 = vmatpush1.msra.mxu0 0.0
        %3377 = vmatprep.subr.mxu0 0.0
        %3378 = vmatpush1.msra.mxu0 0.0
        %3379 = vmatprep.subr.mxu0 0.0
        %3380 = vmatpush1.msra.mxu0 0.0
        %3381 = vmatprep.subr.mxu0 0.0
        %3382 = vmatpush1.msra.mxu0 0.0
        %3383 = vmatprep.subr.mxu0 0.0
        %3384 = vmatpush1.msra.mxu0 0.0
        %3385 = vmatprep.subr.mxu0 0.0
        %3386 = vmatpush1.msra.mxu0 0.0
        %3387 = vmatprep.subr.mxu0 0.0
        %3388 = vmatpush1.msra.mxu0 0.0
        %3389 = vmatprep.subr.mxu0 0.0
        %3390 = vmatpush1.msra.mxu0 0.0
        %3391 = vmatprep.subr.mxu0 0.0
        %3392 = vmatpush1.msra.mxu0 0.0
        %3393 = vmatprep.subr.mxu0 0.0
        %3394 = vmatpush1.msra.mxu0 0.0
        %3395 = vmatprep.subr.mxu0 0.0
        %3396 = vmatpush1.msra.mxu0 0.0
        %3397 = vmatprep.subr.mxu0 0.0
        %3398 = vmatpush1.msra.mxu0 0.0
        %3399 = vmatprep.subr.mxu0 0.0
        %3400 = vmatpush1.msra.mxu0 0.0
        %3401 = vmatprep.subr.mxu0 0.0
        %3402 = vmatpush1.msra.mxu0 0.0
        %3403 = vmatprep.subr.mxu0 0.0
        %3404 = vmatpush1.msra.mxu0 0.0
        %3405 = vmatprep.subr.mxu0 0.0
        %3406 = vmatpush1.msra.mxu0 0.0
        %3407 = vmatprep.subr.mxu0 0.0
        %3408 = vmatpush1.msra.mxu0 0.0
        %3409 = vmatprep.subr.mxu0 0.0
        %3410 = vmatpush1.msra.mxu0 0.0
        %3411 = vmatprep.subr.mxu0 0.0
        %3412 = vmatpush1.msra.mxu0 0.0
        %3413 = vmatprep.subr.mxu0 0.0
        %3414 = vmatpush1.msra.mxu0 0.0
        %3415 = vmatprep.subr.mxu0 0.0
        %3416 = vmatpush1.msra.mxu0 0.0
        %3417 = vmatprep.subr.mxu0 0.0
        %3418 = vmatpush1.msra.mxu0 0.0
        %3419 = vmatprep.mubr.f32.mxu0 0.0
        %3420 = vmatmul.mubr.f32.gmra.mrb[0].mxu0 %v3104
        %v3421 = vpop.f32.mrb[0].mxu0
        %v3422 = vadd.f32 %v3353, %v3421
        %v3423 = vpop.f32.mrb[0].mxu0
        %3424 = vmatprep.mubr.f32.mxu0 0.0
        %3425 = vmatmul.mubr.f32.gmra.mrb[0].mxu0 %v3107
        %v3426 = vpop.f32.mrb[0].mxu0
        %v3427 = vadd.f32 %v3353, %v3426
        %v3428 = vpop.f32.mrb[0].mxu0
        %3429 = vmatprep.mubr.f32.mxu0 0.0
        %3430 = vmatmul.mubr.f32.gmra.mrb[0].mxu0 %v3110
        %v3431 = vpop.f32.mrb[0].mxu0
        %v3432 = vadd.f32 %v3353, %v3431
        %v3433 = vpop.f32.mrb[0].mxu0
        %3434 = vmatprep.mubr.f32.mxu0 0.0
        %3435 = vmatmul.mubr.f32.gmra.mrb[0].mxu0 %v3113
        %v3436 = vpop.f32.mrb[0].mxu0
        %v3437 = vadd.f32 %v3353, %v3436
        %v3438 = vpop.f32.mrb[0].mxu0
        %3439 = vmatprep.mubr.f32.mxu0 0.0
        %3440 = vmatmul.mubr.f32.gmra.mrb[0].mxu0 %v3116
        %v3441 = vpop.f32.mrb[0].mxu0
        %v3442 = vadd.f32 %v3353, %v3441
        %v3443 = vpop.f32.mrb[0].mxu0
        %3444 = vmatprep.mubr.f32.mxu0 0.0
        %3445 = vmatmul.mubr.f32.gmra.mrb[0].mxu0 %v3119
        %v3446 = vpop.f32.mrb[0].mxu0
        %v3447 = vadd.f32 %v3353, %v3446
        %v3448 = vpop.f32.mrb[0].mxu0
        %3449 = vmatprep.mubr.f32.mxu0 0.0
        %3450 = vmatmul.mubr.f32.gmra.mrb[0].mxu0 %v3122
        %v3451 = vpop.f32.mrb[0].mxu0
        %v3452 = vadd.f32 %v3353, %v3451
        %v3453 = vpop.f32.mrb[0].mxu0
        %3454 = vmatprep.mubr.f32.mxu0 0.0
        %3455 = vmatmul.mubr.f32.gmra.mrb[0].mxu0 %v3125
        %v3456 = vpop.f32.mrb[0].mxu0
        %v3457 = vadd.f32 %v3353, %v3456
        %v3458 = vpop.f32.mrb[0].mxu0
        %3459 = vdwg.mxu0
        %v3460 = vld [vmem:[%s43] sm:$0xff]
        %v3461 = vld [vmem:[%s43 + $0x8] sm:$0xff]
        %v3462 = vld [vmem:[%s43 + $0x10] sm:$0xff]
        %v3463 = vld [vmem:[%s43 + $0x18] sm:$0xff]
        %v3464 = vmul.f32 %v3308, %v3460
        %v3465 = vmul.f32 %v3308, %v3461
        %v3466 = vmul.f32 %v3308, %v3462
        %v3467 = vmul.f32 %v3308, %v3463
        %v3468 = vmul.f32 %v3313, %v3460
        %v3469 = vmul.f32 %v3313, %v3461
        %v3470 = vmul.f32 %v3313, %v3462
        %v3471 = vmul.f32 %v3313, %v3463
        %v3472 = vmul.f32 %v3318, %v3460
        %v3473 = vmul.f32 %v3318, %v3461
        %v3474 = vmul.f32 %v3318, %v3462
        %v3475 = vmul.f32 %v3318, %v3463
        %v3476 = vmul.f32 %v3323, %v3460
        %v3477 = vmul.f32 %v3323, %v3461
        %v3478 = vmul.f32 %v3323, %v3462
        %v3479 = vmul.f32 %v3323, %v3463
        %v3480 = vmul.f32 %v3328, %v3460
        %v3481 = vmul.f32 %v3328, %v3461
        %v3482 = vmul.f32 %v3328, %v3462
        %v3483 = vmul.f32 %v3328, %v3463
        %v3484 = vmul.f32 %v3333, %v3460
        %v3485 = vmul.f32 %v3333, %v3461
        %v3486 = vmul.f32 %v3333, %v3462
        %v3487 = vmul.f32 %v3333, %v3463
        %v3488 = vmul.f32 %v3338, %v3460
        %v3489 = vmul.f32 %v3338, %v3461
        %v3490 = vmul.f32 %v3338, %v3462
        %v3491 = vmul.f32 %v3338, %v3463
        %v3492 = vmul.f32 %v3343, %v3460
        %v3493 = vmul.f32 %v3343, %v3461
        %v3494 = vmul.f32 %v3343, %v3462
        %v3495 = vmul.f32 %v3343, %v3463
        %v3497 = vsel %vm1140, %v3194, 0
        %v3500 = vsel %vm1140, %v3464, 0
        %v3503 = vsel %vm1140, %v3465, 0
        %v3506 = vsel %vm1140, %v3466, 0
        %v3509 = vsel %vm1140, %v3467, 0
        %3511 = vmatprep.subr.mxu0 0.0
        %3512 = vmatpush1.xpose.msra.mxu0 %v3500
        %3513 = vmatprep.subr.mxu0 0.0
        %3514 = vmatpush1.xpose.msra.mxu0 %v3503
        %3515 = vmatprep.subr.mxu0 0.0
        %3516 = vmatpush1.xpose.msra.mxu0 %v3506
        %3517 = vmatprep.subr.mxu0 0.0
        %3518 = vmatpush1.xpose.msra.mxu0 %v3509
        %3519 = vmatprep.subr.mxu0 0.0
        %3520 = vmatpush1.xpose.msra.mxu0 0.0
        %3521 = vmatprep.subr.mxu0 0.0
        %3522 = vmatpush1.xpose.msra.mxu0 0.0
        %3523 = vmatprep.subr.mxu0 0.0
        %3524 = vmatpush1.xpose.msra.mxu0 0.0
        %3525 = vmatprep.subr.mxu0 0.0
        %3526 = vmatpush1.xpose.msra.mxu0 0.0
        %3527 = vmatprep.subr.mxu0 0.0
        %3528 = vmatpush1.xpose.msra.mxu0 0.0
        %3529 = vmatprep.subr.mxu0 0.0
        %3530 = vmatpush1.xpose.msra.mxu0 0.0
        %3531 = vmatprep.subr.mxu0 0.0
        %3532 = vmatpush1.xpose.msra.mxu0 0.0
        %3533 = vmatprep.subr.mxu0 0.0
        %3534 = vmatpush1.xpose.msra.mxu0 0.0
        %3535 = vmatprep.subr.mxu0 0.0
        %3536 = vmatpush1.xpose.msra.mxu0 0.0
        %3537 = vmatprep.subr.mxu0 0.0
        %3538 = vmatpush1.xpose.msra.mxu0 0.0
        %3539 = vmatprep.subr.mxu0 0.0
        %3540 = vmatpush1.xpose.msra.mxu0 0.0
        %3541 = vmatprep.subr.mxu0 0.0
        %3542 = vmatpush1.xpose.msra.mxu0 0.0
        %3543 = vmatprep.subr.mxu0 0.0
        %3544 = vmatpush1.xpose.msra.mxu0 0.0
        %3545 = vmatprep.subr.mxu0 0.0
        %3546 = vmatpush1.xpose.msra.mxu0 0.0
        %3547 = vmatprep.subr.mxu0 0.0
        %3548 = vmatpush1.xpose.msra.mxu0 0.0
        %3549 = vmatprep.subr.mxu0 0.0
        %3550 = vmatpush1.xpose.msra.mxu0 0.0
        %3551 = vmatprep.subr.mxu0 0.0
        %3552 = vmatpush1.xpose.msra.mxu0 0.0
        %3553 = vmatprep.subr.mxu0 0.0
        %3554 = vmatpush1.xpose.msra.mxu0 0.0
        %3555 = vmatprep.subr.mxu0 0.0
        %3556 = vmatpush1.xpose.msra.mxu0 0.0
        %3557 = vmatprep.subr.mxu0 0.0
        %3558 = vmatpush1.xpose.msra.mxu0 0.0
        %3559 = vmatprep.subr.mxu0 0.0
        %3560 = vmatpush1.xpose.msra.mxu0 0.0
        %3561 = vmatprep.subr.mxu0 0.0
        %3562 = vmatpush1.xpose.msra.mxu0 0.0
        %3563 = vmatprep.subr.mxu0 0.0
        %3564 = vmatpush1.xpose.msra.mxu0 0.0
        %3565 = vmatprep.subr.mxu0 0.0
        %3566 = vmatpush1.xpose.msra.mxu0 0.0
        %3567 = vmatprep.subr.mxu0 0.0
        %3568 = vmatpush1.xpose.msra.mxu0 0.0
        %3569 = vmatprep.subr.mxu0 0.0
        %3570 = vmatpush1.xpose.msra.mxu0 0.0
        %3571 = vmatprep.subr.mxu0 0.0
        %3572 = vmatpush1.xpose.msra.mxu0 0.0
        %3573 = vmatprep.subr.mxu0 0.0
        %3574 = vmatpush1.xpose.msra.mxu0 0.0
        %3575 = vmatprep.mubr.f32.mxu0 0.0
        %3576 = vmatmul.mubr.f32.gmra.mrb[0].mxu0 %v3497
        %v3577 = vpop.f32.mrb[0].mxu0
        %v3578 = vadd.f32 0.0, %v3577
        %v3579 = vpop.f32.mrb[0].mxu0
        %3580 = vdwg.mxu0
        %v3582 = vsel %vm1140, %v3199, 0
        %v3585 = vsel %vm1140, %v3468, 0
        %v3588 = vsel %vm1140, %v3469, 0
        %v3591 = vsel %vm1140, %v3470, 0
        %v3594 = vsel %vm1140, %v3471, 0
        %3596 = vmatprep.subr.mxu0 0.0
        %3597 = vmatpush1.xpose.msra.mxu0 %v3585
        %3598 = vmatprep.subr.mxu0 0.0
        %3599 = vmatpush1.xpose.msra.mxu0 %v3588
        %3600 = vmatprep.subr.mxu0 0.0
        %3601 = vmatpush1.xpose.msra.mxu0 %v3591
        %3602 = vmatprep.subr.mxu0 0.0
        %3603 = vmatpush1.xpose.msra.mxu0 %v3594
        %3604 = vmatprep.subr.mxu0 0.0
        %3605 = vmatpush1.xpose.msra.mxu0 0.0
        %3606 = vmatprep.subr.mxu0 0.0
        %3607 = vmatpush1.xpose.msra.mxu0 0.0
        %3608 = vmatprep.subr.mxu0 0.0
        %3609 = vmatpush1.xpose.msra.mxu0 0.0
        %3610 = vmatprep.subr.mxu0 0.0
        %3611 = vmatpush1.xpose.msra.mxu0 0.0
        %3612 = vmatprep.subr.mxu0 0.0
        %3613 = vmatpush1.xpose.msra.mxu0 0.0
        %3614 = vmatprep.subr.mxu0 0.0
        %3615 = vmatpush1.xpose.msra.mxu0 0.0
        %3616 = vmatprep.subr.mxu0 0.0
        %3617 = vmatpush1.xpose.msra.mxu0 0.0
        %3618 = vmatprep.subr.mxu0 0.0
        %3619 = vmatpush1.xpose.msra.mxu0 0.0
        %3620 = vmatprep.subr.mxu0 0.0
        %3621 = vmatpush1.xpose.msra.mxu0 0.0
        %3622 = vmatprep.subr.mxu0 0.0
        %3623 = vmatpush1.xpose.msra.mxu0 0.0
        %3624 = vmatprep.subr.mxu0 0.0
        %3625 = vmatpush1.xpose.msra.mxu0 0.0
        %3626 = vmatprep.subr.mxu0 0.0
        %3627 = vmatpush1.xpose.msra.mxu0 0.0
        %3628 = vmatprep.subr.mxu0 0.0
        %3629 = vmatpush1.xpose.msra.mxu0 0.0
        %3630 = vmatprep.subr.mxu0 0.0
        %3631 = vmatpush1.xpose.msra.mxu0 0.0
        %3632 = vmatprep.subr.mxu0 0.0
        %3633 = vmatpush1.xpose.msra.mxu0 0.0
        %3634 = vmatprep.subr.mxu0 0.0
        %3635 = vmatpush1.xpose.msra.mxu0 0.0
        %3636 = vmatprep.subr.mxu0 0.0
        %3637 = vmatpush1.xpose.msra.mxu0 0.0
        %3638 = vmatprep.subr.mxu0 0.0
        %3639 = vmatpush1.xpose.msra.mxu0 0.0
        %3640 = vmatprep.subr.mxu0 0.0
        %3641 = vmatpush1.xpose.msra.mxu0 0.0
        %3642 = vmatprep.subr.mxu0 0.0
        %3643 = vmatpush1.xpose.msra.mxu0 0.0
        %3644 = vmatprep.subr.mxu0 0.0
        %3645 = vmatpush1.xpose.msra.mxu0 0.0
        %3646 = vmatprep.subr.mxu0 0.0
        %3647 = vmatpush1.xpose.msra.mxu0 0.0
        %3648 = vmatprep.subr.mxu0 0.0
        %3649 = vmatpush1.xpose.msra.mxu0 0.0
        %3650 = vmatprep.subr.mxu0 0.0
        %3651 = vmatpush1.xpose.msra.mxu0 0.0
        %3652 = vmatprep.subr.mxu0 0.0
        %3653 = vmatpush1.xpose.msra.mxu0 0.0
        %3654 = vmatprep.subr.mxu0 0.0
        %3655 = vmatpush1.xpose.msra.mxu0 0.0
        %3656 = vmatprep.subr.mxu0 0.0
        %3657 = vmatpush1.xpose.msra.mxu0 0.0
        %3658 = vmatprep.subr.mxu0 0.0
        %3659 = vmatpush1.xpose.msra.mxu0 0.0
        %3660 = vmatprep.mubr.f32.mxu0 0.0
        %3661 = vmatmul.mubr.f32.gmra.mrb[0].mxu0 %v3582
        %v3662 = vpop.f32.mrb[0].mxu0
        %v3663 = vadd.f32 0.0, %v3662
        %v3664 = vpop.f32.mrb[0].mxu0
        %3665 = vdwg.mxu0
        %v3667 = vsel %vm1140, %v3204, 0
        %v3670 = vsel %vm1140, %v3472, 0
        %v3673 = vsel %vm1140, %v3473, 0
        %v3676 = vsel %vm1140, %v3474, 0
        %v3679 = vsel %vm1140, %v3475, 0
        %3681 = vmatprep.subr.mxu0 0.0
        %3682 = vmatpush1.xpose.msra.mxu0 %v3670
        %3683 = vmatprep.subr.mxu0 0.0
        %3684 = vmatpush1.xpose.msra.mxu0 %v3673
        %3685 = vmatprep.subr.mxu0 0.0
        %3686 = vmatpush1.xpose.msra.mxu0 %v3676
        %3687 = vmatprep.subr.mxu0 0.0
        %3688 = vmatpush1.xpose.msra.mxu0 %v3679
        %3689 = vmatprep.subr.mxu0 0.0
        %3690 = vmatpush1.xpose.msra.mxu0 0.0
        %3691 = vmatprep.subr.mxu0 0.0
        %3692 = vmatpush1.xpose.msra.mxu0 0.0
        %3693 = vmatprep.subr.mxu0 0.0
        %3694 = vmatpush1.xpose.msra.mxu0 0.0
        %3695 = vmatprep.subr.mxu0 0.0
        %3696 = vmatpush1.xpose.msra.mxu0 0.0
        %3697 = vmatprep.subr.mxu0 0.0
        %3698 = vmatpush1.xpose.msra.mxu0 0.0
        %3699 = vmatprep.subr.mxu0 0.0
        %3700 = vmatpush1.xpose.msra.mxu0 0.0
        %3701 = vmatprep.subr.mxu0 0.0
        %3702 = vmatpush1.xpose.msra.mxu0 0.0
        %3703 = vmatprep.subr.mxu0 0.0
        %3704 = vmatpush1.xpose.msra.mxu0 0.0
        %3705 = vmatprep.subr.mxu0 0.0
        %3706 = vmatpush1.xpose.msra.mxu0 0.0
        %3707 = vmatprep.subr.mxu0 0.0
        %3708 = vmatpush1.xpose.msra.mxu0 0.0
        %3709 = vmatprep.subr.mxu0 0.0
        %3710 = vmatpush1.xpose.msra.mxu0 0.0
        %3711 = vmatprep.subr.mxu0 0.0
        %3712 = vmatpush1.xpose.msra.mxu0 0.0
        %3713 = vmatprep.subr.mxu0 0.0
        %3714 = vmatpush1.xpose.msra.mxu0 0.0
        %3715 = vmatprep.subr.mxu0 0.0
        %3716 = vmatpush1.xpose.msra.mxu0 0.0
        %3717 = vmatprep.subr.mxu0 0.0
        %3718 = vmatpush1.xpose.msra.mxu0 0.0
        %3719 = vmatprep.subr.mxu0 0.0
        %3720 = vmatpush1.xpose.msra.mxu0 0.0
        %3721 = vmatprep.subr.mxu0 0.0
        %3722 = vmatpush1.xpose.msra.mxu0 0.0
        %3723 = vmatprep.subr.mxu0 0.0
        %3724 = vmatpush1.xpose.msra.mxu0 0.0
        %3725 = vmatprep.subr.mxu0 0.0
        %3726 = vmatpush1.xpose.msra.mxu0 0.0
        %3727 = vmatprep.subr.mxu0 0.0
        %3728 = vmatpush1.xpose.msra.mxu0 0.0
        %3729 = vmatprep.subr.mxu0 0.0
        %3730 = vmatpush1.xpose.msra.mxu0 0.0
        %3731 = vmatprep.subr.mxu0 0.0
        %3732 = vmatpush1.xpose.msra.mxu0 0.0
        %3733 = vmatprep.subr.mxu0 0.0
        %3734 = vmatpush1.xpose.msra.mxu0 0.0
        %3735 = vmatprep.subr.mxu0 0.0
        %3736 = vmatpush1.xpose.msra.mxu0 0.0
        %3737 = vmatprep.subr.mxu0 0.0
        %3738 = vmatpush1.xpose.msra.mxu0 0.0
        %3739 = vmatprep.subr.mxu0 0.0
        %3740 = vmatpush1.xpose.msra.mxu0 0.0
        %3741 = vmatprep.subr.mxu0 0.0
        %3742 = vmatpush1.xpose.msra.mxu0 0.0
        %3743 = vmatprep.subr.mxu0 0.0
        %3744 = vmatpush1.xpose.msra.mxu0 0.0
        %3745 = vmatprep.mubr.f32.mxu0 0.0
        %3746 = vmatmul.mubr.f32.gmra.mrb[0].mxu0 %v3667
        %v3747 = vpop.f32.mrb[0].mxu0
        %v3748 = vadd.f32 0.0, %v3747
        %v3749 = vpop.f32.mrb[0].mxu0
        %3750 = vdwg.mxu0
        %v3752 = vsel %vm1140, %v3209, 0
        %v3755 = vsel %vm1140, %v3476, 0
        %v3758 = vsel %vm1140, %v3477, 0
        %v3761 = vsel %vm1140, %v3478, 0
        %v3764 = vsel %vm1140, %v3479, 0
        %3766 = vmatprep.subr.mxu0 0.0
        %3767 = vmatpush1.xpose.msra.mxu0 %v3755
        %3768 = vmatprep.subr.mxu0 0.0
        %3769 = vmatpush1.xpose.msra.mxu0 %v3758
        %3770 = vmatprep.subr.mxu0 0.0
        %3771 = vmatpush1.xpose.msra.mxu0 %v3761
        %3772 = vmatprep.subr.mxu0 0.0
        %3773 = vmatpush1.xpose.msra.mxu0 %v3764
        %3774 = vmatprep.subr.mxu0 0.0
        %3775 = vmatpush1.xpose.msra.mxu0 0.0
        %3776 = vmatprep.subr.mxu0 0.0
        %3777 = vmatpush1.xpose.msra.mxu0 0.0
        %3778 = vmatprep.subr.mxu0 0.0
        %3779 = vmatpush1.xpose.msra.mxu0 0.0
        %3780 = vmatprep.subr.mxu0 0.0
        %3781 = vmatpush1.xpose.msra.mxu0 0.0
        %3782 = vmatprep.subr.mxu0 0.0
        %3783 = vmatpush1.xpose.msra.mxu0 0.0
        %3784 = vmatprep.subr.mxu0 0.0
        %3785 = vmatpush1.xpose.msra.mxu0 0.0
        %3786 = vmatprep.subr.mxu0 0.0
        %3787 = vmatpush1.xpose.msra.mxu0 0.0
        %3788 = vmatprep.subr.mxu0 0.0
        %3789 = vmatpush1.xpose.msra.mxu0 0.0
        %3790 = vmatprep.subr.mxu0 0.0
        %3791 = vmatpush1.xpose.msra.mxu0 0.0
        %3792 = vmatprep.subr.mxu0 0.0
        %3793 = vmatpush1.xpose.msra.mxu0 0.0
        %3794 = vmatprep.subr.mxu0 0.0
        %3795 = vmatpush1.xpose.msra.mxu0 0.0
        %3796 = vmatprep.subr.mxu0 0.0
        %3797 = vmatpush1.xpose.msra.mxu0 0.0
        %3798 = vmatprep.subr.mxu0 0.0
        %3799 = vmatpush1.xpose.msra.mxu0 0.0
        %3800 = vmatprep.subr.mxu0 0.0
        %3801 = vmatpush1.xpose.msra.mxu0 0.0
        %3802 = vmatprep.subr.mxu0 0.0
        %3803 = vmatpush1.xpose.msra.mxu0 0.0
        %3804 = vmatprep.subr.mxu0 0.0
        %3805 = vmatpush1.xpose.msra.mxu0 0.0
        %3806 = vmatprep.subr.mxu0 0.0
        %3807 = vmatpush1.xpose.msra.mxu0 0.0
        %3808 = vmatprep.subr.mxu0 0.0
        %3809 = vmatpush1.xpose.msra.mxu0 0.0
        %3810 = vmatprep.subr.mxu0 0.0
        %3811 = vmatpush1.xpose.msra.mxu0 0.0
        %3812 = vmatprep.subr.mxu0 0.0
        %3813 = vmatpush1.xpose.msra.mxu0 0.0
        %3814 = vmatprep.subr.mxu0 0.0
        %3815 = vmatpush1.xpose.msra.mxu0 0.0
        %3816 = vmatprep.subr.mxu0 0.0
        %3817 = vmatpush1.xpose.msra.mxu0 0.0
        %3818 = vmatprep.subr.mxu0 0.0
        %3819 = vmatpush1.xpose.msra.mxu0 0.0
        %3820 = vmatprep.subr.mxu0 0.0
        %3821 = vmatpush1.xpose.msra.mxu0 0.0
        %3822 = vmatprep.subr.mxu0 0.0
        %3823 = vmatpush1.xpose.msra.mxu0 0.0
        %3824 = vmatprep.subr.mxu0 0.0
        %3825 = vmatpush1.xpose.msra.mxu0 0.0
        %3826 = vmatprep.subr.mxu0 0.0
        %3827 = vmatpush1.xpose.msra.mxu0 0.0
        %3828 = vmatprep.subr.mxu0 0.0
        %3829 = vmatpush1.xpose.msra.mxu0 0.0
        %3830 = vmatprep.mubr.f32.mxu0 0.0
        %3831 = vmatmul.mubr.f32.gmra.mrb[0].mxu0 %v3752
        %v3832 = vpop.f32.mrb[0].mxu0
        %v3833 = vadd.f32 0.0, %v3832
        %v3834 = vpop.f32.mrb[0].mxu0
        %3835 = vdwg.mxu0
        %v3837 = vsel %vm1140, %v3214, 0
        %v3840 = vsel %vm1140, %v3480, 0
        %v3843 = vsel %vm1140, %v3481, 0
        %v3846 = vsel %vm1140, %v3482, 0
        %v3849 = vsel %vm1140, %v3483, 0
        %3851 = vmatprep.subr.mxu0 0.0
        %3852 = vmatpush1.xpose.msra.mxu0 %v3840
        %3853 = vmatprep.subr.mxu0 0.0
        %3854 = vmatpush1.xpose.msra.mxu0 %v3843
        %3855 = vmatprep.subr.mxu0 0.0
        %3856 = vmatpush1.xpose.msra.mxu0 %v3846
        %3857 = vmatprep.subr.mxu0 0.0
        %3858 = vmatpush1.xpose.msra.mxu0 %v3849
        %3859 = vmatprep.subr.mxu0 0.0
        %3860 = vmatpush1.xpose.msra.mxu0 0.0
        %3861 = vmatprep.subr.mxu0 0.0
        %3862 = vmatpush1.xpose.msra.mxu0 0.0
        %3863 = vmatprep.subr.mxu0 0.0
        %3864 = vmatpush1.xpose.msra.mxu0 0.0
        %3865 = vmatprep.subr.mxu0 0.0
        %3866 = vmatpush1.xpose.msra.mxu0 0.0
        %3867 = vmatprep.subr.mxu0 0.0
        %3868 = vmatpush1.xpose.msra.mxu0 0.0
        %3869 = vmatprep.subr.mxu0 0.0
        %3870 = vmatpush1.xpose.msra.mxu0 0.0
        %3871 = vmatprep.subr.mxu0 0.0
        %3872 = vmatpush1.xpose.msra.mxu0 0.0
        %3873 = vmatprep.subr.mxu0 0.0
        %3874 = vmatpush1.xpose.msra.mxu0 0.0
        %3875 = vmatprep.subr.mxu0 0.0
        %3876 = vmatpush1.xpose.msra.mxu0 0.0
        %3877 = vmatprep.subr.mxu0 0.0
        %3878 = vmatpush1.xpose.msra.mxu0 0.0
        %3879 = vmatprep.subr.mxu0 0.0
        %3880 = vmatpush1.xpose.msra.mxu0 0.0
        %3881 = vmatprep.subr.mxu0 0.0
        %3882 = vmatpush1.xpose.msra.mxu0 0.0
        %3883 = vmatprep.subr.mxu0 0.0
        %3884 = vmatpush1.xpose.msra.mxu0 0.0
        %3885 = vmatprep.subr.mxu0 0.0
        %3886 = vmatpush1.xpose.msra.mxu0 0.0
        %3887 = vmatprep.subr.mxu0 0.0
        %3888 = vmatpush1.xpose.msra.mxu0 0.0
        %3889 = vmatprep.subr.mxu0 0.0
        %3890 = vmatpush1.xpose.msra.mxu0 0.0
        %3891 = vmatprep.subr.mxu0 0.0
        %3892 = vmatpush1.xpose.msra.mxu0 0.0
        %3893 = vmatprep.subr.mxu0 0.0
        %3894 = vmatpush1.xpose.msra.mxu0 0.0
        %3895 = vmatprep.subr.mxu0 0.0
        %3896 = vmatpush1.xpose.msra.mxu0 0.0
        %3897 = vmatprep.subr.mxu0 0.0
        %3898 = vmatpush1.xpose.msra.mxu0 0.0
        %3899 = vmatprep.subr.mxu0 0.0
        %3900 = vmatpush1.xpose.msra.mxu0 0.0
        %3901 = vmatprep.subr.mxu0 0.0
        %3902 = vmatpush1.xpose.msra.mxu0 0.0
        %3903 = vmatprep.subr.mxu0 0.0
        %3904 = vmatpush1.xpose.msra.mxu0 0.0
        %3905 = vmatprep.subr.mxu0 0.0
        %3906 = vmatpush1.xpose.msra.mxu0 0.0
        %3907 = vmatprep.subr.mxu0 0.0
        %3908 = vmatpush1.xpose.msra.mxu0 0.0
        %3909 = vmatprep.subr.mxu0 0.0
        %3910 = vmatpush1.xpose.msra.mxu0 0.0
        %3911 = vmatprep.subr.mxu0 0.0
        %3912 = vmatpush1.xpose.msra.mxu0 0.0
        %3913 = vmatprep.subr.mxu0 0.0
        %3914 = vmatpush1.xpose.msra.mxu0 0.0
        %3915 = vmatprep.mubr.f32.mxu0 0.0
        %3916 = vmatmul.mubr.f32.gmra.mrb[0].mxu0 %v3837
        %v3917 = vpop.f32.mrb[0].mxu0
        %v3918 = vadd.f32 0.0, %v3917
        %v3919 = vpop.f32.mrb[0].mxu0
        %3920 = vdwg.mxu0
        %v3922 = vsel %vm1140, %v3219, 0
        %v3925 = vsel %vm1140, %v3484, 0
        %v3928 = vsel %vm1140, %v3485, 0
        %v3931 = vsel %vm1140, %v3486, 0
        %v3934 = vsel %vm1140, %v3487, 0
        %3936 = vmatprep.subr.mxu0 0.0
        %3937 = vmatpush1.xpose.msra.mxu0 %v3925
        %3938 = vmatprep.subr.mxu0 0.0
        %3939 = vmatpush1.xpose.msra.mxu0 %v3928
        %3940 = vmatprep.subr.mxu0 0.0
        %3941 = vmatpush1.xpose.msra.mxu0 %v3931
        %3942 = vmatprep.subr.mxu0 0.0
        %3943 = vmatpush1.xpose.msra.mxu0 %v3934
        %3944 = vmatprep.subr.mxu0 0.0
        %3945 = vmatpush1.xpose.msra.mxu0 0.0
        %3946 = vmatprep.subr.mxu0 0.0
        %3947 = vmatpush1.xpose.msra.mxu0 0.0
        %3948 = vmatprep.subr.mxu0 0.0
        %3949 = vmatpush1.xpose.msra.mxu0 0.0
        %3950 = vmatprep.subr.mxu0 0.0
        %3951 = vmatpush1.xpose.msra.mxu0 0.0
        %3952 = vmatprep.subr.mxu0 0.0
        %3953 = vmatpush1.xpose.msra.mxu0 0.0
        %3954 = vmatprep.subr.mxu0 0.0
        %3955 = vmatpush1.xpose.msra.mxu0 0.0
        %3956 = vmatprep.subr.mxu0 0.0
        %3957 = vmatpush1.xpose.msra.mxu0 0.0
        %3958 = vmatprep.subr.mxu0 0.0
        %3959 = vmatpush1.xpose.msra.mxu0 0.0
        %3960 = vmatprep.subr.mxu0 0.0
        %3961 = vmatpush1.xpose.msra.mxu0 0.0
        %3962 = vmatprep.subr.mxu0 0.0
        %3963 = vmatpush1.xpose.msra.mxu0 0.0
        %3964 = vmatprep.subr.mxu0 0.0
        %3965 = vmatpush1.xpose.msra.mxu0 0.0
        %3966 = vmatprep.subr.mxu0 0.0
        %3967 = vmatpush1.xpose.msra.mxu0 0.0
        %3968 = vmatprep.subr.mxu0 0.0
        %3969 = vmatpush1.xpose.msra.mxu0 0.0
        %3970 = vmatprep.subr.mxu0 0.0
        %3971 = vmatpush1.xpose.msra.mxu0 0.0
        %3972 = vmatprep.subr.mxu0 0.0
        %3973 = vmatpush1.xpose.msra.mxu0 0.0
        %3974 = vmatprep.subr.mxu0 0.0
        %3975 = vmatpush1.xpose.msra.mxu0 0.0
        %3976 = vmatprep.subr.mxu0 0.0
        %3977 = vmatpush1.xpose.msra.mxu0 0.0
        %3978 = vmatprep.subr.mxu0 0.0
        %3979 = vmatpush1.xpose.msra.mxu0 0.0
        %3980 = vmatprep.subr.mxu0 0.0
        %3981 = vmatpush1.xpose.msra.mxu0 0.0
        %3982 = vmatprep.subr.mxu0 0.0
        %3983 = vmatpush1.xpose.msra.mxu0 0.0
        %3984 = vmatprep.subr.mxu0 0.0
        %3985 = vmatpush1.xpose.msra.mxu0 0.0
        %3986 = vmatprep.subr.mxu0 0.0
        %3987 = vmatpush1.xpose.msra.mxu0 0.0
        %3988 = vmatprep.subr.mxu0 0.0
        %3989 = vmatpush1.xpose.msra.mxu0 0.0
        %3990 = vmatprep.subr.mxu0 0.0
        %3991 = vmatpush1.xpose.msra.mxu0 0.0
        %3992 = vmatprep.subr.mxu0 0.0
        %3993 = vmatpush1.xpose.msra.mxu0 0.0
        %3994 = vmatprep.subr.mxu0 0.0
        %3995 = vmatpush1.xpose.msra.mxu0 0.0
        %3996 = vmatprep.subr.mxu0 0.0
        %3997 = vmatpush1.xpose.msra.mxu0 0.0
        %3998 = vmatprep.subr.mxu0 0.0
        %3999 = vmatpush1.xpose.msra.mxu0 0.0
        %4000 = vmatprep.mubr.f32.mxu0 0.0
        %4001 = vmatmul.mubr.f32.gmra.mrb[0].mxu0 %v3922
        %v4002 = vpop.f32.mrb[0].mxu0
        %v4003 = vadd.f32 0.0, %v4002
        %v4004 = vpop.f32.mrb[0].mxu0
        %4005 = vdwg.mxu0
        %v4007 = vsel %vm1140, %v3224, 0
        %v4010 = vsel %vm1140, %v3488, 0
        %v4013 = vsel %vm1140, %v3489, 0
        %v4016 = vsel %vm1140, %v3490, 0
        %v4019 = vsel %vm1140, %v3491, 0
        %4021 = vmatprep.subr.mxu0 0.0
        %4022 = vmatpush1.xpose.msra.mxu0 %v4010
        %4023 = vmatprep.subr.mxu0 0.0
        %4024 = vmatpush1.xpose.msra.mxu0 %v4013
        %4025 = vmatprep.subr.mxu0 0.0
        %4026 = vmatpush1.xpose.msra.mxu0 %v4016
        %4027 = vmatprep.subr.mxu0 0.0
        %4028 = vmatpush1.xpose.msra.mxu0 %v4019
        %4029 = vmatprep.subr.mxu0 0.0
        %4030 = vmatpush1.xpose.msra.mxu0 0.0
        %4031 = vmatprep.subr.mxu0 0.0
        %4032 = vmatpush1.xpose.msra.mxu0 0.0
        %4033 = vmatprep.subr.mxu0 0.0
        %4034 = vmatpush1.xpose.msra.mxu0 0.0
        %4035 = vmatprep.subr.mxu0 0.0
        %4036 = vmatpush1.xpose.msra.mxu0 0.0
        %4037 = vmatprep.subr.mxu0 0.0
        %4038 = vmatpush1.xpose.msra.mxu0 0.0
        %4039 = vmatprep.subr.mxu0 0.0
        %4040 = vmatpush1.xpose.msra.mxu0 0.0
        %4041 = vmatprep.subr.mxu0 0.0
        %4042 = vmatpush1.xpose.msra.mxu0 0.0
        %4043 = vmatprep.subr.mxu0 0.0
        %4044 = vmatpush1.xpose.msra.mxu0 0.0
        %4045 = vmatprep.subr.mxu0 0.0
        %4046 = vmatpush1.xpose.msra.mxu0 0.0
        %4047 = vmatprep.subr.mxu0 0.0
        %4048 = vmatpush1.xpose.msra.mxu0 0.0
        %4049 = vmatprep.subr.mxu0 0.0
        %4050 = vmatpush1.xpose.msra.mxu0 0.0
        %4051 = vmatprep.subr.mxu0 0.0
        %4052 = vmatpush1.xpose.msra.mxu0 0.0
        %4053 = vmatprep.subr.mxu0 0.0
        %4054 = vmatpush1.xpose.msra.mxu0 0.0
        %4055 = vmatprep.subr.mxu0 0.0
        %4056 = vmatpush1.xpose.msra.mxu0 0.0
        %4057 = vmatprep.subr.mxu0 0.0
        %4058 = vmatpush1.xpose.msra.mxu0 0.0
        %4059 = vmatprep.subr.mxu0 0.0
        %4060 = vmatpush1.xpose.msra.mxu0 0.0
        %4061 = vmatprep.subr.mxu0 0.0
        %4062 = vmatpush1.xpose.msra.mxu0 0.0
        %4063 = vmatprep.subr.mxu0 0.0
        %4064 = vmatpush1.xpose.msra.mxu0 0.0
        %4065 = vmatprep.subr.mxu0 0.0
        %4066 = vmatpush1.xpose.msra.mxu0 0.0
        %4067 = vmatprep.subr.mxu0 0.0
        %4068 = vmatpush1.xpose.msra.mxu0 0.0
        %4069 = vmatprep.subr.mxu0 0.0
        %4070 = vmatpush1.xpose.msra.mxu0 0.0
        %4071 = vmatprep.subr.mxu0 0.0
        %4072 = vmatpush1.xpose.msra.mxu0 0.0
        %4073 = vmatprep.subr.mxu0 0.0
        %4074 = vmatpush1.xpose.msra.mxu0 0.0
        %4075 = vmatprep.subr.mxu0 0.0
        %4076 = vmatpush1.xpose.msra.mxu0 0.0
        %4077 = vmatprep.subr.mxu0 0.0
        %4078 = vmatpush1.xpose.msra.mxu0 0.0
        %4079 = vmatprep.subr.mxu0 0.0
        %4080 = vmatpush1.xpose.msra.mxu0 0.0
        %4081 = vmatprep.subr.mxu0 0.0
        %4082 = vmatpush1.xpose.msra.mxu0 0.0
        %4083 = vmatprep.subr.mxu0 0.0
        %4084 = vmatpush1.xpose.msra.mxu0 0.0
        %4085 = vmatprep.mubr.f32.mxu0 0.0
        %4086 = vmatmul.mubr.f32.gmra.mrb[0].mxu0 %v4007
        %v4087 = vpop.f32.mrb[0].mxu0
        %v4088 = vadd.f32 0.0, %v4087
        %v4089 = vpop.f32.mrb[0].mxu0
        %4090 = vdwg.mxu0
        %v4092 = vsel %vm1140, %v3229, 0
        %v4095 = vsel %vm1140, %v3492, 0
        %v4098 = vsel %vm1140, %v3493, 0
        %v4101 = vsel %vm1140, %v3494, 0
        %v4104 = vsel %vm1140, %v3495, 0
        %4106 = vmatprep.subr.mxu0 0.0
        %4107 = vmatpush1.xpose.msra.mxu0 %v4095
        %4108 = vmatprep.subr.mxu0 0.0
        %4109 = vmatpush1.xpose.msra.mxu0 %v4098
        %4110 = vmatprep.subr.mxu0 0.0
        %4111 = vmatpush1.xpose.msra.mxu0 %v4101
        %4112 = vmatprep.subr.mxu0 0.0
        %4113 = vmatpush1.xpose.msra.mxu0 %v4104
        %4114 = vmatprep.subr.mxu0 0.0
        %4115 = vmatpush1.xpose.msra.mxu0 0.0
        %4116 = vmatprep.subr.mxu0 0.0
        %4117 = vmatpush1.xpose.msra.mxu0 0.0
        %4118 = vmatprep.subr.mxu0 0.0
        %4119 = vmatpush1.xpose.msra.mxu0 0.0
        %4120 = vmatprep.subr.mxu0 0.0
        %4121 = vmatpush1.xpose.msra.mxu0 0.0
        %4122 = vmatprep.subr.mxu0 0.0
        %4123 = vmatpush1.xpose.msra.mxu0 0.0
        %4124 = vmatprep.subr.mxu0 0.0
        %4125 = vmatpush1.xpose.msra.mxu0 0.0
        %4126 = vmatprep.subr.mxu0 0.0
        %4127 = vmatpush1.xpose.msra.mxu0 0.0
        %4128 = vmatprep.subr.mxu0 0.0
        %4129 = vmatpush1.xpose.msra.mxu0 0.0
        %4130 = vmatprep.subr.mxu0 0.0
        %4131 = vmatpush1.xpose.msra.mxu0 0.0
        %4132 = vmatprep.subr.mxu0 0.0
        %4133 = vmatpush1.xpose.msra.mxu0 0.0
        %4134 = vmatprep.subr.mxu0 0.0
        %4135 = vmatpush1.xpose.msra.mxu0 0.0
        %4136 = vmatprep.subr.mxu0 0.0
        %4137 = vmatpush1.xpose.msra.mxu0 0.0
        %4138 = vmatprep.subr.mxu0 0.0
        %4139 = vmatpush1.xpose.msra.mxu0 0.0
        %4140 = vmatprep.subr.mxu0 0.0
        %4141 = vmatpush1.xpose.msra.mxu0 0.0
        %4142 = vmatprep.subr.mxu0 0.0
        %4143 = vmatpush1.xpose.msra.mxu0 0.0
        %4144 = vmatprep.subr.mxu0 0.0
        %4145 = vmatpush1.xpose.msra.mxu0 0.0
        %4146 = vmatprep.subr.mxu0 0.0
        %4147 = vmatpush1.xpose.msra.mxu0 0.0
        %4148 = vmatprep.subr.mxu0 0.0
        %4149 = vmatpush1.xpose.msra.mxu0 0.0
        %4150 = vmatprep.subr.mxu0 0.0
        %4151 = vmatpush1.xpose.msra.mxu0 0.0
        %4152 = vmatprep.subr.mxu0 0.0
        %4153 = vmatpush1.xpose.msra.mxu0 0.0
        %4154 = vmatprep.subr.mxu0 0.0
        %4155 = vmatpush1.xpose.msra.mxu0 0.0
        %4156 = vmatprep.subr.mxu0 0.0
        %4157 = vmatpush1.xpose.msra.mxu0 0.0
        %4158 = vmatprep.subr.mxu0 0.0
        %4159 = vmatpush1.xpose.msra.mxu0 0.0
        %4160 = vmatprep.subr.mxu0 0.0
        %4161 = vmatpush1.xpose.msra.mxu0 0.0
        %4162 = vmatprep.subr.mxu0 0.0
        %4163 = vmatpush1.xpose.msra.mxu0 0.0
        %4164 = vmatprep.subr.mxu0 0.0
        %4165 = vmatpush1.xpose.msra.mxu0 0.0
        %4166 = vmatprep.subr.mxu0 0.0
        %4167 = vmatpush1.xpose.msra.mxu0 0.0
        %4168 = vmatprep.subr.mxu0 0.0
        %4169 = vmatpush1.xpose.msra.mxu0 0.0
        %4170 = vmatprep.mubr.f32.mxu0 0.0
        %4171 = vmatmul.mubr.f32.gmra.mrb[0].mxu0 %v4092
        %v4172 = vpop.f32.mrb[0].mxu0
        %v4173 = vadd.f32 0.0, %v4172
        %v4174 = vpop.f32.mrb[0].mxu0
        %4175 = vdwg.mxu0
        %v4176 = vsel %vm1883, %v3578, -inf
        %4177 = vmax.xlane.f32.xlu0 %v4176
        %v4178 = vpop.xlane.xlu0 %4177
        %v4179 = vsel %vm1883, %v3663, -inf
        %4180 = vmax.xlane.f32.xlu0 %v4179
        %v4181 = vpop.xlane.xlu0 %4180
        %v4182 = vsel %vm1883, %v3748, -inf
        %4183 = vmax.xlane.f32.xlu0 %v4182
        %v4184 = vpop.xlane.xlu0 %4183
        %v4185 = vsel %vm1883, %v3833, -inf
        %4186 = vmax.xlane.f32.xlu0 %v4185
        %v4187 = vpop.xlane.xlu0 %4186
        %v4188 = vsel %vm1883, %v3918, -inf
        %4189 = vmax.xlane.f32.xlu0 %v4188
        %v4190 = vpop.xlane.xlu0 %4189
        %v4191 = vsel %vm1883, %v4003, -inf
        %4192 = vmax.xlane.f32.xlu0 %v4191
        %v4193 = vpop.xlane.xlu0 %4192
        %v4194 = vsel %vm1883, %v4088, -inf
        %4195 = vmax.xlane.f32.xlu0 %v4194
        %v4196 = vpop.xlane.xlu0 %4195
        %v4197 = vsel %vm1883, %v4173, -inf
        %4198 = vmax.xlane.f32.xlu0 %v4197
        %v4199 = vpop.xlane.xlu0 %4198
        %v4200 = vsub.f32 %v3578, %v4178
        %v4201 = vsub.f32 %v3663, %v4181
        %v4202 = vsub.f32 %v3748, %v4184
        %v4203 = vsub.f32 %v3833, %v4187
        %v4204 = vsub.f32 %v3918, %v4190
        %v4205 = vsub.f32 %v4003, %v4193
        %v4206 = vsub.f32 %v4088, %v4196
        %v4207 = vsub.f32 %v4173, %v4199
        %v4208 = vmul.f32 %v4200, 1.442695
        %v4209 = vpow.pop %v4208
        %v4210 = vmul.f32 %v4201, 1.442695
        %v4211 = vpow.pop %v4210
        %v4212 = vmul.f32 %v4202, 1.442695
        %v4213 = vpow.pop %v4212
        %v4214 = vmul.f32 %v4203, 1.442695
        %v4215 = vpow.pop %v4214
        %v4216 = vmul.f32 %v4204, 1.442695
        %v4217 = vpow.pop %v4216
        %v4218 = vmul.f32 %v4205, 1.442695
        %v4219 = vpow.pop %v4218
        %v4220 = vmul.f32 %v4206, 1.442695
        %v4221 = vpow.pop %v4220
        %v4222 = vmul.f32 %v4207, 1.442695
        %v4223 = vpow.pop %v4222
        %v4224 = vld [vmem:[%s45] sm:$0xff]
        %v4225 = vld [vmem:[%s45 + $0x8] sm:$0xff]
        %v4226 = vld [vmem:[%s45 + $0x10] sm:$0xff]
        %v4227 = vld [vmem:[%s45 + $0x18] sm:$0xff]
        %v4229 = vsel %vm1883, %v4209, 0
        %v4232 = vsel %vm1883, %v4211, 0
        %v4235 = vsel %vm1883, %v4213, 0
        %v4238 = vsel %vm1883, %v4215, 0
        %v4241 = vsel %vm1883, %v4217, 0
        %v4244 = vsel %vm1883, %v4219, 0
        %v4247 = vsel %vm1883, %v4221, 0
        %v4250 = vsel %vm1883, %v4223, 0
        %4252 = vmatprep.subr.mxu0 0.0
        %4253 = vmatpush1.msra.mxu0 %v4224
        %4254 = vmatprep.subr.mxu0 0.0
        %4255 = vmatpush1.msra.mxu0 %v4225
        %4256 = vmatprep.subr.mxu0 0.0
        %4257 = vmatpush1.msra.mxu0 %v4226
        %4258 = vmatprep.subr.mxu0 0.0
        %4259 = vmatpush1.msra.mxu0 %v4227
        %4260 = vmatprep.subr.mxu0 0.0
        %4261 = vmatpush1.msra.mxu0 0.0
        %4262 = vmatprep.subr.mxu0 0.0
        %4263 = vmatpush1.msra.mxu0 0.0
        %4264 = vmatprep.subr.mxu0 0.0
        %4265 = vmatpush1.msra.mxu0 0.0
        %4266 = vmatprep.subr.mxu0 0.0
        %4267 = vmatpush1.msra.mxu0 0.0
        %4268 = vmatprep.subr.mxu0 0.0
        %4269 = vmatpush1.msra.mxu0 0.0
        %4270 = vmatprep.subr.mxu0 0.0
        %4271 = vmatpush1.msra.mxu0 0.0
        %4272 = vmatprep.subr.mxu0 0.0
        %4273 = vmatpush1.msra.mxu0 0.0
        %4274 = vmatprep.subr.mxu0 0.0
        %4275 = vmatpush1.msra.mxu0 0.0
        %4276 = vmatprep.subr.mxu0 0.0
        %4277 = vmatpush1.msra.mxu0 0.0
        %4278 = vmatprep.subr.mxu0 0.0
        %4279 = vmatpush1.msra.mxu0 0.0
        %4280 = vmatprep.subr.mxu0 0.0
        %4281 = vmatpush1.msra.mxu0 0.0
        %4282 = vmatprep.subr.mxu0 0.0
        %4283 = vmatpush1.msra.mxu0 0.0
        %4284 = vmatprep.subr.mxu0 0.0
        %4285 = vmatpush1.msra.mxu0 0.0
        %4286 = vmatprep.subr.mxu0 0.0
        %4287 = vmatpush1.msra.mxu0 0.0
        %4288 = vmatprep.subr.mxu0 0.0
        %4289 = vmatpush1.msra.mxu0 0.0
        %4290 = vmatprep.subr.mxu0 0.0
        %4291 = vmatpush1.msra.mxu0 0.0
        %4292 = vmatprep.subr.mxu0 0.0
        %4293 = vmatpush1.msra.mxu0 0.0
        %4294 = vmatprep.subr.mxu0 0.0
        %4295 = vmatpush1.msra.mxu0 0.0
        %4296 = vmatprep.subr.mxu0 0.0
        %4297 = vmatpush1.msra.mxu0 0.0
        %4298 = vmatprep.subr.mxu0 0.0
        %4299 = vmatpush1.msra.mxu0 0.0
        %4300 = vmatprep.subr.mxu0 0.0
        %4301 = vmatpush1.msra.mxu0 0.0
        %4302 = vmatprep.subr.mxu0 0.0
        %4303 = vmatpush1.msra.mxu0 0.0
        %4304 = vmatprep.subr.mxu0 0.0
        %4305 = vmatpush1.msra.mxu0 0.0
        %4306 = vmatprep.subr.mxu0 0.0
        %4307 = vmatpush1.msra.mxu0 0.0
        %4308 = vmatprep.subr.mxu0 0.0
        %4309 = vmatpush1.msra.mxu0 0.0
        %4310 = vmatprep.subr.mxu0 0.0
        %4311 = vmatpush1.msra.mxu0 0.0
        %4312 = vmatprep.subr.mxu0 0.0
        %4313 = vmatpush1.msra.mxu0 0.0
        %4314 = vmatprep.subr.mxu0 0.0
        %4315 = vmatpush1.msra.mxu0 0.0
        %4316 = vmatprep.mubr.f32.mxu0 0.0
        %4317 = vmatmul.mubr.f32.gmra.mrb[0].mxu0 %v4229
        %v4318 = vpop.f32.mrb[0].mxu0
        %v4319 = vadd.f32 0.0, %v4318
        %v4320 = vpop.f32.mrb[0].mxu0
        %4321 = vmatprep.mubr.f32.mxu0 0.0
        %4322 = vmatmul.mubr.f32.gmra.mrb[0].mxu0 %v4232
        %v4323 = vpop.f32.mrb[0].mxu0
        %v4324 = vadd.f32 0.0, %v4323
        %v4325 = vpop.f32.mrb[0].mxu0
        %4326 = vmatprep.mubr.f32.mxu0 0.0
        %4327 = vmatmul.mubr.f32.gmra.mrb[0].mxu0 %v4235
        %v4328 = vpop.f32.mrb[0].mxu0
        %v4329 = vadd.f32 0.0, %v4328
        %v4330 = vpop.f32.mrb[0].mxu0
        %4331 = vmatprep.mubr.f32.mxu0 0.0
        %4332 = vmatmul.mubr.f32.gmra.mrb[0].mxu0 %v4238
        %v4333 = vpop.f32.mrb[0].mxu0
        %v4334 = vadd.f32 0.0, %v4333
        %v4335 = vpop.f32.mrb[0].mxu0
        %4336 = vmatprep.mubr.f32.mxu0 0.0
        %4337 = vmatmul.mubr.f32.gmra.mrb[0].mxu0 %v4241
        %v4338 = vpop.f32.mrb[0].mxu0
        %v4339 = vadd.f32 0.0, %v4338
        %v4340 = vpop.f32.mrb[0].mxu0
        %4341 = vmatprep.mubr.f32.mxu0 0.0
        %4342 = vmatmul.mubr.f32.gmra.mrb[0].mxu0 %v4244
        %v4343 = vpop.f32.mrb[0].mxu0
        %v4344 = vadd.f32 0.0, %v4343
        %v4345 = vpop.f32.mrb[0].mxu0
        %4346 = vmatprep.mubr.f32.mxu0 0.0
        %4347 = vmatmul.mubr.f32.gmra.mrb[0].mxu0 %v4247
        %v4348 = vpop.f32.mrb[0].mxu0
        %v4349 = vadd.f32 0.0, %v4348
        %v4350 = vpop.f32.mrb[0].mxu0
        %4351 = vmatprep.mubr.f32.mxu0 0.0
        %4352 = vmatmul.mubr.f32.gmra.mrb[0].mxu0 %v4250
        %v4353 = vpop.f32.mrb[0].mxu0
        %v4354 = vadd.f32 0.0, %v4353
        %v4355 = vpop.f32.mrb[0].mxu0
        %4356 = vdwg.mxu0
        %v4357 = vld [vmem:[#allocation23] sm:$0xf]
        %v4359 = vsel %vm1434, %v4319, 0
        %v4362 = vsel %vm1434, %v4324, 0
        %v4365 = vsel %vm1434, %v4329, 0
        %v4368 = vsel %vm1434, %v4334, 0
        %v4371 = vsel %vm1434, %v4339, 0
        %v4374 = vsel %vm1434, %v4344, 0
        %v4377 = vsel %vm1434, %v4349, 0
        %v4380 = vsel %vm1434, %v4354, 0
        %v4383 = vsel %vm1451, %v4357, 0
        %4385 = vmatprep.subr.mxu0 0.0
        %4386 = vmatpush1.msra.mxu0 %v4383
        %4387 = vmatprep.subr.mxu0 0.0
        %4388 = vmatpush1.msra.mxu0 0.0
        %4389 = vmatprep.subr.mxu0 0.0
        %4390 = vmatpush1.msra.mxu0 0.0
        %4391 = vmatprep.subr.mxu0 0.0
        %4392 = vmatpush1.msra.mxu0 0.0
        %4393 = vmatprep.subr.mxu0 0.0
        %4394 = vmatpush1.msra.mxu0 0.0
        %4395 = vmatprep.subr.mxu0 0.0
        %4396 = vmatpush1.msra.mxu0 0.0
        %4397 = vmatprep.subr.mxu0 0.0
        %4398 = vmatpush1.msra.mxu0 0.0
        %4399 = vmatprep.subr.mxu0 0.0
        %4400 = vmatpush1.msra.mxu0 0.0
        %4401 = vmatprep.subr.mxu0 0.0
        %4402 = vmatpush1.msra.mxu0 0.0
        %4403 = vmatprep.subr.mxu0 0.0
        %4404 = vmatpush1.msra.mxu0 0.0
        %4405 = vmatprep.subr.mxu0 0.0
        %4406 = vmatpush1.msra.mxu0 0.0
        %4407 = vmatprep.subr.mxu0 0.0
        %4408 = vmatpush1.msra.mxu0 0.0
        %4409 = vmatprep.subr.mxu0 0.0
        %4410 = vmatpush1.msra.mxu0 0.0
        %4411 = vmatprep.subr.mxu0 0.0
        %4412 = vmatpush1.msra.mxu0 0.0
        %4413 = vmatprep.subr.mxu0 0.0
        %4414 = vmatpush1.msra.mxu0 0.0
        %4415 = vmatprep.subr.mxu0 0.0
        %4416 = vmatpush1.msra.mxu0 0.0
        %4417 = vmatprep.subr.mxu0 0.0
        %4418 = vmatpush1.msra.mxu0 0.0
        %4419 = vmatprep.subr.mxu0 0.0
        %4420 = vmatpush1.msra.mxu0 0.0
        %4421 = vmatprep.subr.mxu0 0.0
        %4422 = vmatpush1.msra.mxu0 0.0
        %4423 = vmatprep.subr.mxu0 0.0
        %4424 = vmatpush1.msra.mxu0 0.0
        %4425 = vmatprep.subr.mxu0 0.0
        %4426 = vmatpush1.msra.mxu0 0.0
        %4427 = vmatprep.subr.mxu0 0.0
        %4428 = vmatpush1.msra.mxu0 0.0
        %4429 = vmatprep.subr.mxu0 0.0
        %4430 = vmatpush1.msra.mxu0 0.0
        %4431 = vmatprep.subr.mxu0 0.0
        %4432 = vmatpush1.msra.mxu0 0.0
        %4433 = vmatprep.subr.mxu0 0.0
        %4434 = vmatpush1.msra.mxu0 0.0
        %4435 = vmatprep.subr.mxu0 0.0
        %4436 = vmatpush1.msra.mxu0 0.0
        %4437 = vmatprep.subr.mxu0 0.0
        %4438 = vmatpush1.msra.mxu0 0.0
        %4439 = vmatprep.subr.mxu0 0.0
        %4440 = vmatpush1.msra.mxu0 0.0
        %4441 = vmatprep.subr.mxu0 0.0
        %4442 = vmatpush1.msra.mxu0 0.0
        %4443 = vmatprep.subr.mxu0 0.0
        %4444 = vmatpush1.msra.mxu0 0.0
        %4445 = vmatprep.subr.mxu0 0.0
        %4446 = vmatpush1.msra.mxu0 0.0
        %4447 = vmatprep.subr.mxu0 0.0
        %4448 = vmatpush1.msra.mxu0 0.0
        %4449 = vmatprep.mubr.f32.mxu0 0.0
        %4450 = vmatmul.mubr.f32.gmra.mrb[0].mxu0 %v4359
        %v4451 = vpop.f32.mrb[0].mxu0
        %v4452 = vadd.f32 0.0, %v4451
        %v4453 = vpop.f32.mrb[0].mxu0
        %4454 = vmatprep.mubr.f32.mxu0 0.0
        %4455 = vmatmul.mubr.f32.gmra.mrb[0].mxu0 %v4362
        %v4456 = vpop.f32.mrb[0].mxu0
        %v4457 = vadd.f32 0.0, %v4456
        %v4458 = vpop.f32.mrb[0].mxu0
        %4459 = vmatprep.mubr.f32.mxu0 0.0
        %4460 = vmatmul.mubr.f32.gmra.mrb[0].mxu0 %v4365
        %v4461 = vpop.f32.mrb[0].mxu0
        %v4462 = vadd.f32 0.0, %v4461
        %v4463 = vpop.f32.mrb[0].mxu0
        %4464 = vmatprep.mubr.f32.mxu0 0.0
        %4465 = vmatmul.mubr.f32.gmra.mrb[0].mxu0 %v4368
        %v4466 = vpop.f32.mrb[0].mxu0
        %v4467 = vadd.f32 0.0, %v4466
        %v4468 = vpop.f32.mrb[0].mxu0
        %4469 = vmatprep.mubr.f32.mxu0 0.0
        %4470 = vmatmul.mubr.f32.gmra.mrb[0].mxu0 %v4371
        %v4471 = vpop.f32.mrb[0].mxu0
        %v4472 = vadd.f32 0.0, %v4471
        %v4473 = vpop.f32.mrb[0].mxu0
        %4474 = vmatprep.mubr.f32.mxu0 0.0
        %4475 = vmatmul.mubr.f32.gmra.mrb[0].mxu0 %v4374
        %v4476 = vpop.f32.mrb[0].mxu0
        %v4477 = vadd.f32 0.0, %v4476
        %v4478 = vpop.f32.mrb[0].mxu0
        %4479 = vmatprep.mubr.f32.mxu0 0.0
        %4480 = vmatmul.mubr.f32.gmra.mrb[0].mxu0 %v4377
        %v4481 = vpop.f32.mrb[0].mxu0
        %v4482 = vadd.f32 0.0, %v4481
        %v4483 = vpop.f32.mrb[0].mxu0
        %4484 = vmatprep.mubr.f32.mxu0 0.0
        %4485 = vmatmul.mubr.f32.gmra.mrb[0].mxu0 %v4380
        %v4486 = vpop.f32.mrb[0].mxu0
        %v4487 = vadd.f32 0.0, %v4486
        %v4488 = vpop.f32.mrb[0].mxu0
        %4489 = vdwg.mxu0
        %v4490 = vrcp.pop %v4452
        %v4491 = vrcp.pop %v4457
        %v4492 = vrcp.pop %v4462
        %v4493 = vrcp.pop %v4467
        %v4494 = vrcp.pop %v4472
        %v4495 = vrcp.pop %v4477
        %v4496 = vrcp.pop %v4482
        %v4497 = vrcp.pop %v4487
        %v4498 = vmul.f32 %v4209, %v4490
        %v4499 = vmul.f32 %v4211, %v4491
        %v4500 = vmul.f32 %v4213, %v4492
        %v4501 = vmul.f32 %v4215, %v4493
        %v4502 = vmul.f32 %v4217, %v4494
        %v4503 = vmul.f32 %v4219, %v4495
        %v4504 = vmul.f32 %v4221, %v4496
        %v4505 = vmul.f32 %v4223, %v4497
        %v4506 = vld [vmem:[%s43] sm:$0xff]
        %v4507 = vld [vmem:[%s43 + $0x8] sm:$0xff]
        %v4508 = vld [vmem:[%s43 + $0x10] sm:$0xff]
        %v4509 = vld [vmem:[%s43 + $0x18] sm:$0xff]
        %v4510 = vmul.f32 %v3422, %v4506
        %v4511 = vmul.f32 %v3422, %v4507
        %v4512 = vmul.f32 %v3422, %v4508
        %v4513 = vmul.f32 %v3422, %v4509
        %v4514 = vmul.f32 %v3427, %v4506
        %v4515 = vmul.f32 %v3427, %v4507
        %v4516 = vmul.f32 %v3427, %v4508
        %v4517 = vmul.f32 %v3427, %v4509
        %v4518 = vmul.f32 %v3432, %v4506
        %v4519 = vmul.f32 %v3432, %v4507
        %v4520 = vmul.f32 %v3432, %v4508
        %v4521 = vmul.f32 %v3432, %v4509
        %v4522 = vmul.f32 %v3437, %v4506
        %v4523 = vmul.f32 %v3437, %v4507
        %v4524 = vmul.f32 %v3437, %v4508
        %v4525 = vmul.f32 %v3437, %v4509
        %v4526 = vmul.f32 %v3442, %v4506
        %v4527 = vmul.f32 %v3442, %v4507
        %v4528 = vmul.f32 %v3442, %v4508
        %v4529 = vmul.f32 %v3442, %v4509
        %v4530 = vmul.f32 %v3447, %v4506
        %v4531 = vmul.f32 %v3447, %v4507
        %v4532 = vmul.f32 %v3447, %v4508
        %v4533 = vmul.f32 %v3447, %v4509
        %v4534 = vmul.f32 %v3452, %v4506
        %v4535 = vmul.f32 %v3452, %v4507
        %v4536 = vmul.f32 %v3452, %v4508
        %v4537 = vmul.f32 %v3452, %v4509
        %v4538 = vmul.f32 %v3457, %v4506
        %v4539 = vmul.f32 %v3457, %v4507
        %v4540 = vmul.f32 %v3457, %v4508
        %v4541 = vmul.f32 %v3457, %v4509
        %v4543 = vsel %vm1883, %v4498, 0
        %4545 = vmatprep.subr.mxu0 0.0
        %4546 = vmatpush1.msra.mxu0 %v4510
        %4547 = vmatprep.subr.mxu0 0.0
        %4548 = vmatpush1.msra.mxu0 %v4511
        %4549 = vmatprep.subr.mxu0 0.0
        %4550 = vmatpush1.msra.mxu0 %v4512
        %4551 = vmatprep.subr.mxu0 0.0
        %4552 = vmatpush1.msra.mxu0 %v4513
        %4553 = vmatprep.subr.mxu0 0.0
        %4554 = vmatpush1.msra.mxu0 0.0
        %4555 = vmatprep.subr.mxu0 0.0
        %4556 = vmatpush1.msra.mxu0 0.0
        %4557 = vmatprep.subr.mxu0 0.0
        %4558 = vmatpush1.msra.mxu0 0.0
        %4559 = vmatprep.subr.mxu0 0.0
        %4560 = vmatpush1.msra.mxu0 0.0
        %4561 = vmatprep.subr.mxu0 0.0
        %4562 = vmatpush1.msra.mxu0 0.0
        %4563 = vmatprep.subr.mxu0 0.0
        %4564 = vmatpush1.msra.mxu0 0.0
        %4565 = vmatprep.subr.mxu0 0.0
        %4566 = vmatpush1.msra.mxu0 0.0
        %4567 = vmatprep.subr.mxu0 0.0
        %4568 = vmatpush1.msra.mxu0 0.0
        %4569 = vmatprep.subr.mxu0 0.0
        %4570 = vmatpush1.msra.mxu0 0.0
        %4571 = vmatprep.subr.mxu0 0.0
        %4572 = vmatpush1.msra.mxu0 0.0
        %4573 = vmatprep.subr.mxu0 0.0
        %4574 = vmatpush1.msra.mxu0 0.0
        %4575 = vmatprep.subr.mxu0 0.0
        %4576 = vmatpush1.msra.mxu0 0.0
        %4577 = vmatprep.subr.mxu0 0.0
        %4578 = vmatpush1.msra.mxu0 0.0
        %4579 = vmatprep.subr.mxu0 0.0
        %4580 = vmatpush1.msra.mxu0 0.0
        %4581 = vmatprep.subr.mxu0 0.0
        %4582 = vmatpush1.msra.mxu0 0.0
        %4583 = vmatprep.subr.mxu0 0.0
        %4584 = vmatpush1.msra.mxu0 0.0
        %4585 = vmatprep.subr.mxu0 0.0
        %4586 = vmatpush1.msra.mxu0 0.0
        %4587 = vmatprep.subr.mxu0 0.0
        %4588 = vmatpush1.msra.mxu0 0.0
        %4589 = vmatprep.subr.mxu0 0.0
        %4590 = vmatpush1.msra.mxu0 0.0
        %4591 = vmatprep.subr.mxu0 0.0
        %4592 = vmatpush1.msra.mxu0 0.0
        %4593 = vmatprep.subr.mxu0 0.0
        %4594 = vmatpush1.msra.mxu0 0.0
        %4595 = vmatprep.subr.mxu0 0.0
        %4596 = vmatpush1.msra.mxu0 0.0
        %4597 = vmatprep.subr.mxu0 0.0
        %4598 = vmatpush1.msra.mxu0 0.0
        %4599 = vmatprep.subr.mxu0 0.0
        %4600 = vmatpush1.msra.mxu0 0.0
        %4601 = vmatprep.subr.mxu0 0.0
        %4602 = vmatpush1.msra.mxu0 0.0
        %4603 = vmatprep.subr.mxu0 0.0
        %4604 = vmatpush1.msra.mxu0 0.0
        %4605 = vmatprep.subr.mxu0 0.0
        %4606 = vmatpush1.msra.mxu0 0.0
        %4607 = vmatprep.subr.mxu0 0.0
        %4608 = vmatpush1.msra.mxu0 0.0
        %4609 = vmatprep.mubr.f32.mxu0 0.0
        %4610 = vmatmul.mubr.f32.gmra.mrb[0].mxu0 %v4543
        %v4611 = vpop.f32.mrb[0].mxu0
        %v4612 = vadd.f32 0.0, %v4611
        %v4613 = vpop.f32.mrb[0].mxu0
        %4614 = vdwg.mxu0
        %v4616 = vsel %vm1883, %v4499, 0
        %4618 = vmatprep.subr.mxu0 0.0
        %4619 = vmatpush1.msra.mxu0 %v4514
        %4620 = vmatprep.subr.mxu0 0.0
        %4621 = vmatpush1.msra.mxu0 %v4515
        %4622 = vmatprep.subr.mxu0 0.0
        %4623 = vmatpush1.msra.mxu0 %v4516
        %4624 = vmatprep.subr.mxu0 0.0
        %4625 = vmatpush1.msra.mxu0 %v4517
        %4626 = vmatprep.subr.mxu0 0.0
        %4627 = vmatpush1.msra.mxu0 0.0
        %4628 = vmatprep.subr.mxu0 0.0
        %4629 = vmatpush1.msra.mxu0 0.0
        %4630 = vmatprep.subr.mxu0 0.0
        %4631 = vmatpush1.msra.mxu0 0.0
        %4632 = vmatprep.subr.mxu0 0.0
        %4633 = vmatpush1.msra.mxu0 0.0
        %4634 = vmatprep.subr.mxu0 0.0
        %4635 = vmatpush1.msra.mxu0 0.0
        %4636 = vmatprep.subr.mxu0 0.0
        %4637 = vmatpush1.msra.mxu0 0.0
        %4638 = vmatprep.subr.mxu0 0.0
        %4639 = vmatpush1.msra.mxu0 0.0
        %4640 = vmatprep.subr.mxu0 0.0
        %4641 = vmatpush1.msra.mxu0 0.0
        %4642 = vmatprep.subr.mxu0 0.0
        %4643 = vmatpush1.msra.mxu0 0.0
        %4644 = vmatprep.subr.mxu0 0.0
        %4645 = vmatpush1.msra.mxu0 0.0
        %4646 = vmatprep.subr.mxu0 0.0
        %4647 = vmatpush1.msra.mxu0 0.0
        %4648 = vmatprep.subr.mxu0 0.0
        %4649 = vmatpush1.msra.mxu0 0.0
        %4650 = vmatprep.subr.mxu0 0.0
        %4651 = vmatpush1.msra.mxu0 0.0
        %4652 = vmatprep.subr.mxu0 0.0
        %4653 = vmatpush1.msra.mxu0 0.0
        %4654 = vmatprep.subr.mxu0 0.0
        %4655 = vmatpush1.msra.mxu0 0.0
        %4656 = vmatprep.subr.mxu0 0.0
        %4657 = vmatpush1.msra.mxu0 0.0
        %4658 = vmatprep.subr.mxu0 0.0
        %4659 = vmatpush1.msra.mxu0 0.0
        %4660 = vmatprep.subr.mxu0 0.0
        %4661 = vmatpush1.msra.mxu0 0.0
        %4662 = vmatprep.subr.mxu0 0.0
        %4663 = vmatpush1.msra.mxu0 0.0
        %4664 = vmatprep.subr.mxu0 0.0
        %4665 = vmatpush1.msra.mxu0 0.0
        %4666 = vmatprep.subr.mxu0 0.0
        %4667 = vmatpush1.msra.mxu0 0.0
        %4668 = vmatprep.subr.mxu0 0.0
        %4669 = vmatpush1.msra.mxu0 0.0
        %4670 = vmatprep.subr.mxu0 0.0
        %4671 = vmatpush1.msra.mxu0 0.0
        %4672 = vmatprep.subr.mxu0 0.0
        %4673 = vmatpush1.msra.mxu0 0.0
        %4674 = vmatprep.subr.mxu0 0.0
        %4675 = vmatpush1.msra.mxu0 0.0
        %4676 = vmatprep.subr.mxu0 0.0
        %4677 = vmatpush1.msra.mxu0 0.0
        %4678 = vmatprep.subr.mxu0 0.0
        %4679 = vmatpush1.msra.mxu0 0.0
        %4680 = vmatprep.subr.mxu0 0.0
        %4681 = vmatpush1.msra.mxu0 0.0
        %4682 = vmatprep.mubr.f32.mxu0 0.0
        %4683 = vmatmul.mubr.f32.gmra.mrb[0].mxu0 %v4616
        %v4684 = vpop.f32.mrb[0].mxu0
        %v4685 = vadd.f32 0.0, %v4684
        %v4686 = vpop.f32.mrb[0].mxu0
        %4687 = vdwg.mxu0
        %v4689 = vsel %vm1883, %v4500, 0
        %4691 = vmatprep.subr.mxu0 0.0
        %4692 = vmatpush1.msra.mxu0 %v4518
        %4693 = vmatprep.subr.mxu0 0.0
        %4694 = vmatpush1.msra.mxu0 %v4519
        %4695 = vmatprep.subr.mxu0 0.0
        %4696 = vmatpush1.msra.mxu0 %v4520
        %4697 = vmatprep.subr.mxu0 0.0
        %4698 = vmatpush1.msra.mxu0 %v4521
        %4699 = vmatprep.subr.mxu0 0.0
        %4700 = vmatpush1.msra.mxu0 0.0
        %4701 = vmatprep.subr.mxu0 0.0
        %4702 = vmatpush1.msra.mxu0 0.0
        %4703 = vmatprep.subr.mxu0 0.0
        %4704 = vmatpush1.msra.mxu0 0.0
        %4705 = vmatprep.subr.mxu0 0.0
        %4706 = vmatpush1.msra.mxu0 0.0
        %4707 = vmatprep.subr.mxu0 0.0
        %4708 = vmatpush1.msra.mxu0 0.0
        %4709 = vmatprep.subr.mxu0 0.0
        %4710 = vmatpush1.msra.mxu0 0.0
        %4711 = vmatprep.subr.mxu0 0.0
        %4712 = vmatpush1.msra.mxu0 0.0
        %4713 = vmatprep.subr.mxu0 0.0
        %4714 = vmatpush1.msra.mxu0 0.0
        %4715 = vmatprep.subr.mxu0 0.0
        %4716 = vmatpush1.msra.mxu0 0.0
        %4717 = vmatprep.subr.mxu0 0.0
        %4718 = vmatpush1.msra.mxu0 0.0
        %4719 = vmatprep.subr.mxu0 0.0
        %4720 = vmatpush1.msra.mxu0 0.0
        %4721 = vmatprep.subr.mxu0 0.0
        %4722 = vmatpush1.msra.mxu0 0.0
        %4723 = vmatprep.subr.mxu0 0.0
        %4724 = vmatpush1.msra.mxu0 0.0
        %4725 = vmatprep.subr.mxu0 0.0
        %4726 = vmatpush1.msra.mxu0 0.0
        %4727 = vmatprep.subr.mxu0 0.0
        %4728 = vmatpush1.msra.mxu0 0.0
        %4729 = vmatprep.subr.mxu0 0.0
        %4730 = vmatpush1.msra.mxu0 0.0
        %4731 = vmatprep.subr.mxu0 0.0
        %4732 = vmatpush1.msra.mxu0 0.0
        %4733 = vmatprep.subr.mxu0 0.0
        %4734 = vmatpush1.msra.mxu0 0.0
        %4735 = vmatprep.subr.mxu0 0.0
        %4736 = vmatpush1.msra.mxu0 0.0
        %4737 = vmatprep.subr.mxu0 0.0
        %4738 = vmatpush1.msra.mxu0 0.0
        %4739 = vmatprep.subr.mxu0 0.0
        %4740 = vmatpush1.msra.mxu0 0.0
        %4741 = vmatprep.subr.mxu0 0.0
        %4742 = vmatpush1.msra.mxu0 0.0
        %4743 = vmatprep.subr.mxu0 0.0
        %4744 = vmatpush1.msra.mxu0 0.0
        %4745 = vmatprep.subr.mxu0 0.0
        %4746 = vmatpush1.msra.mxu0 0.0
        %4747 = vmatprep.subr.mxu0 0.0
        %4748 = vmatpush1.msra.mxu0 0.0
        %4749 = vmatprep.subr.mxu0 0.0
        %4750 = vmatpush1.msra.mxu0 0.0
        %4751 = vmatprep.subr.mxu0 0.0
        %4752 = vmatpush1.msra.mxu0 0.0
        %4753 = vmatprep.subr.mxu0 0.0
        %4754 = vmatpush1.msra.mxu0 0.0
        %4755 = vmatprep.mubr.f32.mxu0 0.0
        %4756 = vmatmul.mubr.f32.gmra.mrb[0].mxu0 %v4689
        %v4757 = vpop.f32.mrb[0].mxu0
        %v4758 = vadd.f32 0.0, %v4757
        %v4759 = vpop.f32.mrb[0].mxu0
        %4760 = vdwg.mxu0
        %v4762 = vsel %vm1883, %v4501, 0
        %4764 = vmatprep.subr.mxu0 0.0
        %4765 = vmatpush1.msra.mxu0 %v4522
        %4766 = vmatprep.subr.mxu0 0.0
        %4767 = vmatpush1.msra.mxu0 %v4523
        %4768 = vmatprep.subr.mxu0 0.0
        %4769 = vmatpush1.msra.mxu0 %v4524
        %4770 = vmatprep.subr.mxu0 0.0
        %4771 = vmatpush1.msra.mxu0 %v4525
        %4772 = vmatprep.subr.mxu0 0.0
        %4773 = vmatpush1.msra.mxu0 0.0
        %4774 = vmatprep.subr.mxu0 0.0
        %4775 = vmatpush1.msra.mxu0 0.0
        %4776 = vmatprep.subr.mxu0 0.0
        %4777 = vmatpush1.msra.mxu0 0.0
        %4778 = vmatprep.subr.mxu0 0.0
        %4779 = vmatpush1.msra.mxu0 0.0
        %4780 = vmatprep.subr.mxu0 0.0
        %4781 = vmatpush1.msra.mxu0 0.0
        %4782 = vmatprep.subr.mxu0 0.0
        %4783 = vmatpush1.msra.mxu0 0.0
        %4784 = vmatprep.subr.mxu0 0.0
        %4785 = vmatpush1.msra.mxu0 0.0
        %4786 = vmatprep.subr.mxu0 0.0
        %4787 = vmatpush1.msra.mxu0 0.0
        %4788 = vmatprep.subr.mxu0 0.0
        %4789 = vmatpush1.msra.mxu0 0.0
        %4790 = vmatprep.subr.mxu0 0.0
        %4791 = vmatpush1.msra.mxu0 0.0
        %4792 = vmatprep.subr.mxu0 0.0
        %4793 = vmatpush1.msra.mxu0 0.0
        %4794 = vmatprep.subr.mxu0 0.0
        %4795 = vmatpush1.msra.mxu0 0.0
        %4796 = vmatprep.subr.mxu0 0.0
        %4797 = vmatpush1.msra.mxu0 0.0
        %4798 = vmatprep.subr.mxu0 0.0
        %4799 = vmatpush1.msra.mxu0 0.0
        %4800 = vmatprep.subr.mxu0 0.0
        %4801 = vmatpush1.msra.mxu0 0.0
        %4802 = vmatprep.subr.mxu0 0.0
        %4803 = vmatpush1.msra.mxu0 0.0
        %4804 = vmatprep.subr.mxu0 0.0
        %4805 = vmatpush1.msra.mxu0 0.0
        %4806 = vmatprep.subr.mxu0 0.0
        %4807 = vmatpush1.msra.mxu0 0.0
        %4808 = vmatprep.subr.mxu0 0.0
        %4809 = vmatpush1.msra.mxu0 0.0
        %4810 = vmatprep.subr.mxu0 0.0
        %4811 = vmatpush1.msra.mxu0 0.0
        %4812 = vmatprep.subr.mxu0 0.0
        %4813 = vmatpush1.msra.mxu0 0.0
        %4814 = vmatprep.subr.mxu0 0.0
        %4815 = vmatpush1.msra.mxu0 0.0
        %4816 = vmatprep.subr.mxu0 0.0
        %4817 = vmatpush1.msra.mxu0 0.0
        %4818 = vmatprep.subr.mxu0 0.0
        %4819 = vmatpush1.msra.mxu0 0.0
        %4820 = vmatprep.subr.mxu0 0.0
        %4821 = vmatpush1.msra.mxu0 0.0
        %4822 = vmatprep.subr.mxu0 0.0
        %4823 = vmatpush1.msra.mxu0 0.0
        %4824 = vmatprep.subr.mxu0 0.0
        %4825 = vmatpush1.msra.mxu0 0.0
        %4826 = vmatprep.subr.mxu0 0.0
        %4827 = vmatpush1.msra.mxu0 0.0
        %4828 = vmatprep.mubr.f32.mxu0 0.0
        %4829 = vmatmul.mubr.f32.gmra.mrb[0].mxu0 %v4762
        %v4830 = vpop.f32.mrb[0].mxu0
        %v4831 = vadd.f32 0.0, %v4830
        %v4832 = vpop.f32.mrb[0].mxu0
        %4833 = vdwg.mxu0
        %v4835 = vsel %vm1883, %v4502, 0
        %4837 = vmatprep.subr.mxu0 0.0
        %4838 = vmatpush1.msra.mxu0 %v4526
        %4839 = vmatprep.subr.mxu0 0.0
        %4840 = vmatpush1.msra.mxu0 %v4527
        %4841 = vmatprep.subr.mxu0 0.0
        %4842 = vmatpush1.msra.mxu0 %v4528
        %4843 = vmatprep.subr.mxu0 0.0
        %4844 = vmatpush1.msra.mxu0 %v4529
        %4845 = vmatprep.subr.mxu0 0.0
        %4846 = vmatpush1.msra.mxu0 0.0
        %4847 = vmatprep.subr.mxu0 0.0
        %4848 = vmatpush1.msra.mxu0 0.0
        %4849 = vmatprep.subr.mxu0 0.0
        %4850 = vmatpush1.msra.mxu0 0.0
        %4851 = vmatprep.subr.mxu0 0.0
        %4852 = vmatpush1.msra.mxu0 0.0
        %4853 = vmatprep.subr.mxu0 0.0
        %4854 = vmatpush1.msra.mxu0 0.0
        %4855 = vmatprep.subr.mxu0 0.0
        %4856 = vmatpush1.msra.mxu0 0.0
        %4857 = vmatprep.subr.mxu0 0.0
        %4858 = vmatpush1.msra.mxu0 0.0
        %4859 = vmatprep.subr.mxu0 0.0
        %4860 = vmatpush1.msra.mxu0 0.0
        %4861 = vmatprep.subr.mxu0 0.0
        %4862 = vmatpush1.msra.mxu0 0.0
        %4863 = vmatprep.subr.mxu0 0.0
        %4864 = vmatpush1.msra.mxu0 0.0
        %4865 = vmatprep.subr.mxu0 0.0
        %4866 = vmatpush1.msra.mxu0 0.0
        %4867 = vmatprep.subr.mxu0 0.0
        %4868 = vmatpush1.msra.mxu0 0.0
        %4869 = vmatprep.subr.mxu0 0.0
        %4870 = vmatpush1.msra.mxu0 0.0
        %4871 = vmatprep.subr.mxu0 0.0
        %4872 = vmatpush1.msra.mxu0 0.0
        %4873 = vmatprep.subr.mxu0 0.0
        %4874 = vmatpush1.msra.mxu0 0.0
        %4875 = vmatprep.subr.mxu0 0.0
        %4876 = vmatpush1.msra.mxu0 0.0
        %4877 = vmatprep.subr.mxu0 0.0
        %4878 = vmatpush1.msra.mxu0 0.0
        %4879 = vmatprep.subr.mxu0 0.0
        %4880 = vmatpush1.msra.mxu0 0.0
        %4881 = vmatprep.subr.mxu0 0.0
        %4882 = vmatpush1.msra.mxu0 0.0
        %4883 = vmatprep.subr.mxu0 0.0
        %4884 = vmatpush1.msra.mxu0 0.0
        %4885 = vmatprep.subr.mxu0 0.0
        %4886 = vmatpush1.msra.mxu0 0.0
        %4887 = vmatprep.subr.mxu0 0.0
        %4888 = vmatpush1.msra.mxu0 0.0
        %4889 = vmatprep.subr.mxu0 0.0
        %4890 = vmatpush1.msra.mxu0 0.0
        %4891 = vmatprep.subr.mxu0 0.0
        %4892 = vmatpush1.msra.mxu0 0.0
        %4893 = vmatprep.subr.mxu0 0.0
        %4894 = vmatpush1.msra.mxu0 0.0
        %4895 = vmatprep.subr.mxu0 0.0
        %4896 = vmatpush1.msra.mxu0 0.0
        %4897 = vmatprep.subr.mxu0 0.0
        %4898 = vmatpush1.msra.mxu0 0.0
        %4899 = vmatprep.subr.mxu0 0.0
        %4900 = vmatpush1.msra.mxu0 0.0
        %4901 = vmatprep.mubr.f32.mxu0 0.0
        %4902 = vmatmul.mubr.f32.gmra.mrb[0].mxu0 %v4835
        %v4903 = vpop.f32.mrb[0].mxu0
        %v4904 = vadd.f32 0.0, %v4903
        %v4905 = vpop.f32.mrb[0].mxu0
        %4906 = vdwg.mxu0
        %v4908 = vsel %vm1883, %v4503, 0
        %4910 = vmatprep.subr.mxu0 0.0
        %4911 = vmatpush1.msra.mxu0 %v4530
        %4912 = vmatprep.subr.mxu0 0.0
        %4913 = vmatpush1.msra.mxu0 %v4531
        %4914 = vmatprep.subr.mxu0 0.0
        %4915 = vmatpush1.msra.mxu0 %v4532
        %4916 = vmatprep.subr.mxu0 0.0
        %4917 = vmatpush1.msra.mxu0 %v4533
        %4918 = vmatprep.subr.mxu0 0.0
        %4919 = vmatpush1.msra.mxu0 0.0
        %4920 = vmatprep.subr.mxu0 0.0
        %4921 = vmatpush1.msra.mxu0 0.0
        %4922 = vmatprep.subr.mxu0 0.0
        %4923 = vmatpush1.msra.mxu0 0.0
        %4924 = vmatprep.subr.mxu0 0.0
        %4925 = vmatpush1.msra.mxu0 0.0
        %4926 = vmatprep.subr.mxu0 0.0
        %4927 = vmatpush1.msra.mxu0 0.0
        %4928 = vmatprep.subr.mxu0 0.0
        %4929 = vmatpush1.msra.mxu0 0.0
        %4930 = vmatprep.subr.mxu0 0.0
        %4931 = vmatpush1.msra.mxu0 0.0
        %4932 = vmatprep.subr.mxu0 0.0
        %4933 = vmatpush1.msra.mxu0 0.0
        %4934 = vmatprep.subr.mxu0 0.0
        %4935 = vmatpush1.msra.mxu0 0.0
        %4936 = vmatprep.subr.mxu0 0.0
        %4937 = vmatpush1.msra.mxu0 0.0
        %4938 = vmatprep.subr.mxu0 0.0
        %4939 = vmatpush1.msra.mxu0 0.0
        %4940 = vmatprep.subr.mxu0 0.0
        %4941 = vmatpush1.msra.mxu0 0.0
        %4942 = vmatprep.subr.mxu0 0.0
        %4943 = vmatpush1.msra.mxu0 0.0
        %4944 = vmatprep.subr.mxu0 0.0
        %4945 = vmatpush1.msra.mxu0 0.0
        %4946 = vmatprep.subr.mxu0 0.0
        %4947 = vmatpush1.msra.mxu0 0.0
        %4948 = vmatprep.subr.mxu0 0.0
        %4949 = vmatpush1.msra.mxu0 0.0
        %4950 = vmatprep.subr.mxu0 0.0
        %4951 = vmatpush1.msra.mxu0 0.0
        %4952 = vmatprep.subr.mxu0 0.0
        %4953 = vmatpush1.msra.mxu0 0.0
        %4954 = vmatprep.subr.mxu0 0.0
        %4955 = vmatpush1.msra.mxu0 0.0
        %4956 = vmatprep.subr.mxu0 0.0
        %4957 = vmatpush1.msra.mxu0 0.0
        %4958 = vmatprep.subr.mxu0 0.0
        %4959 = vmatpush1.msra.mxu0 0.0
        %4960 = vmatprep.subr.mxu0 0.0
        %4961 = vmatpush1.msra.mxu0 0.0
        %4962 = vmatprep.subr.mxu0 0.0
        %4963 = vmatpush1.msra.mxu0 0.0
        %4964 = vmatprep.subr.mxu0 0.0
        %4965 = vmatpush1.msra.mxu0 0.0
        %4966 = vmatprep.subr.mxu0 0.0
        %4967 = vmatpush1.msra.mxu0 0.0
        %4968 = vmatprep.subr.mxu0 0.0
        %4969 = vmatpush1.msra.mxu0 0.0
        %4970 = vmatprep.subr.mxu0 0.0
        %4971 = vmatpush1.msra.mxu0 0.0
        %4972 = vmatprep.subr.mxu0 0.0
        %4973 = vmatpush1.msra.mxu0 0.0
        %4974 = vmatprep.mubr.f32.mxu0 0.0
        %4975 = vmatmul.mubr.f32.gmra.mrb[0].mxu0 %v4908
        %v4976 = vpop.f32.mrb[0].mxu0
        %v4977 = vadd.f32 0.0, %v4976
        %v4978 = vpop.f32.mrb[0].mxu0
        %4979 = vdwg.mxu0
        %v4981 = vsel %vm1883, %v4504, 0
        %4983 = vmatprep.subr.mxu0 0.0
        %4984 = vmatpush1.msra.mxu0 %v4534
        %4985 = vmatprep.subr.mxu0 0.0
        %4986 = vmatpush1.msra.mxu0 %v4535
        %4987 = vmatprep.subr.mxu0 0.0
        %4988 = vmatpush1.msra.mxu0 %v4536
        %4989 = vmatprep.subr.mxu0 0.0
        %4990 = vmatpush1.msra.mxu0 %v4537
        %4991 = vmatprep.subr.mxu0 0.0
        %4992 = vmatpush1.msra.mxu0 0.0
        %4993 = vmatprep.subr.mxu0 0.0
        %4994 = vmatpush1.msra.mxu0 0.0
        %4995 = vmatprep.subr.mxu0 0.0
        %4996 = vmatpush1.msra.mxu0 0.0
        %4997 = vmatprep.subr.mxu0 0.0
        %4998 = vmatpush1.msra.mxu0 0.0
        %4999 = vmatprep.subr.mxu0 0.0
        %5000 = vmatpush1.msra.mxu0 0.0
        %5001 = vmatprep.subr.mxu0 0.0
        %5002 = vmatpush1.msra.mxu0 0.0
        %5003 = vmatprep.subr.mxu0 0.0
        %5004 = vmatpush1.msra.mxu0 0.0
        %5005 = vmatprep.subr.mxu0 0.0
        %5006 = vmatpush1.msra.mxu0 0.0
        %5007 = vmatprep.subr.mxu0 0.0
        %5008 = vmatpush1.msra.mxu0 0.0
        %5009 = vmatprep.subr.mxu0 0.0
        %5010 = vmatpush1.msra.mxu0 0.0
        %5011 = vmatprep.subr.mxu0 0.0
        %5012 = vmatpush1.msra.mxu0 0.0
        %5013 = vmatprep.subr.mxu0 0.0
        %5014 = vmatpush1.msra.mxu0 0.0
        %5015 = vmatprep.subr.mxu0 0.0
        %5016 = vmatpush1.msra.mxu0 0.0
        %5017 = vmatprep.subr.mxu0 0.0
        %5018 = vmatpush1.msra.mxu0 0.0
        %5019 = vmatprep.subr.mxu0 0.0
        %5020 = vmatpush1.msra.mxu0 0.0
        %5021 = vmatprep.subr.mxu0 0.0
        %5022 = vmatpush1.msra.mxu0 0.0
        %5023 = vmatprep.subr.mxu0 0.0
        %5024 = vmatpush1.msra.mxu0 0.0
        %5025 = vmatprep.subr.mxu0 0.0
        %5026 = vmatpush1.msra.mxu0 0.0
        %5027 = vmatprep.subr.mxu0 0.0
        %5028 = vmatpush1.msra.mxu0 0.0
        %5029 = vmatprep.subr.mxu0 0.0
        %5030 = vmatpush1.msra.mxu0 0.0
        %5031 = vmatprep.subr.mxu0 0.0
        %5032 = vmatpush1.msra.mxu0 0.0
        %5033 = vmatprep.subr.mxu0 0.0
        %5034 = vmatpush1.msra.mxu0 0.0
        %5035 = vmatprep.subr.mxu0 0.0
        %5036 = vmatpush1.msra.mxu0 0.0
        %5037 = vmatprep.subr.mxu0 0.0
        %5038 = vmatpush1.msra.mxu0 0.0
        %5039 = vmatprep.subr.mxu0 0.0
        %5040 = vmatpush1.msra.mxu0 0.0
        %5041 = vmatprep.subr.mxu0 0.0
        %5042 = vmatpush1.msra.mxu0 0.0
        %5043 = vmatprep.subr.mxu0 0.0
        %5044 = vmatpush1.msra.mxu0 0.0
        %5045 = vmatprep.subr.mxu0 0.0
        %5046 = vmatpush1.msra.mxu0 0.0
        %5047 = vmatprep.mubr.f32.mxu0 0.0
        %5048 = vmatmul.mubr.f32.gmra.mrb[0].mxu0 %v4981
        %v5049 = vpop.f32.mrb[0].mxu0
        %v5050 = vadd.f32 0.0, %v5049
        %v5051 = vpop.f32.mrb[0].mxu0
        %5052 = vdwg.mxu0
        %v5054 = vsel %vm1883, %v4505, 0
        %5056 = vmatprep.subr.mxu0 0.0
        %5057 = vmatpush1.msra.mxu0 %v4538
        %5058 = vmatprep.subr.mxu0 0.0
        %5059 = vmatpush1.msra.mxu0 %v4539
        %5060 = vmatprep.subr.mxu0 0.0
        %5061 = vmatpush1.msra.mxu0 %v4540
        %5062 = vmatprep.subr.mxu0 0.0
        %5063 = vmatpush1.msra.mxu0 %v4541
        %5064 = vmatprep.subr.mxu0 0.0
        %5065 = vmatpush1.msra.mxu0 0.0
        %5066 = vmatprep.subr.mxu0 0.0
        %5067 = vmatpush1.msra.mxu0 0.0
        %5068 = vmatprep.subr.mxu0 0.0
        %5069 = vmatpush1.msra.mxu0 0.0
        %5070 = vmatprep.subr.mxu0 0.0
        %5071 = vmatpush1.msra.mxu0 0.0
        %5072 = vmatprep.subr.mxu0 0.0
        %5073 = vmatpush1.msra.mxu0 0.0
        %5074 = vmatprep.subr.mxu0 0.0
        %5075 = vmatpush1.msra.mxu0 0.0
        %5076 = vmatprep.subr.mxu0 0.0
        %5077 = vmatpush1.msra.mxu0 0.0
        %5078 = vmatprep.subr.mxu0 0.0
        %5079 = vmatpush1.msra.mxu0 0.0
        %5080 = vmatprep.subr.mxu0 0.0
        %5081 = vmatpush1.msra.mxu0 0.0
        %5082 = vmatprep.subr.mxu0 0.0
        %5083 = vmatpush1.msra.mxu0 0.0
        %5084 = vmatprep.subr.mxu0 0.0
        %5085 = vmatpush1.msra.mxu0 0.0
        %5086 = vmatprep.subr.mxu0 0.0
        %5087 = vmatpush1.msra.mxu0 0.0
        %5088 = vmatprep.subr.mxu0 0.0
        %5089 = vmatpush1.msra.mxu0 0.0
        %5090 = vmatprep.subr.mxu0 0.0
        %5091 = vmatpush1.msra.mxu0 0.0
        %5092 = vmatprep.subr.mxu0 0.0
        %5093 = vmatpush1.msra.mxu0 0.0
        %5094 = vmatprep.subr.mxu0 0.0
        %5095 = vmatpush1.msra.mxu0 0.0
        %5096 = vmatprep.subr.mxu0 0.0
        %5097 = vmatpush1.msra.mxu0 0.0
        %5098 = vmatprep.subr.mxu0 0.0
        %5099 = vmatpush1.msra.mxu0 0.0
        %5100 = vmatprep.subr.mxu0 0.0
        %5101 = vmatpush1.msra.mxu0 0.0
        %5102 = vmatprep.subr.mxu0 0.0
        %5103 = vmatpush1.msra.mxu0 0.0
        %5104 = vmatprep.subr.mxu0 0.0
        %5105 = vmatpush1.msra.mxu0 0.0
        %5106 = vmatprep.subr.mxu0 0.0
        %5107 = vmatpush1.msra.mxu0 0.0
        %5108 = vmatprep.subr.mxu0 0.0
        %5109 = vmatpush1.msra.mxu0 0.0
        %5110 = vmatprep.subr.mxu0 0.0
        %5111 = vmatpush1.msra.mxu0 0.0
        %5112 = vmatprep.subr.mxu0 0.0
        %5113 = vmatpush1.msra.mxu0 0.0
        %5114 = vmatprep.subr.mxu0 0.0
        %5115 = vmatpush1.msra.mxu0 0.0
        %5116 = vmatprep.subr.mxu0 0.0
        %5117 = vmatpush1.msra.mxu0 0.0
        %5118 = vmatprep.subr.mxu0 0.0
        %5119 = vmatpush1.msra.mxu0 0.0
        %5120 = vmatprep.mubr.f32.mxu0 0.0
        %5121 = vmatmul.mubr.f32.gmra.mrb[0].mxu0 %v5054
        %v5122 = vpop.f32.mrb[0].mxu0
        %v5123 = vadd.f32 0.0, %v5122
        %v5124 = vpop.f32.mrb[0].mxu0
        %5125 = vdwg.mxu0
        %v5126 = vld [vmem:[%s39] sm:$0xff]
        %v5127 = vld [vmem:[%s39 + $0x8] sm:$0xff]
        %v5128 = vld [vmem:[%s41] sm:$0x1]
        %v5130 = vlaneseq
        %v5131 = vshrl.u32 %v5130, 7
        %v5132 = vsub.s32 0, %v5131
        %v5133 = vrot.slane %v5128, %v5132
        %v5136 = vsel %vm1140, %v4612, 0
        %v5139 = vsel %vm1140, %v4685, 0
        %v5142 = vsel %vm1140, %v4758, 0
        %v5145 = vsel %vm1140, %v4831, 0
        %v5148 = vsel %vm1140, %v4904, 0
        %v5151 = vsel %vm1140, %v4977, 0
        %v5154 = vsel %vm1140, %v5050, 0
        %v5157 = vsel %vm1140, %v5123, 0
        %5159 = vmatprep.subr.mxu0 0.0
        %5160 = vmatpush1.msra.mxu0 %v5126
        %5161 = vmatprep.subr.mxu0 0.0
        %5162 = vmatpush1.msra.mxu0 %v5127
        %5163 = vmatprep.subr.mxu0 0.0
        %5164 = vmatpush1.msra.mxu0 0.0
        %5165 = vmatprep.subr.mxu0 0.0
        %5166 = vmatpush1.msra.mxu0 0.0
        %5167 = vmatprep.subr.mxu0 0.0
        %5168 = vmatpush1.msra.mxu0 0.0
        %5169 = vmatprep.subr.mxu0 0.0
        %5170 = vmatpush1.msra.mxu0 0.0
        %5171 = vmatprep.subr.mxu0 0.0
        %5172 = vmatpush1.msra.mxu0 0.0
        %5173 = vmatprep.subr.mxu0 0.0
        %5174 = vmatpush1.msra.mxu0 0.0
        %5175 = vmatprep.subr.mxu0 0.0
        %5176 = vmatpush1.msra.mxu0 0.0
        %5177 = vmatprep.subr.mxu0 0.0
        %5178 = vmatpush1.msra.mxu0 0.0
        %5179 = vmatprep.subr.mxu0 0.0
        %5180 = vmatpush1.msra.mxu0 0.0
        %5181 = vmatprep.subr.mxu0 0.0
        %5182 = vmatpush1.msra.mxu0 0.0
        %5183 = vmatprep.subr.mxu0 0.0
        %5184 = vmatpush1.msra.mxu0 0.0
        %5185 = vmatprep.subr.mxu0 0.0
        %5186 = vmatpush1.msra.mxu0 0.0
        %5187 = vmatprep.subr.mxu0 0.0
        %5188 = vmatpush1.msra.mxu0 0.0
        %5189 = vmatprep.subr.mxu0 0.0
        %5190 = vmatpush1.msra.mxu0 0.0
        %5191 = vmatprep.subr.mxu0 0.0
        %5192 = vmatpush1.msra.mxu0 0.0
        %5193 = vmatprep.subr.mxu0 0.0
        %5194 = vmatpush1.msra.mxu0 0.0
        %5195 = vmatprep.subr.mxu0 0.0
        %5196 = vmatpush1.msra.mxu0 0.0
        %5197 = vmatprep.subr.mxu0 0.0
        %5198 = vmatpush1.msra.mxu0 0.0
        %5199 = vmatprep.subr.mxu0 0.0
        %5200 = vmatpush1.msra.mxu0 0.0
        %5201 = vmatprep.subr.mxu0 0.0
        %5202 = vmatpush1.msra.mxu0 0.0
        %5203 = vmatprep.subr.mxu0 0.0
        %5204 = vmatpush1.msra.mxu0 0.0
        %5205 = vmatprep.subr.mxu0 0.0
        %5206 = vmatpush1.msra.mxu0 0.0
        %5207 = vmatprep.subr.mxu0 0.0
        %5208 = vmatpush1.msra.mxu0 0.0
        %5209 = vmatprep.subr.mxu0 0.0
        %5210 = vmatpush1.msra.mxu0 0.0
        %5211 = vmatprep.subr.mxu0 0.0
        %5212 = vmatpush1.msra.mxu0 0.0
        %5213 = vmatprep.subr.mxu0 0.0
        %5214 = vmatpush1.msra.mxu0 0.0
        %5215 = vmatprep.subr.mxu0 0.0
        %5216 = vmatpush1.msra.mxu0 0.0
        %5217 = vmatprep.subr.mxu0 0.0
        %5218 = vmatpush1.msra.mxu0 0.0
        %5219 = vmatprep.subr.mxu0 0.0
        %5220 = vmatpush1.msra.mxu0 0.0
        %5221 = vmatprep.subr.mxu0 0.0
        %5222 = vmatpush1.msra.mxu0 0.0
        %5223 = vmatprep.mubr.f32.mxu0 0.0
        %5224 = vmatmul.mubr.f32.gmra.mrb[0].mxu0 %v5136
        %v5225 = vpop.f32.mrb[0].mxu0
        %v5226 = vadd.f32 %v5133, %v5225
        %v5227 = vpop.f32.mrb[0].mxu0
        %5228 = vmatprep.mubr.f32.mxu0 0.0
        %5229 = vmatmul.mubr.f32.gmra.mrb[0].mxu0 %v5139
        %v5230 = vpop.f32.mrb[0].mxu0
        %v5231 = vadd.f32 %v5133, %v5230
        %v5232 = vpop.f32.mrb[0].mxu0
        %5233 = vmatprep.mubr.f32.mxu0 0.0
        %5234 = vmatmul.mubr.f32.gmra.mrb[0].mxu0 %v5142
        %v5235 = vpop.f32.mrb[0].mxu0
        %v5236 = vadd.f32 %v5133, %v5235
        %v5237 = vpop.f32.mrb[0].mxu0
        %5238 = vmatprep.mubr.f32.mxu0 0.0
        %5239 = vmatmul.mubr.f32.gmra.mrb[0].mxu0 %v5145
        %v5240 = vpop.f32.mrb[0].mxu0
        %v5241 = vadd.f32 %v5133, %v5240
        %v5242 = vpop.f32.mrb[0].mxu0
        %5243 = vmatprep.mubr.f32.mxu0 0.0
        %5244 = vmatmul.mubr.f32.gmra.mrb[0].mxu0 %v5148
        %v5245 = vpop.f32.mrb[0].mxu0
        %v5246 = vadd.f32 %v5133, %v5245
        %v5247 = vpop.f32.mrb[0].mxu0
        %5248 = vmatprep.mubr.f32.mxu0 0.0
        %5249 = vmatmul.mubr.f32.gmra.mrb[0].mxu0 %v5151
        %v5250 = vpop.f32.mrb[0].mxu0
        %v5251 = vadd.f32 %v5133, %v5250
        %v5252 = vpop.f32.mrb[0].mxu0
        %5253 = vmatprep.mubr.f32.mxu0 0.0
        %5254 = vmatmul.mubr.f32.gmra.mrb[0].mxu0 %v5154
        %v5255 = vpop.f32.mrb[0].mxu0
        %v5256 = vadd.f32 %v5133, %v5255
        %v5257 = vpop.f32.mrb[0].mxu0
        %5258 = vmatprep.mubr.f32.mxu0 0.0
        %5259 = vmatmul.mubr.f32.gmra.mrb[0].mxu0 %v5157
        %v5260 = vpop.f32.mrb[0].mxu0
        %v5261 = vadd.f32 %v5133, %v5260
        %v5262 = vpop.f32.mrb[0].mxu0
        %5263 = vdwg.mxu0
        %v5264 = vadd.f32 %v5226, %v3056
        %v5265 = vadd.f32 %v5231, %v3061
        %v5266 = vadd.f32 %v5236, %v3066
        %v5267 = vadd.f32 %v5241, %v3071
        %v5268 = vadd.f32 %v5246, %v3076
        %v5269 = vadd.f32 %v5251, %v3081
        %v5270 = vadd.f32 %v5256, %v3086
        %v5271 = vadd.f32 %v5261, %v3091
        %v5272 = vld [vmem:[%s49] sm:$0xff]
        %v5273 = vld [vmem:[%s49 + $0x8] sm:$0xff]
        %v5274 = vld [vmem:[%s49 + $0x10] sm:$0xff]
        %v5275 = vld [vmem:[%s49 + $0x18] sm:$0xff]
        %v5276 = vld [vmem:[%s49 + $0x20] sm:$0xff]
        %v5277 = vld [vmem:[%s49 + $0x28] sm:$0xff]
        %v5278 = vld [vmem:[%s49 + $0x30] sm:$0xff]
        %v5279 = vld [vmem:[%s49 + $0x38] sm:$0xff]
        %s5280 = scalar_lea.vmem %s49, 64
        %v5281 = vld [vmem:[%s5280] sm:$0xff]
        %v5282 = vld [vmem:[%s5280 + $0x8] sm:$0xff]
        %v5283 = vld [vmem:[%s5280 + $0x10] sm:$0xff]
        %v5284 = vld [vmem:[%s5280 + $0x18] sm:$0xff]
        %v5285 = vld [vmem:[%s5280 + $0x20] sm:$0xff]
        %v5286 = vld [vmem:[%s5280 + $0x28] sm:$0xff]
        %v5287 = vld [vmem:[%s5280 + $0x30] sm:$0xff]
        %v5288 = vld [vmem:[%s5280 + $0x38] sm:$0xff]
        %v5289 = vsel %vm1140, %v5264, 0.0
        %v5290 = vsel %vm1140, %v5265, 0.0
        %v5291 = vadd.f32 %v5289, %v5290
        %v5292 = vsel %vm1140, %v5266, 0.0
        %v5293 = vadd.f32 %v5291, %v5292
        %v5294 = vsel %vm1140, %v5267, 0.0
        %v5295 = vadd.f32 %v5293, %v5294
        %v5296 = vsel %vm1140, %v5268, 0.0
        %v5297 = vadd.f32 %v5295, %v5296
        %v5298 = vsel %vm1140, %v5269, 0.0
        %v5299 = vadd.f32 %v5297, %v5298
        %v5300 = vsel %vm1140, %v5270, 0.0
        %v5301 = vadd.f32 %v5299, %v5300
        %v5302 = vsel %vm1140, %v5271, 0.0
        %v5303 = vadd.f32 %v5301, %v5302
        %5304 = vadd.xlane.f32.xlu0 %v5303
        %v5305 = vpop.xlane.xlu0 %5304
        %v5306 = vrot.slane %v5305, 4
        %v5307 = vadd.f32 %v5305, %v5306
        %v5308 = vrot.slane %v5307, 2
        %v5309 = vadd.f32 %v5307, %v5308
        %v5310 = vrot.slane %v5309, 1
        %v5311 = vadd.f32 %v5309, %v5310
        %s5312 = vtos %v5311
        %v5313 = vmul.f32 %v5264, %v5264
        %v5314 = vmul.f32 %v5265, %v5265
        %v5315 = vmul.f32 %v5266, %v5266
        %v5316 = vmul.f32 %v5267, %v5267
        %v5317 = vmul.f32 %v5268, %v5268
        %v5318 = vmul.f32 %v5269, %v5269
        %v5319 = vmul.f32 %v5270, %v5270
        %v5320 = vmul.f32 %v5271, %v5271
        %v5321 = vsel %vm1140, %v5313, 0.0
        %v5322 = vsel %vm1140, %v5314, 0.0
        %v5323 = vadd.f32 %v5321, %v5322
        %v5324 = vsel %vm1140, %v5315, 0.0
        %v5325 = vadd.f32 %v5323, %v5324
        %v5326 = vsel %vm1140, %v5316, 0.0
        %v5327 = vadd.f32 %v5325, %v5326
        %v5328 = vsel %vm1140, %v5317, 0.0
        %v5329 = vadd.f32 %v5327, %v5328
        %v5330 = vsel %vm1140, %v5318, 0.0
        %v5331 = vadd.f32 %v5329, %v5330
        %v5332 = vsel %vm1140, %v5319, 0.0
        %v5333 = vadd.f32 %v5331, %v5332
        %v5334 = vsel %vm1140, %v5320, 0.0
        %v5335 = vadd.f32 %v5333, %v5334
        %5336 = vadd.xlane.f32.xlu0 %v5335
        %v5337 = vpop.xlane.xlu0 %5336
        %v5338 = vrot.slane %v5337, 4
        %v5339 = vadd.f32 %v5337, %v5338
        %v5340 = vrot.slane %v5339, 2
        %v5341 = vadd.f32 %v5339, %v5340
        %v5342 = vrot.slane %v5341, 1
        %v5343 = vadd.f32 %v5341, %v5342
        %s5344 = vtos %v5343
        %v5345 = vrcp.pop 1024.0
        %s5346 = vtos %v5345
        %s5347 = smul.f32 %s5312, %s5346
        %v5348 = vrcp.pop 1024.0
        %s5349 = vtos %v5348
        %s5350 = smul.f32 %s5344, %s5349
        %s5351 = smul.f32 %s5347, %s5347
        %s5352 = ssub.f32 %s5350, %s5351
        %v5353 = vstv %s5347
        %v5354 = vsub.f32 %v5264, %v5353
        %v5355 = vsub.f32 %v5265, %v5353
        %v5356 = vsub.f32 %v5266, %v5353
        %v5357 = vsub.f32 %v5267, %v5353
        %v5358 = vsub.f32 %v5268, %v5353
        %v5359 = vsub.f32 %v5269, %v5353
        %v5360 = vsub.f32 %v5270, %v5353
        %v5361 = vsub.f32 %v5271, %v5353
        %s5362 = sadd.f32 %s5352, 1e-05
        %v5363 = vstv %s5362
        %v5364 = vrsqrt.pop %v5363
        %s5365 = vtos %v5364
        %v5366 = vstv %s5365
        %v5367 = vmul.f32 %v5354, %v5366
        %v5368 = vmul.f32 %v5355, %v5366
        %v5369 = vmul.f32 %v5356, %v5366
        %v5370 = vmul.f32 %v5357, %v5366
        %v5371 = vmul.f32 %v5358, %v5366
        %v5372 = vmul.f32 %v5359, %v5366
        %v5373 = vmul.f32 %v5360, %v5366
        %v5374 = vmul.f32 %v5361, %v5366
        %v5375 = vmul.f32 %v5367, %v5272
        %v5376 = vmul.f32 %v5368, %v5273
        %v5377 = vmul.f32 %v5369, %v5274
        %v5378 = vmul.f32 %v5370, %v5275
        %v5379 = vmul.f32 %v5371, %v5276
        %v5380 = vmul.f32 %v5372, %v5277
        %v5381 = vmul.f32 %v5373, %v5278
        %v5382 = vmul.f32 %v5374, %v5279
        %v5383 = vadd.f32 %v5375, %v5281
        %v5384 = vadd.f32 %v5376, %v5282
        %v5385 = vadd.f32 %v5377, %v5283
        %v5386 = vadd.f32 %v5378, %v5284
        %v5387 = vadd.f32 %v5379, %v5285
        %v5388 = vadd.f32 %v5380, %v5286
        %v5389 = vadd.f32 %v5381, %v5287
        %v5390 = vadd.f32 %v5382, %v5288
        %v5391 = vld [vmem:[%s51] sm:$0xff]
        %v5392 = vld [vmem:[%s51 + $0x8] sm:$0xff]
        %v5393 = vld [vmem:[%s53] sm:$0x1]
        %v5395 = vlaneseq
        %v5396 = vshrl.u32 %v5395, 7
        %v5397 = vsub.s32 0, %v5396
        %v5398 = vrot.slane %v5393, %v5397
        %v5401 = vsel %vm1140, %v5383, 0
        %v5404 = vsel %vm1140, %v5384, 0
        %v5407 = vsel %vm1140, %v5385, 0
        %v5410 = vsel %vm1140, %v5386, 0
        %v5413 = vsel %vm1140, %v5387, 0
        %v5416 = vsel %vm1140, %v5388, 0
        %v5419 = vsel %vm1140, %v5389, 0
        %v5422 = vsel %vm1140, %v5390, 0
        %5424 = vmatprep.subr.mxu0 0.0
        %5425 = vmatpush1.msra.mxu0 %v5391
        %5426 = vmatprep.subr.mxu0 0.0
        %5427 = vmatpush1.msra.mxu0 %v5392
        %5428 = vmatprep.subr.mxu0 0.0
        %5429 = vmatpush1.msra.mxu0 0.0
        %5430 = vmatprep.subr.mxu0 0.0
        %5431 = vmatpush1.msra.mxu0 0.0
        %5432 = vmatprep.subr.mxu0 0.0
        %5433 = vmatpush1.msra.mxu0 0.0
        %5434 = vmatprep.subr.mxu0 0.0
        %5435 = vmatpush1.msra.mxu0 0.0
        %5436 = vmatprep.subr.mxu0 0.0
        %5437 = vmatpush1.msra.mxu0 0.0
        %5438 = vmatprep.subr.mxu0 0.0
        %5439 = vmatpush1.msra.mxu0 0.0
        %5440 = vmatprep.subr.mxu0 0.0
        %5441 = vmatpush1.msra.mxu0 0.0
        %5442 = vmatprep.subr.mxu0 0.0
        %5443 = vmatpush1.msra.mxu0 0.0
        %5444 = vmatprep.subr.mxu0 0.0
        %5445 = vmatpush1.msra.mxu0 0.0
        %5446 = vmatprep.subr.mxu0 0.0
        %5447 = vmatpush1.msra.mxu0 0.0
        %5448 = vmatprep.subr.mxu0 0.0
        %5449 = vmatpush1.msra.mxu0 0.0
        %5450 = vmatprep.subr.mxu0 0.0
        %5451 = vmatpush1.msra.mxu0 0.0
        %5452 = vmatprep.subr.mxu0 0.0
        %5453 = vmatpush1.msra.mxu0 0.0
        %5454 = vmatprep.subr.mxu0 0.0
        %5455 = vmatpush1.msra.mxu0 0.0
        %5456 = vmatprep.subr.mxu0 0.0
        %5457 = vmatpush1.msra.mxu0 0.0
        %5458 = vmatprep.subr.mxu0 0.0
        %5459 = vmatpush1.msra.mxu0 0.0
        %5460 = vmatprep.subr.mxu0 0.0
        %5461 = vmatpush1.msra.mxu0 0.0
        %5462 = vmatprep.subr.mxu0 0.0
        %5463 = vmatpush1.msra.mxu0 0.0
        %5464 = vmatprep.subr.mxu0 0.0
        %5465 = vmatpush1.msra.mxu0 0.0
        %5466 = vmatprep.subr.mxu0 0.0
        %5467 = vmatpush1.msra.mxu0 0.0
        %5468 = vmatprep.subr.mxu0 0.0
        %5469 = vmatpush1.msra.mxu0 0.0
        %5470 = vmatprep.subr.mxu0 0.0
        %5471 = vmatpush1.msra.mxu0 0.0
        %5472 = vmatprep.subr.mxu0 0.0
        %5473 = vmatpush1.msra.mxu0 0.0
        %5474 = vmatprep.subr.mxu0 0.0
        %5475 = vmatpush1.msra.mxu0 0.0
        %5476 = vmatprep.subr.mxu0 0.0
        %5477 = vmatpush1.msra.mxu0 0.0
        %5478 = vmatprep.subr.mxu0 0.0
        %5479 = vmatpush1.msra.mxu0 0.0
        %5480 = vmatprep.subr.mxu0 0.0
        %5481 = vmatpush1.msra.mxu0 0.0
        %5482 = vmatprep.subr.mxu0 0.0
        %5483 = vmatpush1.msra.mxu0 0.0
        %5484 = vmatprep.subr.mxu0 0.0
        %5485 = vmatpush1.msra.mxu0 0.0
        %5486 = vmatprep.subr.mxu0 0.0
        %5487 = vmatpush1.msra.mxu0 0.0
        %5488 = vmatprep.mubr.f32.mxu0 0.0
        %5489 = vmatmul.mubr.f32.gmra.mrb[0].mxu0 %v5401
        %v5490 = vpop.f32.mrb[0].mxu0
        %v5491 = vadd.f32 %v5398, %v5490
        %v5492 = vpop.f32.mrb[0].mxu0
        %5493 = vmatprep.mubr.f32.mxu0 0.0
        %5494 = vmatmul.mubr.f32.gmra.mrb[0].mxu0 %v5404
        %v5495 = vpop.f32.mrb[0].mxu0
        %v5496 = vadd.f32 %v5398, %v5495
        %v5497 = vpop.f32.mrb[0].mxu0
        %5498 = vmatprep.mubr.f32.mxu0 0.0
        %5499 = vmatmul.mubr.f32.gmra.mrb[0].mxu0 %v5407
        %v5500 = vpop.f32.mrb[0].mxu0
        %v5501 = vadd.f32 %v5398, %v5500
        %v5502 = vpop.f32.mrb[0].mxu0
        %5503 = vmatprep.mubr.f32.mxu0 0.0
        %5504 = vmatmul.mubr.f32.gmra.mrb[0].mxu0 %v5410
        %v5505 = vpop.f32.mrb[0].mxu0
        %v5506 = vadd.f32 %v5398, %v5505
        %v5507 = vpop.f32.mrb[0].mxu0
        %5508 = vmatprep.mubr.f32.mxu0 0.0
        %5509 = vmatmul.mubr.f32.gmra.mrb[0].mxu0 %v5413
        %v5510 = vpop.f32.mrb[0].mxu0
        %v5511 = vadd.f32 %v5398, %v5510
        %v5512 = vpop.f32.mrb[0].mxu0
        %5513 = vmatprep.mubr.f32.mxu0 0.0
        %5514 = vmatmul.mubr.f32.gmra.mrb[0].mxu0 %v5416
        %v5515 = vpop.f32.mrb[0].mxu0
        %v5516 = vadd.f32 %v5398, %v5515
        %v5517 = vpop.f32.mrb[0].mxu0
        %5518 = vmatprep.mubr.f32.mxu0 0.0
        %5519 = vmatmul.mubr.f32.gmra.mrb[0].mxu0 %v5419
        %v5520 = vpop.f32.mrb[0].mxu0
        %v5521 = vadd.f32 %v5398, %v5520
        %v5522 = vpop.f32.mrb[0].mxu0
        %5523 = vmatprep.mubr.f32.mxu0 0.0
        %5524 = vmatmul.mubr.f32.gmra.mrb[0].mxu0 %v5422
        %v5525 = vpop.f32.mrb[0].mxu0
        %v5526 = vadd.f32 %v5398, %v5525
        %v5527 = vpop.f32.mrb[0].mxu0
        %5528 = vdwg.mxu0
        %v5529 = vmax.f32 %v5491, 0.0
        %v5530 = vmax.f32 %v5496, 0.0
        %v5531 = vmax.f32 %v5501, 0.0
        %v5532 = vmax.f32 %v5506, 0.0
        %v5533 = vmax.f32 %v5511, 0.0
        %v5534 = vmax.f32 %v5516, 0.0
        %v5535 = vmax.f32 %v5521, 0.0
        %v5536 = vmax.f32 %v5526, 0.0
        %v5537 = vld [vmem:[%s55] sm:$0xff]
        %v5538 = vld [vmem:[%s55 + $0x8] sm:$0xff]
        %v5539 = vld [vmem:[%s55 + $0x10] sm:$0xff]
        %v5540 = vld [vmem:[%s55 + $0x18] sm:$0xff]
        %v5541 = vld [vmem:[%s57] sm:$0x1]
        %v5543 = vlaneseq
        %v5544 = vshrl.u32 %v5543, 7
        %v5545 = vsub.s32 0, %v5544
        %v5546 = vrot.slane %v5541, %v5545
        %v5549 = vsel %vm1883, %v5529, 0
        %v5552 = vsel %vm1883, %v5530, 0
        %v5555 = vsel %vm1883, %v5531, 0
        %v5558 = vsel %vm1883, %v5532, 0
        %v5561 = vsel %vm1883, %v5533, 0
        %v5564 = vsel %vm1883, %v5534, 0
        %v5567 = vsel %vm1883, %v5535, 0
        %v5570 = vsel %vm1883, %v5536, 0
        %5572 = vmatprep.subr.mxu0 0.0
        %5573 = vmatpush1.msra.mxu0 %v5537
        %5574 = vmatprep.subr.mxu0 0.0
        %5575 = vmatpush1.msra.mxu0 %v5538
        %5576 = vmatprep.subr.mxu0 0.0
        %5577 = vmatpush1.msra.mxu0 %v5539
        %5578 = vmatprep.subr.mxu0 0.0
        %5579 = vmatpush1.msra.mxu0 %v5540
        %5580 = vmatprep.subr.mxu0 0.0
        %5581 = vmatpush1.msra.mxu0 0.0
        %5582 = vmatprep.subr.mxu0 0.0
        %5583 = vmatpush1.msra.mxu0 0.0
        %5584 = vmatprep.subr.mxu0 0.0
        %5585 = vmatpush1.msra.mxu0 0.0
        %5586 = vmatprep.subr.mxu0 0.0
        %5587 = vmatpush1.msra.mxu0 0.0
        %5588 = vmatprep.subr.mxu0 0.0
        %5589 = vmatpush1.msra.mxu0 0.0
        %5590 = vmatprep.subr.mxu0 0.0
        %5591 = vmatpush1.msra.mxu0 0.0
        %5592 = vmatprep.subr.mxu0 0.0
        %5593 = vmatpush1.msra.mxu0 0.0
        %5594 = vmatprep.subr.mxu0 0.0
        %5595 = vmatpush1.msra.mxu0 0.0
        %5596 = vmatprep.subr.mxu0 0.0
        %5597 = vmatpush1.msra.mxu0 0.0
        %5598 = vmatprep.subr.mxu0 0.0
        %5599 = vmatpush1.msra.mxu0 0.0
        %5600 = vmatprep.subr.mxu0 0.0
        %5601 = vmatpush1.msra.mxu0 0.0
        %5602 = vmatprep.subr.mxu0 0.0
        %5603 = vmatpush1.msra.mxu0 0.0
        %5604 = vmatprep.subr.mxu0 0.0
        %5605 = vmatpush1.msra.mxu0 0.0
        %5606 = vmatprep.subr.mxu0 0.0
        %5607 = vmatpush1.msra.mxu0 0.0
        %5608 = vmatprep.subr.mxu0 0.0
        %5609 = vmatpush1.msra.mxu0 0.0
        %5610 = vmatprep.subr.mxu0 0.0
        %5611 = vmatpush1.msra.mxu0 0.0
        %5612 = vmatprep.subr.mxu0 0.0
        %5613 = vmatpush1.msra.mxu0 0.0
        %5614 = vmatprep.subr.mxu0 0.0
        %5615 = vmatpush1.msra.mxu0 0.0
        %5616 = vmatprep.subr.mxu0 0.0
        %5617 = vmatpush1.msra.mxu0 0.0
        %5618 = vmatprep.subr.mxu0 0.0
        %5619 = vmatpush1.msra.mxu0 0.0
        %5620 = vmatprep.subr.mxu0 0.0
        %5621 = vmatpush1.msra.mxu0 0.0
        %5622 = vmatprep.subr.mxu0 0.0
        %5623 = vmatpush1.msra.mxu0 0.0
        %5624 = vmatprep.subr.mxu0 0.0
        %5625 = vmatpush1.msra.mxu0 0.0
        %5626 = vmatprep.subr.mxu0 0.0
        %5627 = vmatpush1.msra.mxu0 0.0
        %5628 = vmatprep.subr.mxu0 0.0
        %5629 = vmatpush1.msra.mxu0 0.0
        %5630 = vmatprep.subr.mxu0 0.0
        %5631 = vmatpush1.msra.mxu0 0.0
        %5632 = vmatprep.subr.mxu0 0.0
        %5633 = vmatpush1.msra.mxu0 0.0
        %5634 = vmatprep.subr.mxu0 0.0
        %5635 = vmatpush1.msra.mxu0 0.0
        %5636 = vmatprep.mubr.f32.mxu0 0.0
        %5637 = vmatmul.mubr.f32.gmra.mrb[0].mxu0 %v5549
        %v5638 = vpop.f32.mrb[0].mxu0
        %v5639 = vadd.f32 %v5546, %v5638
        %v5640 = vpop.f32.mrb[0].mxu0
        %5641 = vmatprep.mubr.f32.mxu0 0.0
        %5642 = vmatmul.mubr.f32.gmra.mrb[0].mxu0 %v5552
        %v5643 = vpop.f32.mrb[0].mxu0
        %v5644 = vadd.f32 %v5546, %v5643
        %v5645 = vpop.f32.mrb[0].mxu0
        %5646 = vmatprep.mubr.f32.mxu0 0.0
        %5647 = vmatmul.mubr.f32.gmra.mrb[0].mxu0 %v5555
        %v5648 = vpop.f32.mrb[0].mxu0
        %v5649 = vadd.f32 %v5546, %v5648
        %v5650 = vpop.f32.mrb[0].mxu0
        %5651 = vmatprep.mubr.f32.mxu0 0.0
        %5652 = vmatmul.mubr.f32.gmra.mrb[0].mxu0 %v5558
        %v5653 = vpop.f32.mrb[0].mxu0
        %v5654 = vadd.f32 %v5546, %v5653
        %v5655 = vpop.f32.mrb[0].mxu0
        %5656 = vmatprep.mubr.f32.mxu0 0.0
        %5657 = vmatmul.mubr.f32.gmra.mrb[0].mxu0 %v5561
        %v5658 = vpop.f32.mrb[0].mxu0
        %v5659 = vadd.f32 %v5546, %v5658
        %v5660 = vpop.f32.mrb[0].mxu0
        %5661 = vmatprep.mubr.f32.mxu0 0.0
        %5662 = vmatmul.mubr.f32.gmra.mrb[0].mxu0 %v5564
        %v5663 = vpop.f32.mrb[0].mxu0
        %v5664 = vadd.f32 %v5546, %v5663
        %v5665 = vpop.f32.mrb[0].mxu0
        %5666 = vmatprep.mubr.f32.mxu0 0.0
        %5667 = vmatmul.mubr.f32.gmra.mrb[0].mxu0 %v5567
        %v5668 = vpop.f32.mrb[0].mxu0
        %v5669 = vadd.f32 %v5546, %v5668
        %v5670 = vpop.f32.mrb[0].mxu0
        %5671 = vmatprep.mubr.f32.mxu0 0.0
        %5672 = vmatmul.mubr.f32.gmra.mrb[0].mxu0 %v5570
        %v5673 = vpop.f32.mrb[0].mxu0
        %v5674 = vadd.f32 %v5546, %v5673
        %v5675 = vpop.f32.mrb[0].mxu0
        %5676 = vdwg.mxu0
        %v5677 = vadd.f32 %v5639, %v5383
        %v5678 = vadd.f32 %v5644, %v5384
        %v5679 = vadd.f32 %v5649, %v5385
        %v5680 = vadd.f32 %v5654, %v5386
        %v5681 = vadd.f32 %v5659, %v5387
        %v5682 = vadd.f32 %v5664, %v5388
        %v5683 = vadd.f32 %v5669, %v5389
        %v5684 = vadd.f32 %v5674, %v5390
        %v5685 = vld [vmem:[%s59] sm:$0xff]
        %v5686 = vld [vmem:[%s59 + $0x8] sm:$0xff]
        %v5687 = vld [vmem:[%s59 + $0x10] sm:$0xff]
        %v5688 = vld [vmem:[%s59 + $0x18] sm:$0xff]
        %v5689 = vld [vmem:[%s59 + $0x20] sm:$0xff]
        %v5690 = vld [vmem:[%s59 + $0x28] sm:$0xff]
        %v5691 = vld [vmem:[%s59 + $0x30] sm:$0xff]
        %v5692 = vld [vmem:[%s59 + $0x38] sm:$0xff]
        %s5693 = scalar_lea.vmem %s59, 64
        %v5694 = vld [vmem:[%s5693] sm:$0xff]
        %v5695 = vld [vmem:[%s5693 + $0x8] sm:$0xff]
        %v5696 = vld [vmem:[%s5693 + $0x10] sm:$0xff]
        %v5697 = vld [vmem:[%s5693 + $0x18] sm:$0xff]
        %v5698 = vld [vmem:[%s5693 + $0x20] sm:$0xff]
        %v5699 = vld [vmem:[%s5693 + $0x28] sm:$0xff]
        %v5700 = vld [vmem:[%s5693 + $0x30] sm:$0xff]
        %v5701 = vld [vmem:[%s5693 + $0x38] sm:$0xff]
        %v5702 = vsel %vm1140, %v5677, 0.0
        %v5703 = vsel %vm1140, %v5678, 0.0
        %v5704 = vadd.f32 %v5702, %v5703
        %v5705 = vsel %vm1140, %v5679, 0.0
        %v5706 = vadd.f32 %v5704, %v5705
        %v5707 = vsel %vm1140, %v5680, 0.0
        %v5708 = vadd.f32 %v5706, %v5707
        %v5709 = vsel %vm1140, %v5681, 0.0
        %v5710 = vadd.f32 %v5708, %v5709
        %v5711 = vsel %vm1140, %v5682, 0.0
        %v5712 = vadd.f32 %v5710, %v5711
        %v5713 = vsel %vm1140, %v5683, 0.0
        %v5714 = vadd.f32 %v5712, %v5713
        %v5715 = vsel %vm1140, %v5684, 0.0
        %v5716 = vadd.f32 %v5714, %v5715
        %5717 = vadd.xlane.f32.xlu0 %v5716
        %v5718 = vpop.xlane.xlu0 %5717
        %v5719 = vrot.slane %v5718, 4
        %v5720 = vadd.f32 %v5718, %v5719
        %v5721 = vrot.slane %v5720, 2
        %v5722 = vadd.f32 %v5720, %v5721
        %v5723 = vrot.slane %v5722, 1
        %v5724 = vadd.f32 %v5722, %v5723
        %s5725 = vtos %v5724
        %v5726 = vmul.f32 %v5677, %v5677
        %v5727 = vmul.f32 %v5678, %v5678
        %v5728 = vmul.f32 %v5679, %v5679
        %v5729 = vmul.f32 %v5680, %v5680
        %v5730 = vmul.f32 %v5681, %v5681
        %v5731 = vmul.f32 %v5682, %v5682
        %v5732 = vmul.f32 %v5683, %v5683
        %v5733 = vmul.f32 %v5684, %v5684
        %v5734 = vsel %vm1140, %v5726, 0.0
        %v5735 = vsel %vm1140, %v5727, 0.0
        %v5736 = vadd.f32 %v5734, %v5735
        %v5737 = vsel %vm1140, %v5728, 0.0
        %v5738 = vadd.f32 %v5736, %v5737
        %v5739 = vsel %vm1140, %v5729, 0.0
        %v5740 = vadd.f32 %v5738, %v5739
        %v5741 = vsel %vm1140, %v5730, 0.0
        %v5742 = vadd.f32 %v5740, %v5741
        %v5743 = vsel %vm1140, %v5731, 0.0
        %v5744 = vadd.f32 %v5742, %v5743
        %v5745 = vsel %vm1140, %v5732, 0.0
        %v5746 = vadd.f32 %v5744, %v5745
        %v5747 = vsel %vm1140, %v5733, 0.0
        %v5748 = vadd.f32 %v5746, %v5747
        %5749 = vadd.xlane.f32.xlu0 %v5748
        %v5750 = vpop.xlane.xlu0 %5749
        %v5751 = vrot.slane %v5750, 4
        %v5752 = vadd.f32 %v5750, %v5751
        %v5753 = vrot.slane %v5752, 2
        %v5754 = vadd.f32 %v5752, %v5753
        %v5755 = vrot.slane %v5754, 1
        %v5756 = vadd.f32 %v5754, %v5755
        %s5757 = vtos %v5756
        %v5758 = vrcp.pop 1024.0
        %s5759 = vtos %v5758
        %s5760 = smul.f32 %s5725, %s5759
        %v5761 = vrcp.pop 1024.0
        %s5762 = vtos %v5761
        %s5763 = smul.f32 %s5757, %s5762
        %s5764 = smul.f32 %s5760, %s5760
        %s5765 = ssub.f32 %s5763, %s5764
        %v5766 = vstv %s5760
        %v5767 = vsub.f32 %v5677, %v5766
        %v5768 = vsub.f32 %v5678, %v5766
        %v5769 = vsub.f32 %v5679, %v5766
        %v5770 = vsub.f32 %v5680, %v5766
        %v5771 = vsub.f32 %v5681, %v5766
        %v5772 = vsub.f32 %v5682, %v5766
        %v5773 = vsub.f32 %v5683, %v5766
        %v5774 = vsub.f32 %v5684, %v5766
        %s5775 = sadd.f32 %s5765, 1e-05
        %v5776 = vstv %s5775
        %v5777 = vrsqrt.pop %v5776
        %s5778 = vtos %v5777
        %v5779 = vstv %s5778
        %v5780 = vmul.f32 %v5767, %v5779
        %v5781 = vmul.f32 %v5768, %v5779
        %v5782 = vmul.f32 %v5769, %v5779
        %v5783 = vmul.f32 %v5770, %v5779
        %v5784 = vmul.f32 %v5771, %v5779
        %v5785 = vmul.f32 %v5772, %v5779
        %v5786 = vmul.f32 %v5773, %v5779
        %v5787 = vmul.f32 %v5774, %v5779
        %v5788 = vmul.f32 %v5780, %v5685
        %v5789 = vmul.f32 %v5781, %v5686
        %v5790 = vmul.f32 %v5782, %v5687
        %v5791 = vmul.f32 %v5783, %v5688
        %v5792 = vmul.f32 %v5784, %v5689
        %v5793 = vmul.f32 %v5785, %v5690
        %v5794 = vmul.f32 %v5786, %v5691
        %v5795 = vmul.f32 %v5787, %v5692
        %v5796 = vadd.f32 %v5788, %v5694
        %v5797 = vadd.f32 %v5789, %v5695
        %v5798 = vadd.f32 %v5790, %v5696
        %v5799 = vadd.f32 %v5791, %v5697
        %v5800 = vadd.f32 %v5792, %v5698
        %v5801 = vadd.f32 %v5793, %v5699
        %v5802 = vadd.f32 %v5794, %v5700
        %v5803 = vadd.f32 %v5795, %v5701
        %5804 = vst.msk [vmem:[%s1117] sm:$0xff] %vm1140, %v5796
        %5805 = vst.msk [vmem:[%s1117 + $0x8] sm:$0xff] %vm1140, %v5797
        %5806 = vst.msk [vmem:[%s1117 + $0x10] sm:$0xff] %vm1140, %v5798
        %5807 = vst.msk [vmem:[%s1117 + $0x18] sm:$0xff] %vm1140, %v5799
        %5808 = vst.msk [vmem:[%s1117 + $0x20] sm:$0xff] %vm1140, %v5800
        %5809 = vst.msk [vmem:[%s1117 + $0x28] sm:$0xff] %vm1140, %v5801
        %5810 = vst.msk [vmem:[%s1117 + $0x30] sm:$0xff] %vm1140, %v5802
        %5811 = vst.msk [vmem:[%s1117 + $0x38] sm:$0xff] %vm1140, %v5803
        %s5812 = sand.u32 %s726, 1
        %s5813 = scalar_lea.sflag [#allocation4], %s5812
        %s5814 = sand.u32 %s726, 1
        %s5815 = smul.addr %s5814, 64
        %s5816 = scalar_lea.vmem [#allocation25], %s5815
        // Predicated region
        $region197: #{forward.1} parent=139 // pred_check
          %p5817 = pneg %p736
        $region198: #{forward.1} parent=139 // pred_check_branch
          %5819 = sbr.rel (%p5817) target = $region200
        $region199: #{forward.1} parent=139 // pred_region
          %s5821 = ssub.s32 1024, 1024
          %5822 = vsyncadd %s5813, %s5821
          %s5823 = smul.addr %s83, 8
          %s5824 = smul.addr %s5823, 128
          %s5825 = scalar_lea.hbm %s61, %s5824
          %s5826 = sshll.u32 %s5816, 4
          %s5827 = int_to_ptr.vmem [resolvable:$true] %s5826
          %5832 = dma.vmem_to_hbm [thread:$0]  %s5827, 1024, %s5825, %s5813, 128, 128, 8
        $region200: #{forward.1} parent=139 // pred_fallthru
          _
      $region140: #{forward.1} parent=5 // pred_fallthru
        _
      %p5833 = scmp.le.s32.totalorder 2, %s78
      // Predicated region
      $region201: #{forward.1} parent=5 // pred_check
        %p5834 = pneg %p5833
      $region202: #{forward.1} parent=5 // pred_check_branch
        %5836 = sbr.rel (%p5834) target = $region204
      $region203: #{forward.1} parent=5 // pred_region
        %s5837 = ssub.s32 %s78, 2
        // Predicated region
        $region205: #{forward.1} parent=203 // pred_check
          %p5838 = pneg %p742
        $region206: #{forward.1} parent=203 // pred_check_branch
          %5840 = sbr.rel (%p5838) target = $region208
        $region207: #{forward.1} parent=203 // pred_region
          %s5841 = sand.u32 %s727, 1
          %s5842 = scalar_lea.sflag [#allocation4], %s5841
          %s5843 = sand.u32 %s727, 1
          %s5844 = smul.addr %s5843, 64
          %s5845 = scalar_lea.vmem [#allocation25], %s5844
          %5846 = dma.done %s5842, 1024
        $region208: #{forward.1} parent=203 // pred_fallthru
          _
      $region204: #{forward.1} parent=5 // pred_fallthru
        _
    $region6: #{forward.1} parent=1 // loop_footer
      %s82 = sadd.s32 1, %s78
    $region7: #{forward.1} parent=1 // loop_footer_branch
      %77 = sbr.rel target = $region3
    $region8: #{forward.1} parent=1 // loop_exit
      _
    %5847 = vsyncpa [#allocation3], 1
    %s5848 = scalar_lea.sflag [#allocation3], 1
    %5849 = vsyncpa %s5848, 1
    %5850 = vsyncpa [#allocation6], 1
    %5851 = vsyncpa [#allocation9], 1
    %5852 = vsyncpa [#allocation12], 1
    %5853 = vsyncpa [#allocation15], 1
    %5854 = vsyncpa [#allocation18], 1
    %5855 = vsyncpa [#allocation21], 1
    %5856 = vsyncpa [#allocation24], 1
    %5857 = vsyncpa [#allocation4], 1
    %s5858 = scalar_lea.sflag [#allocation4], 1
    %5859 = vsyncpa %s5858, 1

</llo_original>
